<compile_context>
chip_gen: v7x
topology: tpu7x:2x2x1
jax: 0.10.0
libtpu: 0.0.40
codegen_flags: <defaults>
</compile_context>

<pallas_src>
import functools

import numpy as np
import jax
import jax.numpy as jnp
from jax.experimental import pallas as pl
from jax.experimental.pallas import tpu as pltpu


def gnn_kernel(a_ref, uw_ref, w_ref, v_ref, mask_ref, y_ref, *, G, mm_dtype):
    f32 = jnp.float32

    a = a_ref[...]                                   # (TB, m, m) f32 adjacency tile
    uw = uw_ref[...].astype(mm_dtype)                # (m, h)  precomputed U @ W
    w = w_ref[...].astype(mm_dtype)                  # (h, h)
    v = v_ref[...].astype(mm_dtype)                  # (h, c)
    mask = mask_ref[...]                             # (Gm, Gm) block-diagonal 0/1 (f32)

    TB, m, _ = a.shape
    h = uw.shape[1]
    Gm = G * m
    n_groups = TB // G

    # ---- symmetric normalization (f32) -------------------------------------
    # D[b,i] = sum_j A[b,i,j];  lam = A / (sqrt(D_j) * sqrt(D_i) + 1e-6)
    # Kept as an exact divide: pl.reciprocal(denom, approx=True) would move it
    # to the EUP slot but perturbs numerics beyond the 1e-4 reference check.
    d = jnp.sum(a, axis=2, keepdims=True)            # (TB, m, 1)
    sd = jnp.sqrt(d)
    denom = sd * jnp.swapaxes(sd, 1, 2) + 1e-6       # (TB, m, m)
    lam = a / denom

    # Flattened form: graph b occupies rows [b*m, (b+1)*m).
    lam2 = lam.reshape(TB * m, m)                    # (TB*m, m)

    # ---- layer 1: shared rhs -> one full-tile matmul (no block-diag needed) --
    h1 = jnp.dot(lam2.astype(mm_dtype), uw, preferred_element_type=f32)
    h1 = jnp.maximum(h1, 0.0)                        # (TB*m, h) f32

    # ---- layers 2/3 + readout, per block-diagonal group of G graphs ---------
    ys = []
    for g in range(n_groups):                        # static unroll; n_groups = TB // G is small
        r0 = g * Gm
        lam_flat = lam2[r0:r0 + Gm, :]               # (Gm, m)

        # Replicate lam_flat across the G column blocks, then keep only the
        # block diagonal: lam_bd[i*m+r, i*m+c] = lam[graph i of group, r, c].
        tiled = jnp.concatenate([lam_flat] * G, axis=1)          # (Gm, Gm)
        lam_bd = (tiled * mask).astype(mm_dtype)                 # block-diagonal lam

        h1_g = h1[r0:r0 + Gm, :].astype(mm_dtype)                # (Gm, h)

        # layer 2: H2 = relu((lam @ H1) @ W), K = Gm dense on the MXU
        t2 = jnp.dot(lam_bd, h1_g, preferred_element_type=f32)
        h2 = jnp.maximum(jnp.dot(t2.astype(mm_dtype), w,
                                 preferred_element_type=f32), 0.0)

        # layer 3: H3 = relu((lam @ H2) @ W)
        t3 = jnp.dot(lam_bd, h2.astype(mm_dtype), preferred_element_type=f32)
        h3 = jnp.maximum(jnp.dot(t3.astype(mm_dtype), w,
                                 preferred_element_type=f32), 0.0)

        # readout: (H3 @ V).sum(nodes) == (sum_nodes H3) @ V
        s_g = jnp.sum(h3.reshape(G, m, h), axis=1)               # (G, h)
        ys.append(jnp.dot(s_g.astype(mm_dtype), v,
                          preferred_element_type=f32))           # (G, c)

    # Single (TB, c) store per grid step.
    y_ref[...] = jnp.concatenate(ys, axis=0)


def _mxu_k_depth():
    """Best-effort per-generation MXU contraction depth (128 on <=v5, 256 on v6e/v7x)."""
    try:
        kind = jax.devices()[0].device_kind.lower()
    except Exception:
        return 128
    for old in ("v2", "v3", "v4", "v5"):
        if old in kind:
            return 128
    return 256


def gnn_forward(A, U, W, V, *, tb=64, lane_target=None, mm_dtype=jnp.float32):
    B, m, _ = A.shape
    h = U.shape[1]
    c = V.shape[1]

    # Graphs per block-diagonal group: G*m ~= MXU contraction depth.
    if lane_target is None:
        lane_target = _mxu_k_depth()
    G = max(1, lane_target // m)
    Gm = G * m

    # Pad the batch only up to a multiple of G (<= G-1 zero graphs; zero
    # adjacency -> zero output, sliced off at the end).
    Bp = ((B + G - 1) // G) * G
    # Batch tile: largest multiple of G that is <= tb and divides Bp.
    TB = G
    for cand in range(G, min(tb, Bp) + 1, G):
        if Bp % cand == 0:
            TB = cand
    n_steps = Bp // TB
    if Bp != B:
        A = jnp.pad(A, ((0, Bp - B), (0, 0), (0, 0)))

    # Hoist the batch-independent U @ W product out of the kernel.
    UW = jnp.dot(U, W, preferred_element_type=jnp.float32)       # (m, h)

    # Block-diagonal 0/1 mask for one group (built once on host).
    blk = np.arange(Gm) // m
    MASK = jnp.asarray((blk[:, None] == blk[None, :]).astype(np.float32))

    kern = functools.partial(gnn_kernel, G=G, mm_dtype=mm_dtype)

    flops = Bp * (3 * 2 * m * m * h + 2 * 2 * m * h * h + 2 * h * c)
    bytes_accessed = 4 * (Bp * m * m + m * h + h * h + h * c + Gm * Gm + Bp * c)

    y = pl.pallas_call(
        kern,
        out_shape=jax.ShapeDtypeStruct((Bp, c), jnp.float32),
        grid_spec=pltpu.PrefetchScalarGridSpec(
            num_scalar_prefetch=0,
            grid=(n_steps,),
            in_specs=[
                pl.BlockSpec((TB, m, m), lambda b: (b, 0, 0)),   # A, batch tile
                pl.BlockSpec((m, h), lambda b: (0, 0)),          # U @ W (full)
                pl.BlockSpec((h, h), lambda b: (0, 0)),          # W (full)
                pl.BlockSpec((h, c), lambda b: (0, 0)),          # V (full)
                pl.BlockSpec((Gm, Gm), lambda b: (0, 0)),        # block-diag mask (full)
            ],
            out_specs=pl.BlockSpec((TB, c), lambda b: (b, 0)),   # one slab per step
        ),
        compiler_params=pltpu.CompilerParams(
            dimension_semantics=("parallel",),
            vmem_limit_bytes=32 * 1024 * 1024,
        ),
        cost_estimate=pl.CostEstimate(
            flops=flops, transcendentals=Bp * m, bytes_accessed=bytes_accessed),
    )(A, UW, W, V, MASK)
    return y[:B]


def gnn_reference(A, U, W, V):
    # Pure-JAX reference mirroring the PyTorch forward.
    D = A.sum(axis=2)
    lam = A / (D[:, None, :] ** 0.5 * D[:, :, None] ** 0.5 + 1e-6)
    H1 = lam @ U @ W
    H1 = H1 * (H1 > 0)
    H2 = lam @ H1 @ W
    H2 = H2 * (H2 > 0)
    H3 = lam @ H2 @ W
    H3 = H3 * (H3 > 0)
    return (H3 @ V).sum(axis=1)


if __name__ == "__main__":
    B, m, h, c = 2, 16, 32, 8   # batch, nbnodes, nbhid, nbclasses

    key = jax.random.PRNGKey(0)
    k_a, k_u, k_w, k_v = jax.random.split(key, 4)

    # Adjacency-like non-negative input (so degrees are positive).
    A = jnp.abs(jax.random.normal(k_a, (B, m, m), dtype=jnp.float32))

    # Parameters: same shapes / scales as the module's __init__.
    U = (m ** -0.5) * jax.random.normal(k_u, (m, h), dtype=jnp.float32)
    W = (h ** -0.5) * jax.random.normal(k_w, (h, h), dtype=jnp.float32)
    # Module initializes V to zeros (all-zero output); use a small nonzero V
    # so the numerical check is meaningful.
    V = 0.1 * jax.random.normal(k_v, (h, c), dtype=jnp.float32)

    y_ref_val = gnn_reference(A, U, W, V)

    # Default f32 matmul-operand path: tight match to the reference.
    y = gnn_forward(A, U, W, V)
    jax.block_until_ready(y)
    assert y.shape == (B, c)
    assert jnp.allclose(y, y_ref_val, atol=1e-4, rtol=1e-4), (y, y_ref_val)

    # bf16 matmul-operand path (f32 accumulation): MXU-peak option.
    y16 = gnn_forward(A, U, W, V, mm_dtype=jnp.bfloat16)
    jax.block_until_ready(y16)
    assert jnp.allclose(y16, y_ref_val, atol=5e-2, rtol=5e-2), (y16, y_ref_val)

    print("KERNEL_OK")
</pallas_src>

<mosaic_0001>
module attributes {stable_mosaic.version = 11 : i64} {
  func.func @gnn_kernel(%arg0: i32, %arg1: memref<16x16x16xf32, #tpu.memory_space<vmem>>, %arg2: memref<16x32xf32, #tpu.memory_space<vmem>>, %arg3: memref<32x32xf32, #tpu.memory_space<vmem>>, %arg4: memref<32x8xf32, #tpu.memory_space<vmem>>, %arg5: memref<256x256xf32, #tpu.memory_space<vmem>>, %arg6: memref<16x8xf32, #tpu.memory_space<vmem>>) attributes {dimension_semantics = [#tpu.dimension_semantics<parallel>], iteration_bounds = array<i64: 1>, scalar_prefetch = 0 : i64, scratch_operands = 0 : i64, tpu.core_type = #tpu.core_type<tc>, window_params = [{transform_indices = @transform_0, window_bounds = array<i64: 16, 16, 16>}, {pipeline_mode = #tpu.pipeline_mode<synchronous>, transform_indices = @transform_1, window_bounds = array<i64: 16, 32>}, {pipeline_mode = #tpu.pipeline_mode<synchronous>, transform_indices = @transform_2, window_bounds = array<i64: 32, 32>}, {pipeline_mode = #tpu.pipeline_mode<synchronous>, transform_indices = @transform_3, window_bounds = array<i64: 32, 8>}, {pipeline_mode = #tpu.pipeline_mode<synchronous>, transform_indices = @transform_4, window_bounds = array<i64: 256, 256>}, {transform_indices = @transform_5, window_bounds = array<i64: 16, 8>}]} {
    %c0 = arith.constant 0 : index
    %c0_0 = arith.constant 0 : index
    %c0_1 = arith.constant 0 : index
    %0 = vector.load %arg1[%c0, %c0_0, %c0_1] : memref<16x16x16xf32, #tpu.memory_space<vmem>>, vector<16x16x16xf32>
    %c0_2 = arith.constant 0 : index
    %c0_3 = arith.constant 0 : index
    %1 = vector.load %arg2[%c0_2, %c0_3] : memref<16x32xf32, #tpu.memory_space<vmem>>, vector<16x32xf32>
    %c0_4 = arith.constant 0 : index
    %c0_5 = arith.constant 0 : index
    %2 = vector.load %arg3[%c0_4, %c0_5] : memref<32x32xf32, #tpu.memory_space<vmem>>, vector<32x32xf32>
    %c0_6 = arith.constant 0 : index
    %c0_7 = arith.constant 0 : index
    %3 = vector.load %arg4[%c0_6, %c0_7] : memref<32x8xf32, #tpu.memory_space<vmem>>, vector<32x8xf32>
    %c0_8 = arith.constant 0 : index
    %c0_9 = arith.constant 0 : index
    %4 = vector.load %arg5[%c0_8, %c0_9] : memref<256x256xf32, #tpu.memory_space<vmem>>, vector<256x256xf32>
    %cst = arith.constant dense<0.000000e+00> : vector<16x16xf32>
    %5 = vector.multi_reduction <add>, %0, %cst [2] : vector<16x16x16xf32> to vector<16x16xf32>
    %6 = vector.shape_cast %5 : vector<16x16xf32> to vector<16x16x1xf32>
    %7 = math.sqrt %6 : vector<16x16x1xf32>
    %8 = tpu.transpose %7, [0, 2, 1] : vector<16x16x1xf32> -> vector<16x1x16xf32>
    %9 = vector.broadcast %7 : vector<16x16x1xf32> to vector<16x16x16xf32>
    %10 = vector.broadcast %8 : vector<16x1x16xf32> to vector<16x16x16xf32>
    %11 = arith.mulf %9, %10 : vector<16x16x16xf32>
    %cst_10 = arith.constant 9.99999997E-7 : f32
    %12 = vector.broadcast %cst_10 : f32 to vector<16x16x16xf32>
    %13 = arith.addf %11, %12 : vector<16x16x16xf32>
    %14 = arith.divf %0, %13 : vector<16x16x16xf32>
    %15 = vector.shape_cast %14 : vector<16x16x16xf32> to vector<256x16xf32>
    %cst_11 = arith.constant dense<0.000000e+00> : vector<256x32xf32>
    %16 = tpu.matmul %15, %1, %cst_11 {dimension_numbers = #tpu.dot_dimension_numbers<[1], [0], [0], [1], [0, 0, 1, 1], [], []>} : vector<256x16xf32>, vector<16x32xf32>, vector<256x32xf32> -> vector<256x32xf32>
    %cst_12 = arith.constant 0.000000e+00 : f32
    %17 = vector.broadcast %cst_12 : f32 to vector<256x32xf32>
    %18 = arith.maximumf %16, %17 : vector<256x32xf32>
    %19 = tpu.concatenate %15, %15, %15, %15, %15, %15, %15, %15, %15, %15, %15, %15, %15, %15, %15, %15 in 1 : vector<256x16xf32>, vector<256x16xf32>, vector<256x16xf32>, vector<256x16xf32>, vector<256x16xf32>, vector<256x16xf32>, vector<256x16xf32>, vector<256x16xf32>, vector<256x16xf32>, vector<256x16xf32>, vector<256x16xf32>, vector<256x16xf32>, vector<256x16xf32>, vector<256x16xf32>, vector<256x16xf32>, vector<256x16xf32> -> vector<256x256xf32>
    %20 = arith.mulf %19, %4 : vector<256x256xf32>
    %cst_13 = arith.constant dense<0.000000e+00> : vector<256x32xf32>
    %21 = tpu.matmul %20, %18, %cst_13 {dimension_numbers = #tpu.dot_dimension_numbers<[1], [0], [0], [1], [0, 0, 1, 1], [], []>} : vector<256x256xf32>, vector<256x32xf32>, vector<256x32xf32> -> vector<256x32xf32>
    %cst_14 = arith.constant dense<0.000000e+00> : vector<256x32xf32>
    %22 = tpu.matmul %21, %2, %cst_14 {dimension_numbers = #tpu.dot_dimension_numbers<[1], [0], [0], [1], [0, 0, 1, 1], [], []>} : vector<256x32xf32>, vector<32x32xf32>, vector<256x32xf32> -> vector<256x32xf32>
    %cst_15 = arith.constant 0.000000e+00 : f32
    %23 = vector.broadcast %cst_15 : f32 to vector<256x32xf32>
    %24 = arith.maximumf %22, %23 : vector<256x32xf32>
    %cst_16 = arith.constant dense<0.000000e+00> : vector<256x32xf32>
    %25 = tpu.matmul %20, %24, %cst_16 {dimension_numbers = #tpu.dot_dimension_numbers<[1], [0], [0], [1], [0, 0, 1, 1], [], []>} : vector<256x256xf32>, vector<256x32xf32>, vector<256x32xf32> -> vector<256x32xf32>
    %cst_17 = arith.constant dense<0.000000e+00> : vector<256x32xf32>
    %26 = tpu.matmul %25, %2, %cst_17 {dimension_numbers = #tpu.dot_dimension_numbers<[1], [0], [0], [1], [0, 0, 1, 1], [], []>} : vector<256x32xf32>, vector<32x32xf32>, vector<256x32xf32> -> vector<256x32xf32>
    %cst_18 = arith.constant 0.000000e+00 : f32
    %27 = vector.broadcast %cst_18 : f32 to vector<256x32xf32>
    %28 = arith.maximumf %26, %27 : vector<256x32xf32>
    %29 = vector.shape_cast %28 : vector<256x32xf32> to vector<16x16x32xf32>
    %cst_19 = arith.constant dense<0.000000e+00> : vector<16x32xf32>
    %30 = vector.multi_reduction <add>, %29, %cst_19 [1] : vector<16x16x32xf32> to vector<16x32xf32>
    %cst_20 = arith.constant dense<0.000000e+00> : vector<16x8xf32>
    %31 = tpu.matmul %30, %3, %cst_20 {dimension_numbers = #tpu.dot_dimension_numbers<[1], [0], [0], [1], [0, 0, 1, 1], [], []>} : vector<16x32xf32>, vector<32x8xf32>, vector<16x8xf32> -> vector<16x8xf32>
    %c0_21 = arith.constant 0 : index
    %c0_22 = arith.constant 0 : index
    %32 = vector.load %arg6[%c0_21, %c0_22] : memref<16x8xf32, #tpu.memory_space<vmem>>, vector<16x8xf32>
    tpu.vector_store %arg6[%c0_21, %c0_22], %31 {strides = array<i32>} : memref<16x8xf32, #tpu.memory_space<vmem>>, vector<16x8xf32>,
    return
  }
  func.func @transform_0(%arg0: i32) -> (i32, i32, i32) {
    %c0_i32 = arith.constant 0 : i32
    %c0_i32_0 = arith.constant 0 : i32
    %c0_i32_1 = arith.constant 0 : i32
    return %arg0, %c0_i32, %c0_i32_0 : i32, i32, i32
  }
  func.func @transform_1(%arg0: i32) -> (i32, i32) {
    %c0_i32 = arith.constant 0 : i32
    %c0_i32_0 = arith.constant 0 : i32
    %c0_i32_1 = arith.constant 0 : i32
    return %c0_i32, %c0_i32_0 : i32, i32
  }
  func.func @transform_2(%arg0: i32) -> (i32, i32) {
    %c0_i32 = arith.constant 0 : i32
    %c0_i32_0 = arith.constant 0 : i32
    %c0_i32_1 = arith.constant 0 : i32
    return %c0_i32, %c0_i32_0 : i32, i32
  }
  func.func @transform_3(%arg0: i32) -> (i32, i32) {
    %c0_i32 = arith.constant 0 : i32
    %c0_i32_0 = arith.constant 0 : i32
    %c0_i32_1 = arith.constant 0 : i32
    return %c0_i32, %c0_i32_0 : i32, i32
  }
  func.func @transform_4(%arg0: i32) -> (i32, i32) {
    %c0_i32 = arith.constant 0 : i32
    %c0_i32_0 = arith.constant 0 : i32
    %c0_i32_1 = arith.constant 0 : i32
    return %c0_i32, %c0_i32_0 : i32, i32
  }
  func.func @transform_5(%arg0: i32) -> (i32, i32) {
    %c0_i32 = arith.constant 0 : i32
    %c0_i32_0 = arith.constant 0 : i32
    return %arg0, %c0_i32 : i32, i32
  }
}

</mosaic_0001>

<llo_original>
// kernel: tpu_custom_call.1
$region0: #{tpu_custom_call.1}
  #allocation0 [shape = 'u32[]', space=smem, size = 0x4, offset = 0x4, fixed_abs, tag = 'smem constant byte address 0x4 - core index']
  #allocation1 [shape = 'u32[144,128]{1,0:T(1,128)}', space=vmem, size = 0x12000, scoped, tag = 'internal scratch']
  %s0 = inlined_call_operand.hbm [shape: f32[16,16,16], index: 0, kind: input, shape index: {}]
  %s1 = inlined_call_operand.hbm [shape: f32[16,32], index: 1, kind: input, shape index: {}]
  %s2 = inlined_call_operand.vmem [shape: f32[32,32], index: 2, kind: input, shape index: {}]
  %s3 = inlined_call_operand.vmem [shape: f32[32,8], index: 3, kind: input, shape index: {}]
  %s4 = inlined_call_operand.hbm [shape: f32[256,256], index: 4, kind: input, shape index: {}]
  %s5 = inlined_call_operand.vmem [shape: f32[16,8], index: 5, kind: output, shape index: {}]
  %s6 = sld [smem:[#allocation0]]
  $region42: #{tpu_custom_call.1} parent=0
    _
  %s8 = ssub.s32 1, %s6
  %s9 = scalar_select 0, %s8, %s6
  $region1: #{tpu_custom_call.1} parent=0
    #allocation2 [shape = 'u8[131072]{0}', space=vmem, size = 0x20000, scoped, tag = 'input window, operand 0, single buffered']
    #allocation3 [shape = 's32[1]{0}', space=sflag, size = 0x4, scoped, tag = 'scoped memory for tpu_custom_call.1']
    #allocation4 [shape = 'u8[8192]{0}', space=vmem, size = 0x2000, scoped, tag = 'input window, operand 1, single buffered']
    #allocation5 [shape = 's32[1]{0}', space=sflag, size = 0x4, scoped, tag = 'scoped memory for tpu_custom_call.1']
    #allocation6 [shape = 'u8[262144]{0}', space=vmem, size = 0x40000, scoped, tag = 'input window, operand 4, single buffered']
    %10 = vsyncpa [#allocation3], 0
    %11 = vsyncpa [#allocation5], 0
    // Predicated region
    $region2: #{tpu_custom_call.1} parent=1 // pred_check
      _
    $region3: #{tpu_custom_call.1} parent=1 // pred_check_branch
      %13 = sbr.rel (0) target = $region5
    $region4: #{tpu_custom_call.1} parent=1 // pred_region
      %s15 = ssub.s32 4096, 4096
      %16 = vsyncadd [#allocation3], %s15
      %s17 = sshll.u32 [#allocation2], 4
      %s18 = int_to_ptr.vmem [resolvable:$true] %s17
      %23 = dma.hbm_to_vmem [thread:$0]  %s0, 4096, %s18, [#allocation3], 128, 128, 8
    $region5: #{tpu_custom_call.1} parent=1 // pred_fallthru
      _
    // Predicated region
    $region6: #{tpu_custom_call.1} parent=1 // pred_check
      _
    $region7: #{tpu_custom_call.1} parent=1 // pred_check_branch
      %25 = sbr.rel (0) target = $region9
    $region8: #{tpu_custom_call.1} parent=1 // pred_region
      %s27 = ssub.s32 256, 256
      %28 = vsyncadd [#allocation5], %s27
      %s29 = sshll.u32 [#allocation4], 4
      %s30 = int_to_ptr.vmem [resolvable:$true] %s29
      %35 = dma.hbm_to_vmem [thread:$0]  %s1, 256, %s30, [#allocation5], 128, 128, 8
    $region9: #{tpu_custom_call.1} parent=1 // pred_fallthru
      _
    // Predicated region
    $region10: #{tpu_custom_call.1} parent=1 // pred_check
      _
    $region11: #{tpu_custom_call.1} parent=1 // pred_check_branch
      %37 = sbr.rel (0) target = $region13
    $region12: #{tpu_custom_call.1} parent=1 // pred_region
      _
    $region13: #{tpu_custom_call.1} parent=1 // pred_fallthru
      _
    // Predicated region
    $region14: #{tpu_custom_call.1} parent=1 // pred_check
      _
    $region15: #{tpu_custom_call.1} parent=1 // pred_check_branch
      %39 = sbr.rel (0) target = $region17
    $region16: #{tpu_custom_call.1} parent=1 // pred_region
      _
    $region17: #{tpu_custom_call.1} parent=1 // pred_fallthru
      _
    // Predicated region
    $region18: #{tpu_custom_call.1} parent=1 // pred_check
      _
    $region19: #{tpu_custom_call.1} parent=1 // pred_check_branch
      %41 = sbr.rel (0) target = $region21
    $region20: #{tpu_custom_call.1} parent=1 // pred_region
      %s43 = ssub.s32 8192, 8192
      %44 = vsyncadd [#allocation5], %s43
      %s45 = sshll.u32 [#allocation6], 4
      %s46 = int_to_ptr.vmem [resolvable:$true] %s45
      %51 = dma.hbm_to_vmem [thread:$0]  %s4, 8192, %s46, [#allocation5], 256, 256, 16
    $region21: #{tpu_custom_call.1} parent=1 // pred_fallthru
      _
    // Predicated region
    $region22: #{tpu_custom_call.1} parent=1 // pred_check
      _
    $region23: #{tpu_custom_call.1} parent=1 // pred_check_branch
      %53 = sbr.rel (0) target = $region25
    $region24: #{tpu_custom_call.1} parent=1 // pred_region
      %54 = dma.done [#allocation3], 4096
    $region25: #{tpu_custom_call.1} parent=1 // pred_fallthru
      _
    // Predicated region
    $region26: #{tpu_custom_call.1} parent=1 // pred_check
      _
    $region27: #{tpu_custom_call.1} parent=1 // pred_check_branch
      %56 = sbr.rel (0) target = $region29
    $region28: #{tpu_custom_call.1} parent=1 // pred_region
      %57 = dma.done [#allocation5], 256
    $region29: #{tpu_custom_call.1} parent=1 // pred_fallthru
      _
    // Predicated region
    $region30: #{tpu_custom_call.1} parent=1 // pred_check
      _
    $region31: #{tpu_custom_call.1} parent=1 // pred_check_branch
      %59 = sbr.rel (0) target = $region33
    $region32: #{tpu_custom_call.1} parent=1 // pred_region
      %60 = dma.done [#allocation5], 8192
    $region33: #{tpu_custom_call.1} parent=1 // pred_fallthru
      _
    %v61 = vld [vmem:[#allocation2] sm:$0xff]
    %v62 = vld [vmem:[#allocation2 + $0x8] sm:$0xff]
    %v63 = vld [vmem:[#allocation2 + $0x10] sm:$0xff]
    %v64 = vld [vmem:[#allocation2 + $0x18] sm:$0xff]
    %v65 = vld [vmem:[#allocation2 + $0x20] sm:$0xff]
    %v66 = vld [vmem:[#allocation2 + $0x28] sm:$0xff]
    %v67 = vld [vmem:[#allocation2 + $0x30] sm:$0xff]
    %v68 = vld [vmem:[#allocation2 + $0x38] sm:$0xff]
    %v69 = vld [vmem:[#allocation2 + $0x40] sm:$0xff]
    %v70 = vld [vmem:[#allocation2 + $0x48] sm:$0xff]
    %v71 = vld [vmem:[#allocation2 + $0x50] sm:$0xff]
    %v72 = vld [vmem:[#allocation2 + $0x58] sm:$0xff]
    %v73 = vld [vmem:[#allocation2 + $0x60] sm:$0xff]
    %v74 = vld [vmem:[#allocation2 + $0x68] sm:$0xff]
    %v75 = vld [vmem:[#allocation2 + $0x70] sm:$0xff]
    %v76 = vld [vmem:[#allocation2 + $0x78] sm:$0xff]
    %v77 = vld [vmem:[#allocation2 + $0x80] sm:$0xff]
    %v78 = vld [vmem:[#allocation2 + $0x88] sm:$0xff]
    %v79 = vld [vmem:[#allocation2 + $0x90] sm:$0xff]
    %v80 = vld [vmem:[#allocation2 + $0x98] sm:$0xff]
    %v81 = vld [vmem:[#allocation2 + $0xa0] sm:$0xff]
    %v82 = vld [vmem:[#allocation2 + $0xa8] sm:$0xff]
    %v83 = vld [vmem:[#allocation2 + $0xb0] sm:$0xff]
    %v84 = vld [vmem:[#allocation2 + $0xb8] sm:$0xff]
    %v85 = vld [vmem:[#allocation2 + $0xc0] sm:$0xff]
    %v86 = vld [vmem:[#allocation2 + $0xc8] sm:$0xff]
    %v87 = vld [vmem:[#allocation2 + $0xd0] sm:$0xff]
    %v88 = vld [vmem:[#allocation2 + $0xd8] sm:$0xff]
    %v89 = vld [vmem:[#allocation2 + $0xe0] sm:$0xff]
    %v90 = vld [vmem:[#allocation2 + $0xe8] sm:$0xff]
    %v91 = vld [vmem:[#allocation2 + $0xf0] sm:$0xff]
    %v92 = vld [vmem:[#allocation2 + $0xf8] sm:$0xff]
    %v93 = vld [vmem:[#allocation4] sm:$0xff]
    %v94 = vld [vmem:[#allocation4 + $0x8] sm:$0xff]
    %v95 = vld [vmem:[%s2] sm:$0xff]
    %v96 = vld [vmem:[%s2 + $0x8] sm:$0xff]
    %v97 = vld [vmem:[%s2 + $0x10] sm:$0xff]
    %v98 = vld [vmem:[%s2 + $0x18] sm:$0xff]
    %v99 = vld [vmem:[%s3] sm:$0xff]
    %v100 = vld [vmem:[%s3 + $0x8] sm:$0xff]
    %v101 = vld [vmem:[%s3 + $0x10] sm:$0xff]
    %v102 = vld [vmem:[%s3 + $0x18] sm:$0xff]
    %v103 = vld [vmem:[#allocation6] sm:$0xff]
    %v104 = vld [vmem:[#allocation6 + $0x8] sm:$0xff]
    %v105 = vld [vmem:[#allocation6 + $0x10] sm:$0xff]
    %v106 = vld [vmem:[#allocation6 + $0x18] sm:$0xff]
    %v107 = vld [vmem:[#allocation6 + $0x20] sm:$0xff]
    %v108 = vld [vmem:[#allocation6 + $0x28] sm:$0xff]
    %v109 = vld [vmem:[#allocation6 + $0x30] sm:$0xff]
    %v110 = vld [vmem:[#allocation6 + $0x38] sm:$0xff]
    %v111 = vld [vmem:[#allocation6 + $0x40] sm:$0xff]
    %v112 = vld [vmem:[#allocation6 + $0x48] sm:$0xff]
    %v113 = vld [vmem:[#allocation6 + $0x50] sm:$0xff]
    %v114 = vld [vmem:[#allocation6 + $0x58] sm:$0xff]
    %v115 = vld [vmem:[#allocation6 + $0x60] sm:$0xff]
    %v116 = vld [vmem:[#allocation6 + $0x68] sm:$0xff]
    %v117 = vld [vmem:[#allocation6 + $0x70] sm:$0xff]
    %v118 = vld [vmem:[#allocation6 + $0x78] sm:$0xff]
    %v119 = vld [vmem:[#allocation6 + $0x80] sm:$0xff]
    %v120 = vld [vmem:[#allocation6 + $0x88] sm:$0xff]
    %v121 = vld [vmem:[#allocation6 + $0x90] sm:$0xff]
    %v122 = vld [vmem:[#allocation6 + $0x98] sm:$0xff]
    %v123 = vld [vmem:[#allocation6 + $0xa0] sm:$0xff]
    %v124 = vld [vmem:[#allocation6 + $0xa8] sm:$0xff]
    %v125 = vld [vmem:[#allocation6 + $0xb0] sm:$0xff]
    %v126 = vld [vmem:[#allocation6 + $0xb8] sm:$0xff]
    %v127 = vld [vmem:[#allocation6 + $0xc0] sm:$0xff]
    %v128 = vld [vmem:[#allocation6 + $0xc8] sm:$0xff]
    %v129 = vld [vmem:[#allocation6 + $0xd0] sm:$0xff]
    %v130 = vld [vmem:[#allocation6 + $0xd8] sm:$0xff]
    %v131 = vld [vmem:[#allocation6 + $0xe0] sm:$0xff]
    %v132 = vld [vmem:[#allocation6 + $0xe8] sm:$0xff]
    %v133 = vld [vmem:[#allocation6 + $0xf0] sm:$0xff]
    %v134 = vld [vmem:[#allocation6 + $0xf8] sm:$0xff]
    %v135 = vld [vmem:[#allocation6 + $0x100] sm:$0xff]
    %v136 = vld [vmem:[#allocation6 + $0x108] sm:$0xff]
    %v137 = vld [vmem:[#allocation6 + $0x110] sm:$0xff]
    %v138 = vld [vmem:[#allocation6 + $0x118] sm:$0xff]
    %v139 = vld [vmem:[#allocation6 + $0x120] sm:$0xff]
    %v140 = vld [vmem:[#allocation6 + $0x128] sm:$0xff]
    %v141 = vld [vmem:[#allocation6 + $0x130] sm:$0xff]
    %v142 = vld [vmem:[#allocation6 + $0x138] sm:$0xff]
    %v143 = vld [vmem:[#allocation6 + $0x140] sm:$0xff]
    %v144 = vld [vmem:[#allocation6 + $0x148] sm:$0xff]
    %v145 = vld [vmem:[#allocation6 + $0x150] sm:$0xff]
    %v146 = vld [vmem:[#allocation6 + $0x158] sm:$0xff]
    %v147 = vld [vmem:[#allocation6 + $0x160] sm:$0xff]
    %v148 = vld [vmem:[#allocation6 + $0x168] sm:$0xff]
    %v149 = vld [vmem:[#allocation6 + $0x170] sm:$0xff]
    %v150 = vld [vmem:[#allocation6 + $0x178] sm:$0xff]
    %v151 = vld [vmem:[#allocation6 + $0x180] sm:$0xff]
    %v152 = vld [vmem:[#allocation6 + $0x188] sm:$0xff]
    %v153 = vld [vmem:[#allocation6 + $0x190] sm:$0xff]
    %v154 = vld [vmem:[#allocation6 + $0x198] sm:$0xff]
    %v155 = vld [vmem:[#allocation6 + $0x1a0] sm:$0xff]
    %v156 = vld [vmem:[#allocation6 + $0x1a8] sm:$0xff]
    %v157 = vld [vmem:[#allocation6 + $0x1b0] sm:$0xff]
    %v158 = vld [vmem:[#allocation6 + $0x1b8] sm:$0xff]
    %v159 = vld [vmem:[#allocation6 + $0x1c0] sm:$0xff]
    %v160 = vld [vmem:[#allocation6 + $0x1c8] sm:$0xff]
    %v161 = vld [vmem:[#allocation6 + $0x1d0] sm:$0xff]
    %v162 = vld [vmem:[#allocation6 + $0x1d8] sm:$0xff]
    %v163 = vld [vmem:[#allocation6 + $0x1e0] sm:$0xff]
    %v164 = vld [vmem:[#allocation6 + $0x1e8] sm:$0xff]
    %v165 = vld [vmem:[#allocation6 + $0x1f0] sm:$0xff]
    %v166 = vld [vmem:[#allocation6 + $0x1f8] sm:$0xff]
    %vm167 = vcmask 130048
    %v168 = vsel %vm167, %v61, 0.0
    %169 = vadd.xlane.f32.xlu0 %v168
    %v170 = vpop.xlane.xlu0 %169
    %v171 = vsel %vm167, %v62, 0.0
    %172 = vadd.xlane.f32.xlu0 %v171
    %v173 = vpop.xlane.xlu0 %172
    %v174 = vsel %vm167, %v63, 0.0
    %175 = vadd.xlane.f32.xlu0 %v174
    %v176 = vpop.xlane.xlu0 %175
    %v177 = vsel %vm167, %v64, 0.0
    %178 = vadd.xlane.f32.xlu0 %v177
    %v179 = vpop.xlane.xlu0 %178
    %v180 = vsel %vm167, %v65, 0.0
    %181 = vadd.xlane.f32.xlu0 %v180
    %v182 = vpop.xlane.xlu0 %181
    %v183 = vsel %vm167, %v66, 0.0
    %184 = vadd.xlane.f32.xlu0 %v183
    %v185 = vpop.xlane.xlu0 %184
    %v186 = vsel %vm167, %v67, 0.0
    %187 = vadd.xlane.f32.xlu0 %v186
    %v188 = vpop.xlane.xlu0 %187
    %v189 = vsel %vm167, %v68, 0.0
    %190 = vadd.xlane.f32.xlu0 %v189
    %v191 = vpop.xlane.xlu0 %190
    %v192 = vsel %vm167, %v69, 0.0
    %193 = vadd.xlane.f32.xlu0 %v192
    %v194 = vpop.xlane.xlu0 %193
    %v195 = vsel %vm167, %v70, 0.0
    %196 = vadd.xlane.f32.xlu0 %v195
    %v197 = vpop.xlane.xlu0 %196
    %v198 = vsel %vm167, %v71, 0.0
    %199 = vadd.xlane.f32.xlu0 %v198
    %v200 = vpop.xlane.xlu0 %199
    %v201 = vsel %vm167, %v72, 0.0
    %202 = vadd.xlane.f32.xlu0 %v201
    %v203 = vpop.xlane.xlu0 %202
    %v204 = vsel %vm167, %v73, 0.0
    %205 = vadd.xlane.f32.xlu0 %v204
    %v206 = vpop.xlane.xlu0 %205
    %v207 = vsel %vm167, %v74, 0.0
    %208 = vadd.xlane.f32.xlu0 %v207
    %v209 = vpop.xlane.xlu0 %208
    %v210 = vsel %vm167, %v75, 0.0
    %211 = vadd.xlane.f32.xlu0 %v210
    %v212 = vpop.xlane.xlu0 %211
    %v213 = vsel %vm167, %v76, 0.0
    %214 = vadd.xlane.f32.xlu0 %v213
    %v215 = vpop.xlane.xlu0 %214
    %v216 = vsel %vm167, %v77, 0.0
    %217 = vadd.xlane.f32.xlu0 %v216
    %v218 = vpop.xlane.xlu0 %217
    %v219 = vsel %vm167, %v78, 0.0
    %220 = vadd.xlane.f32.xlu0 %v219
    %v221 = vpop.xlane.xlu0 %220
    %v222 = vsel %vm167, %v79, 0.0
    %223 = vadd.xlane.f32.xlu0 %v222
    %v224 = vpop.xlane.xlu0 %223
    %v225 = vsel %vm167, %v80, 0.0
    %226 = vadd.xlane.f32.xlu0 %v225
    %v227 = vpop.xlane.xlu0 %226
    %v228 = vsel %vm167, %v81, 0.0
    %229 = vadd.xlane.f32.xlu0 %v228
    %v230 = vpop.xlane.xlu0 %229
    %v231 = vsel %vm167, %v82, 0.0
    %232 = vadd.xlane.f32.xlu0 %v231
    %v233 = vpop.xlane.xlu0 %232
    %v234 = vsel %vm167, %v83, 0.0
    %235 = vadd.xlane.f32.xlu0 %v234
    %v236 = vpop.xlane.xlu0 %235
    %v237 = vsel %vm167, %v84, 0.0
    %238 = vadd.xlane.f32.xlu0 %v237
    %v239 = vpop.xlane.xlu0 %238
    %v240 = vsel %vm167, %v85, 0.0
    %241 = vadd.xlane.f32.xlu0 %v240
    %v242 = vpop.xlane.xlu0 %241
    %v243 = vsel %vm167, %v86, 0.0
    %244 = vadd.xlane.f32.xlu0 %v243
    %v245 = vpop.xlane.xlu0 %244
    %v246 = vsel %vm167, %v87, 0.0
    %247 = vadd.xlane.f32.xlu0 %v246
    %v248 = vpop.xlane.xlu0 %247
    %v249 = vsel %vm167, %v88, 0.0
    %250 = vadd.xlane.f32.xlu0 %v249
    %v251 = vpop.xlane.xlu0 %250
    %v252 = vsel %vm167, %v89, 0.0
    %253 = vadd.xlane.f32.xlu0 %v252
    %v254 = vpop.xlane.xlu0 %253
    %v255 = vsel %vm167, %v90, 0.0
    %256 = vadd.xlane.f32.xlu0 %v255
    %v257 = vpop.xlane.xlu0 %256
    %v258 = vsel %vm167, %v91, 0.0
    %259 = vadd.xlane.f32.xlu0 %v258
    %v260 = vpop.xlane.xlu0 %259
    %v261 = vsel %vm167, %v92, 0.0
    %262 = vadd.xlane.f32.xlu0 %v261
    %v263 = vpop.xlane.xlu0 %262
    %v264 = vrsqrt.pop %v170
    %v265 = vmul.f32 %v170, %v264
    %vm266 = vcmp.eq.f32.partialorder %v170, inf
    %v267 = vsel %vm266, %v170, %v265
    %vm268 = vcmp.eq.f32.partialorder %v170, 0.0
    %v269 = vand.u32 %v170, 2147483648
    %v270 = vsel %vm268, %v269, %v267
    %v271 = vrsqrt.pop %v173
    %v272 = vmul.f32 %v173, %v271
    %vm273 = vcmp.eq.f32.partialorder %v173, inf
    %v274 = vsel %vm273, %v173, %v272
    %vm275 = vcmp.eq.f32.partialorder %v173, 0.0
    %v276 = vand.u32 %v173, 2147483648
    %v277 = vsel %vm275, %v276, %v274
    %v278 = vrsqrt.pop %v176
    %v279 = vmul.f32 %v176, %v278
    %vm280 = vcmp.eq.f32.partialorder %v176, inf
    %v281 = vsel %vm280, %v176, %v279
    %vm282 = vcmp.eq.f32.partialorder %v176, 0.0
    %v283 = vand.u32 %v176, 2147483648
    %v284 = vsel %vm282, %v283, %v281
    %v285 = vrsqrt.pop %v179
    %v286 = vmul.f32 %v179, %v285
    %vm287 = vcmp.eq.f32.partialorder %v179, inf
    %v288 = vsel %vm287, %v179, %v286
    %vm289 = vcmp.eq.f32.partialorder %v179, 0.0
    %v290 = vand.u32 %v179, 2147483648
    %v291 = vsel %vm289, %v290, %v288
    %v292 = vrsqrt.pop %v182
    %v293 = vmul.f32 %v182, %v292
    %vm294 = vcmp.eq.f32.partialorder %v182, inf
    %v295 = vsel %vm294, %v182, %v293
    %vm296 = vcmp.eq.f32.partialorder %v182, 0.0
    %v297 = vand.u32 %v182, 2147483648
    %v298 = vsel %vm296, %v297, %v295
    %v299 = vrsqrt.pop %v185
    %v300 = vmul.f32 %v185, %v299
    %vm301 = vcmp.eq.f32.partialorder %v185, inf
    %v302 = vsel %vm301, %v185, %v300
    %vm303 = vcmp.eq.f32.partialorder %v185, 0.0
    %v304 = vand.u32 %v185, 2147483648
    %v305 = vsel %vm303, %v304, %v302
    %v306 = vrsqrt.pop %v188
    %v307 = vmul.f32 %v188, %v306
    %vm308 = vcmp.eq.f32.partialorder %v188, inf
    %v309 = vsel %vm308, %v188, %v307
    %vm310 = vcmp.eq.f32.partialorder %v188, 0.0
    %v311 = vand.u32 %v188, 2147483648
    %v312 = vsel %vm310, %v311, %v309
    %v313 = vrsqrt.pop %v191
    %v314 = vmul.f32 %v191, %v313
    %vm315 = vcmp.eq.f32.partialorder %v191, inf
    %v316 = vsel %vm315, %v191, %v314
    %vm317 = vcmp.eq.f32.partialorder %v191, 0.0
    %v318 = vand.u32 %v191, 2147483648
    %v319 = vsel %vm317, %v318, %v316
    %v320 = vrsqrt.pop %v194
    %v321 = vmul.f32 %v194, %v320
    %vm322 = vcmp.eq.f32.partialorder %v194, inf
    %v323 = vsel %vm322, %v194, %v321
    %vm324 = vcmp.eq.f32.partialorder %v194, 0.0
    %v325 = vand.u32 %v194, 2147483648
    %v326 = vsel %vm324, %v325, %v323
    %v327 = vrsqrt.pop %v197
    %v328 = vmul.f32 %v197, %v327
    %vm329 = vcmp.eq.f32.partialorder %v197, inf
    %v330 = vsel %vm329, %v197, %v328
    %vm331 = vcmp.eq.f32.partialorder %v197, 0.0
    %v332 = vand.u32 %v197, 2147483648
    %v333 = vsel %vm331, %v332, %v330
    %v334 = vrsqrt.pop %v200
    %v335 = vmul.f32 %v200, %v334
    %vm336 = vcmp.eq.f32.partialorder %v200, inf
    %v337 = vsel %vm336, %v200, %v335
    %vm338 = vcmp.eq.f32.partialorder %v200, 0.0
    %v339 = vand.u32 %v200, 2147483648
    %v340 = vsel %vm338, %v339, %v337
    %v341 = vrsqrt.pop %v203
    %v342 = vmul.f32 %v203, %v341
    %vm343 = vcmp.eq.f32.partialorder %v203, inf
    %v344 = vsel %vm343, %v203, %v342
    %vm345 = vcmp.eq.f32.partialorder %v203, 0.0
    %v346 = vand.u32 %v203, 2147483648
    %v347 = vsel %vm345, %v346, %v344
    %v348 = vrsqrt.pop %v206
    %v349 = vmul.f32 %v206, %v348
    %vm350 = vcmp.eq.f32.partialorder %v206, inf
    %v351 = vsel %vm350, %v206, %v349
    %vm352 = vcmp.eq.f32.partialorder %v206, 0.0
    %v353 = vand.u32 %v206, 2147483648
    %v354 = vsel %vm352, %v353, %v351
    %v355 = vrsqrt.pop %v209
    %v356 = vmul.f32 %v209, %v355
    %vm357 = vcmp.eq.f32.partialorder %v209, inf
    %v358 = vsel %vm357, %v209, %v356
    %vm359 = vcmp.eq.f32.partialorder %v209, 0.0
    %v360 = vand.u32 %v209, 2147483648
    %v361 = vsel %vm359, %v360, %v358
    %v362 = vrsqrt.pop %v212
    %v363 = vmul.f32 %v212, %v362
    %vm364 = vcmp.eq.f32.partialorder %v212, inf
    %v365 = vsel %vm364, %v212, %v363
    %vm366 = vcmp.eq.f32.partialorder %v212, 0.0
    %v367 = vand.u32 %v212, 2147483648
    %v368 = vsel %vm366, %v367, %v365
    %v369 = vrsqrt.pop %v215
    %v370 = vmul.f32 %v215, %v369
    %vm371 = vcmp.eq.f32.partialorder %v215, inf
    %v372 = vsel %vm371, %v215, %v370
    %vm373 = vcmp.eq.f32.partialorder %v215, 0.0
    %v374 = vand.u32 %v215, 2147483648
    %v375 = vsel %vm373, %v374, %v372
    %v376 = vrsqrt.pop %v218
    %v377 = vmul.f32 %v218, %v376
    %vm378 = vcmp.eq.f32.partialorder %v218, inf
    %v379 = vsel %vm378, %v218, %v377
    %vm380 = vcmp.eq.f32.partialorder %v218, 0.0
    %v381 = vand.u32 %v218, 2147483648
    %v382 = vsel %vm380, %v381, %v379
    %v383 = vrsqrt.pop %v221
    %v384 = vmul.f32 %v221, %v383
    %vm385 = vcmp.eq.f32.partialorder %v221, inf
    %v386 = vsel %vm385, %v221, %v384
    %vm387 = vcmp.eq.f32.partialorder %v221, 0.0
    %v388 = vand.u32 %v221, 2147483648
    %v389 = vsel %vm387, %v388, %v386
    %v390 = vrsqrt.pop %v224
    %v391 = vmul.f32 %v224, %v390
    %vm392 = vcmp.eq.f32.partialorder %v224, inf
    %v393 = vsel %vm392, %v224, %v391
    %vm394 = vcmp.eq.f32.partialorder %v224, 0.0
    %v395 = vand.u32 %v224, 2147483648
    %v396 = vsel %vm394, %v395, %v393
    %v397 = vrsqrt.pop %v227
    %v398 = vmul.f32 %v227, %v397
    %vm399 = vcmp.eq.f32.partialorder %v227, inf
    %v400 = vsel %vm399, %v227, %v398
    %vm401 = vcmp.eq.f32.partialorder %v227, 0.0
    %v402 = vand.u32 %v227, 2147483648
    %v403 = vsel %vm401, %v402, %v400
    %v404 = vrsqrt.pop %v230
    %v405 = vmul.f32 %v230, %v404
    %vm406 = vcmp.eq.f32.partialorder %v230, inf
    %v407 = vsel %vm406, %v230, %v405
    %vm408 = vcmp.eq.f32.partialorder %v230, 0.0
    %v409 = vand.u32 %v230, 2147483648
    %v410 = vsel %vm408, %v409, %v407
    %v411 = vrsqrt.pop %v233
    %v412 = vmul.f32 %v233, %v411
    %vm413 = vcmp.eq.f32.partialorder %v233, inf
    %v414 = vsel %vm413, %v233, %v412
    %vm415 = vcmp.eq.f32.partialorder %v233, 0.0
    %v416 = vand.u32 %v233, 2147483648
    %v417 = vsel %vm415, %v416, %v414
    %v418 = vrsqrt.pop %v236
    %v419 = vmul.f32 %v236, %v418
    %vm420 = vcmp.eq.f32.partialorder %v236, inf
    %v421 = vsel %vm420, %v236, %v419
    %vm422 = vcmp.eq.f32.partialorder %v236, 0.0
    %v423 = vand.u32 %v236, 2147483648
    %v424 = vsel %vm422, %v423, %v421
    %v425 = vrsqrt.pop %v239
    %v426 = vmul.f32 %v239, %v425
    %vm427 = vcmp.eq.f32.partialorder %v239, inf
    %v428 = vsel %vm427, %v239, %v426
    %vm429 = vcmp.eq.f32.partialorder %v239, 0.0
    %v430 = vand.u32 %v239, 2147483648
    %v431 = vsel %vm429, %v430, %v428
    %v432 = vrsqrt.pop %v242
    %v433 = vmul.f32 %v242, %v432
    %vm434 = vcmp.eq.f32.partialorder %v242, inf
    %v435 = vsel %vm434, %v242, %v433
    %vm436 = vcmp.eq.f32.partialorder %v242, 0.0
    %v437 = vand.u32 %v242, 2147483648
    %v438 = vsel %vm436, %v437, %v435
    %v439 = vrsqrt.pop %v245
    %v440 = vmul.f32 %v245, %v439
    %vm441 = vcmp.eq.f32.partialorder %v245, inf
    %v442 = vsel %vm441, %v245, %v440
    %vm443 = vcmp.eq.f32.partialorder %v245, 0.0
    %v444 = vand.u32 %v245, 2147483648
    %v445 = vsel %vm443, %v444, %v442
    %v446 = vrsqrt.pop %v248
    %v447 = vmul.f32 %v248, %v446
    %vm448 = vcmp.eq.f32.partialorder %v248, inf
    %v449 = vsel %vm448, %v248, %v447
    %vm450 = vcmp.eq.f32.partialorder %v248, 0.0
    %v451 = vand.u32 %v248, 2147483648
    %v452 = vsel %vm450, %v451, %v449
    %v453 = vrsqrt.pop %v251
    %v454 = vmul.f32 %v251, %v453
    %vm455 = vcmp.eq.f32.partialorder %v251, inf
    %v456 = vsel %vm455, %v251, %v454
    %vm457 = vcmp.eq.f32.partialorder %v251, 0.0
    %v458 = vand.u32 %v251, 2147483648
    %v459 = vsel %vm457, %v458, %v456
    %v460 = vrsqrt.pop %v254
    %v461 = vmul.f32 %v254, %v460
    %vm462 = vcmp.eq.f32.partialorder %v254, inf
    %v463 = vsel %vm462, %v254, %v461
    %vm464 = vcmp.eq.f32.partialorder %v254, 0.0
    %v465 = vand.u32 %v254, 2147483648
    %v466 = vsel %vm464, %v465, %v463
    %v467 = vrsqrt.pop %v257
    %v468 = vmul.f32 %v257, %v467
    %vm469 = vcmp.eq.f32.partialorder %v257, inf
    %v470 = vsel %vm469, %v257, %v468
    %vm471 = vcmp.eq.f32.partialorder %v257, 0.0
    %v472 = vand.u32 %v257, 2147483648
    %v473 = vsel %vm471, %v472, %v470
    %v474 = vrsqrt.pop %v260
    %v475 = vmul.f32 %v260, %v474
    %vm476 = vcmp.eq.f32.partialorder %v260, inf
    %v477 = vsel %vm476, %v260, %v475
    %vm478 = vcmp.eq.f32.partialorder %v260, 0.0
    %v479 = vand.u32 %v260, 2147483648
    %v480 = vsel %vm478, %v479, %v477
    %v481 = vrsqrt.pop %v263
    %v482 = vmul.f32 %v263, %v481
    %vm483 = vcmp.eq.f32.partialorder %v263, inf
    %v484 = vsel %vm483, %v263, %v482
    %vm485 = vcmp.eq.f32.partialorder %v263, 0.0
    %v486 = vand.u32 %v263, 2147483648
    %v487 = vsel %vm485, %v486, %v484
    %488 = vxpose.xlu0.b32.start [1/16] %v270, 128
    %489 = vxpose.xlu0.b32.cont [2/16] %v277, 128
    %490 = vxpose.xlu0.b32.cont [3/16] 0.0, 128
    %491 = vxpose.xlu0.b32.cont [4/16] 0.0, 128
    %492 = vxpose.xlu0.b32.cont [5/16] 0.0, 128
    %493 = vxpose.xlu0.b32.cont [6/16] 0.0, 128
    %494 = vxpose.xlu0.b32.cont [7/16] 0.0, 128
    %495 = vxpose.xlu0.b32.cont [8/16] 0.0, 128
    %496 = vxpose.xlu0.b32.cont [9/16] 0.0, 128
    %497 = vxpose.xlu0.b32.cont [10/16] 0.0, 128
    %498 = vxpose.xlu0.b32.cont [11/16] 0.0, 128
    %499 = vxpose.xlu0.b32.cont [12/16] 0.0, 128
    %500 = vxpose.xlu0.b32.cont [13/16] 0.0, 128
    %501 = vxpose.xlu0.b32.cont [14/16] 0.0, 128
    %502 = vxpose.xlu0.b32.cont [15/16] 0.0, 128
    %503 = vxpose.xlu0.b32.end [16/16] 0.0, 128
    %v504 = vpop.trf.xlu0
    %v505 = vpop.trf.xlu0
    %v506 = vpop.trf.xlu0
    %v507 = vpop.trf.xlu0
    %v508 = vpop.trf.xlu0
    %v509 = vpop.trf.xlu0
    %v510 = vpop.trf.xlu0
    %v511 = vpop.trf.xlu0
    %v512 = vpop.trf.xlu0
    %v513 = vpop.trf.xlu0
    %v514 = vpop.trf.xlu0
    %v515 = vpop.trf.xlu0
    %v516 = vpop.trf.xlu0
    %v517 = vpop.trf.xlu0
    %v518 = vpop.trf.xlu0
    %v519 = vpop.trf.xlu0
    %520 = vxpose.xlu0.b32.start [1/16] %v284, 128
    %521 = vxpose.xlu0.b32.cont [2/16] %v291, 128
    %522 = vxpose.xlu0.b32.cont [3/16] 0.0, 128
    %523 = vxpose.xlu0.b32.cont [4/16] 0.0, 128
    %524 = vxpose.xlu0.b32.cont [5/16] 0.0, 128
    %525 = vxpose.xlu0.b32.cont [6/16] 0.0, 128
    %526 = vxpose.xlu0.b32.cont [7/16] 0.0, 128
    %527 = vxpose.xlu0.b32.cont [8/16] 0.0, 128
    %528 = vxpose.xlu0.b32.cont [9/16] 0.0, 128
    %529 = vxpose.xlu0.b32.cont [10/16] 0.0, 128
    %530 = vxpose.xlu0.b32.cont [11/16] 0.0, 128
    %531 = vxpose.xlu0.b32.cont [12/16] 0.0, 128
    %532 = vxpose.xlu0.b32.cont [13/16] 0.0, 128
    %533 = vxpose.xlu0.b32.cont [14/16] 0.0, 128
    %534 = vxpose.xlu0.b32.cont [15/16] 0.0, 128
    %535 = vxpose.xlu0.b32.end [16/16] 0.0, 128
    %v536 = vpop.trf.xlu0
    %v537 = vpop.trf.xlu0
    %v538 = vpop.trf.xlu0
    %v539 = vpop.trf.xlu0
    %v540 = vpop.trf.xlu0
    %v541 = vpop.trf.xlu0
    %v542 = vpop.trf.xlu0
    %v543 = vpop.trf.xlu0
    %v544 = vpop.trf.xlu0
    %v545 = vpop.trf.xlu0
    %v546 = vpop.trf.xlu0
    %v547 = vpop.trf.xlu0
    %v548 = vpop.trf.xlu0
    %v549 = vpop.trf.xlu0
    %v550 = vpop.trf.xlu0
    %v551 = vpop.trf.xlu0
    %552 = vxpose.xlu0.b32.start [1/16] %v298, 128
    %553 = vxpose.xlu0.b32.cont [2/16] %v305, 128
    %554 = vxpose.xlu0.b32.cont [3/16] 0.0, 128
    %555 = vxpose.xlu0.b32.cont [4/16] 0.0, 128
    %556 = vxpose.xlu0.b32.cont [5/16] 0.0, 128
    %557 = vxpose.xlu0.b32.cont [6/16] 0.0, 128
    %558 = vxpose.xlu0.b32.cont [7/16] 0.0, 128
    %559 = vxpose.xlu0.b32.cont [8/16] 0.0, 128
    %560 = vxpose.xlu0.b32.cont [9/16] 0.0, 128
    %561 = vxpose.xlu0.b32.cont [10/16] 0.0, 128
    %562 = vxpose.xlu0.b32.cont [11/16] 0.0, 128
    %563 = vxpose.xlu0.b32.cont [12/16] 0.0, 128
    %564 = vxpose.xlu0.b32.cont [13/16] 0.0, 128
    %565 = vxpose.xlu0.b32.cont [14/16] 0.0, 128
    %566 = vxpose.xlu0.b32.cont [15/16] 0.0, 128
    %567 = vxpose.xlu0.b32.end [16/16] 0.0, 128
    %v568 = vpop.trf.xlu0
    %v569 = vpop.trf.xlu0
    %v570 = vpop.trf.xlu0
    %v571 = vpop.trf.xlu0
    %v572 = vpop.trf.xlu0
    %v573 = vpop.trf.xlu0
    %v574 = vpop.trf.xlu0
    %v575 = vpop.trf.xlu0
    %v576 = vpop.trf.xlu0
    %v577 = vpop.trf.xlu0
    %v578 = vpop.trf.xlu0
    %v579 = vpop.trf.xlu0
    %v580 = vpop.trf.xlu0
    %v581 = vpop.trf.xlu0
    %v582 = vpop.trf.xlu0
    %v583 = vpop.trf.xlu0
    %584 = vxpose.xlu0.b32.start [1/16] %v312, 128
    %585 = vxpose.xlu0.b32.cont [2/16] %v319, 128
    %586 = vxpose.xlu0.b32.cont [3/16] 0.0, 128
    %587 = vxpose.xlu0.b32.cont [4/16] 0.0, 128
    %588 = vxpose.xlu0.b32.cont [5/16] 0.0, 128
    %589 = vxpose.xlu0.b32.cont [6/16] 0.0, 128
    %590 = vxpose.xlu0.b32.cont [7/16] 0.0, 128
    %591 = vxpose.xlu0.b32.cont [8/16] 0.0, 128
    %592 = vxpose.xlu0.b32.cont [9/16] 0.0, 128
    %593 = vxpose.xlu0.b32.cont [10/16] 0.0, 128
    %594 = vxpose.xlu0.b32.cont [11/16] 0.0, 128
    %595 = vxpose.xlu0.b32.cont [12/16] 0.0, 128
    %596 = vxpose.xlu0.b32.cont [13/16] 0.0, 128
    %597 = vxpose.xlu0.b32.cont [14/16] 0.0, 128
    %598 = vxpose.xlu0.b32.cont [15/16] 0.0, 128
    %599 = vxpose.xlu0.b32.end [16/16] 0.0, 128
    %v600 = vpop.trf.xlu0
    %v601 = vpop.trf.xlu0
    %v602 = vpop.trf.xlu0
    %v603 = vpop.trf.xlu0
    %v604 = vpop.trf.xlu0
    %v605 = vpop.trf.xlu0
    %v606 = vpop.trf.xlu0
    %v607 = vpop.trf.xlu0
    %v608 = vpop.trf.xlu0
    %v609 = vpop.trf.xlu0
    %v610 = vpop.trf.xlu0
    %v611 = vpop.trf.xlu0
    %v612 = vpop.trf.xlu0
    %v613 = vpop.trf.xlu0
    %v614 = vpop.trf.xlu0
    %v615 = vpop.trf.xlu0
    %616 = vxpose.xlu0.b32.start [1/16] %v326, 128
    %617 = vxpose.xlu0.b32.cont [2/16] %v333, 128
    %618 = vxpose.xlu0.b32.cont [3/16] 0.0, 128
    %619 = vxpose.xlu0.b32.cont [4/16] 0.0, 128
    %620 = vxpose.xlu0.b32.cont [5/16] 0.0, 128
    %621 = vxpose.xlu0.b32.cont [6/16] 0.0, 128
    %622 = vxpose.xlu0.b32.cont [7/16] 0.0, 128
    %623 = vxpose.xlu0.b32.cont [8/16] 0.0, 128
    %624 = vxpose.xlu0.b32.cont [9/16] 0.0, 128
    %625 = vxpose.xlu0.b32.cont [10/16] 0.0, 128
    %626 = vxpose.xlu0.b32.cont [11/16] 0.0, 128
    %627 = vxpose.xlu0.b32.cont [12/16] 0.0, 128
    %628 = vxpose.xlu0.b32.cont [13/16] 0.0, 128
    %629 = vxpose.xlu0.b32.cont [14/16] 0.0, 128
    %630 = vxpose.xlu0.b32.cont [15/16] 0.0, 128
    %631 = vxpose.xlu0.b32.end [16/16] 0.0, 128
    %v632 = vpop.trf.xlu0
    %v633 = vpop.trf.xlu0
    %v634 = vpop.trf.xlu0
    %v635 = vpop.trf.xlu0
    %v636 = vpop.trf.xlu0
    %v637 = vpop.trf.xlu0
    %v638 = vpop.trf.xlu0
    %v639 = vpop.trf.xlu0
    %v640 = vpop.trf.xlu0
    %v641 = vpop.trf.xlu0
    %v642 = vpop.trf.xlu0
    %v643 = vpop.trf.xlu0
    %v644 = vpop.trf.xlu0
    %v645 = vpop.trf.xlu0
    %v646 = vpop.trf.xlu0
    %v647 = vpop.trf.xlu0
    %648 = vxpose.xlu0.b32.start [1/16] %v340, 128
    %649 = vxpose.xlu0.b32.cont [2/16] %v347, 128
    %650 = vxpose.xlu0.b32.cont [3/16] 0.0, 128
    %651 = vxpose.xlu0.b32.cont [4/16] 0.0, 128
    %652 = vxpose.xlu0.b32.cont [5/16] 0.0, 128
    %653 = vxpose.xlu0.b32.cont [6/16] 0.0, 128
    %654 = vxpose.xlu0.b32.cont [7/16] 0.0, 128
    %655 = vxpose.xlu0.b32.cont [8/16] 0.0, 128
    %656 = vxpose.xlu0.b32.cont [9/16] 0.0, 128
    %657 = vxpose.xlu0.b32.cont [10/16] 0.0, 128
    %658 = vxpose.xlu0.b32.cont [11/16] 0.0, 128
    %659 = vxpose.xlu0.b32.cont [12/16] 0.0, 128
    %660 = vxpose.xlu0.b32.cont [13/16] 0.0, 128
    %661 = vxpose.xlu0.b32.cont [14/16] 0.0, 128
    %662 = vxpose.xlu0.b32.cont [15/16] 0.0, 128
    %663 = vxpose.xlu0.b32.end [16/16] 0.0, 128
    %v664 = vpop.trf.xlu0
    %v665 = vpop.trf.xlu0
    %v666 = vpop.trf.xlu0
    %v667 = vpop.trf.xlu0
    %v668 = vpop.trf.xlu0
    %v669 = vpop.trf.xlu0
    %v670 = vpop.trf.xlu0
    %v671 = vpop.trf.xlu0
    %v672 = vpop.trf.xlu0
    %v673 = vpop.trf.xlu0
    %v674 = vpop.trf.xlu0
    %v675 = vpop.trf.xlu0
    %v676 = vpop.trf.xlu0
    %v677 = vpop.trf.xlu0
    %v678 = vpop.trf.xlu0
    %v679 = vpop.trf.xlu0
    %680 = vxpose.xlu0.b32.start [1/16] %v354, 128
    %681 = vxpose.xlu0.b32.cont [2/16] %v361, 128
    %682 = vxpose.xlu0.b32.cont [3/16] 0.0, 128
    %683 = vxpose.xlu0.b32.cont [4/16] 0.0, 128
    %684 = vxpose.xlu0.b32.cont [5/16] 0.0, 128
    %685 = vxpose.xlu0.b32.cont [6/16] 0.0, 128
    %686 = vxpose.xlu0.b32.cont [7/16] 0.0, 128
    %687 = vxpose.xlu0.b32.cont [8/16] 0.0, 128
    %688 = vxpose.xlu0.b32.cont [9/16] 0.0, 128
    %689 = vxpose.xlu0.b32.cont [10/16] 0.0, 128
    %690 = vxpose.xlu0.b32.cont [11/16] 0.0, 128
    %691 = vxpose.xlu0.b32.cont [12/16] 0.0, 128
    %692 = vxpose.xlu0.b32.cont [13/16] 0.0, 128
    %693 = vxpose.xlu0.b32.cont [14/16] 0.0, 128
    %694 = vxpose.xlu0.b32.cont [15/16] 0.0, 128
    %695 = vxpose.xlu0.b32.end [16/16] 0.0, 128
    %v696 = vpop.trf.xlu0
    %v697 = vpop.trf.xlu0
    %v698 = vpop.trf.xlu0
    %v699 = vpop.trf.xlu0
    %v700 = vpop.trf.xlu0
    %v701 = vpop.trf.xlu0
    %v702 = vpop.trf.xlu0
    %v703 = vpop.trf.xlu0
    %v704 = vpop.trf.xlu0
    %v705 = vpop.trf.xlu0
    %v706 = vpop.trf.xlu0
    %v707 = vpop.trf.xlu0
    %v708 = vpop.trf.xlu0
    %v709 = vpop.trf.xlu0
    %v710 = vpop.trf.xlu0
    %v711 = vpop.trf.xlu0
    %712 = vxpose.xlu0.b32.start [1/16] %v368, 128
    %713 = vxpose.xlu0.b32.cont [2/16] %v375, 128
    %714 = vxpose.xlu0.b32.cont [3/16] 0.0, 128
    %715 = vxpose.xlu0.b32.cont [4/16] 0.0, 128
    %716 = vxpose.xlu0.b32.cont [5/16] 0.0, 128
    %717 = vxpose.xlu0.b32.cont [6/16] 0.0, 128
    %718 = vxpose.xlu0.b32.cont [7/16] 0.0, 128
    %719 = vxpose.xlu0.b32.cont [8/16] 0.0, 128
    %720 = vxpose.xlu0.b32.cont [9/16] 0.0, 128
    %721 = vxpose.xlu0.b32.cont [10/16] 0.0, 128
    %722 = vxpose.xlu0.b32.cont [11/16] 0.0, 128
    %723 = vxpose.xlu0.b32.cont [12/16] 0.0, 128
    %724 = vxpose.xlu0.b32.cont [13/16] 0.0, 128
    %725 = vxpose.xlu0.b32.cont [14/16] 0.0, 128
    %726 = vxpose.xlu0.b32.cont [15/16] 0.0, 128
    %727 = vxpose.xlu0.b32.end [16/16] 0.0, 128
    %v728 = vpop.trf.xlu0
    %v729 = vpop.trf.xlu0
    %v730 = vpop.trf.xlu0
    %v731 = vpop.trf.xlu0
    %v732 = vpop.trf.xlu0
    %v733 = vpop.trf.xlu0
    %v734 = vpop.trf.xlu0
    %v735 = vpop.trf.xlu0
    %v736 = vpop.trf.xlu0
    %v737 = vpop.trf.xlu0
    %v738 = vpop.trf.xlu0
    %v739 = vpop.trf.xlu0
    %v740 = vpop.trf.xlu0
    %v741 = vpop.trf.xlu0
    %v742 = vpop.trf.xlu0
    %v743 = vpop.trf.xlu0
    %744 = vxpose.xlu0.b32.start [1/16] %v382, 128
    %745 = vxpose.xlu0.b32.cont [2/16] %v389, 128
    %746 = vxpose.xlu0.b32.cont [3/16] 0.0, 128
    %747 = vxpose.xlu0.b32.cont [4/16] 0.0, 128
    %748 = vxpose.xlu0.b32.cont [5/16] 0.0, 128
    %749 = vxpose.xlu0.b32.cont [6/16] 0.0, 128
    %750 = vxpose.xlu0.b32.cont [7/16] 0.0, 128
    %751 = vxpose.xlu0.b32.cont [8/16] 0.0, 128
    %752 = vxpose.xlu0.b32.cont [9/16] 0.0, 128
    %753 = vxpose.xlu0.b32.cont [10/16] 0.0, 128
    %754 = vxpose.xlu0.b32.cont [11/16] 0.0, 128
    %755 = vxpose.xlu0.b32.cont [12/16] 0.0, 128
    %756 = vxpose.xlu0.b32.cont [13/16] 0.0, 128
    %757 = vxpose.xlu0.b32.cont [14/16] 0.0, 128
    %758 = vxpose.xlu0.b32.cont [15/16] 0.0, 128
    %759 = vxpose.xlu0.b32.end [16/16] 0.0, 128
    %v760 = vpop.trf.xlu0
    %v761 = vpop.trf.xlu0
    %v762 = vpop.trf.xlu0
    %v763 = vpop.trf.xlu0
    %v764 = vpop.trf.xlu0
    %v765 = vpop.trf.xlu0
    %v766 = vpop.trf.xlu0
    %v767 = vpop.trf.xlu0
    %v768 = vpop.trf.xlu0
    %v769 = vpop.trf.xlu0
    %v770 = vpop.trf.xlu0
    %v771 = vpop.trf.xlu0
    %v772 = vpop.trf.xlu0
    %v773 = vpop.trf.xlu0
    %v774 = vpop.trf.xlu0
    %v775 = vpop.trf.xlu0
    %776 = vxpose.xlu0.b32.start [1/16] %v396, 128
    %777 = vxpose.xlu0.b32.cont [2/16] %v403, 128
    %778 = vxpose.xlu0.b32.cont [3/16] 0.0, 128
    %779 = vxpose.xlu0.b32.cont [4/16] 0.0, 128
    %780 = vxpose.xlu0.b32.cont [5/16] 0.0, 128
    %781 = vxpose.xlu0.b32.cont [6/16] 0.0, 128
    %782 = vxpose.xlu0.b32.cont [7/16] 0.0, 128
    %783 = vxpose.xlu0.b32.cont [8/16] 0.0, 128
    %784 = vxpose.xlu0.b32.cont [9/16] 0.0, 128
    %785 = vxpose.xlu0.b32.cont [10/16] 0.0, 128
    %786 = vxpose.xlu0.b32.cont [11/16] 0.0, 128
    %787 = vxpose.xlu0.b32.cont [12/16] 0.0, 128
    %788 = vxpose.xlu0.b32.cont [13/16] 0.0, 128
    %789 = vxpose.xlu0.b32.cont [14/16] 0.0, 128
    %790 = vxpose.xlu0.b32.cont [15/16] 0.0, 128
    %791 = vxpose.xlu0.b32.end [16/16] 0.0, 128
    %v792 = vpop.trf.xlu0
    %v793 = vpop.trf.xlu0
    %v794 = vpop.trf.xlu0
    %v795 = vpop.trf.xlu0
    %v796 = vpop.trf.xlu0
    %v797 = vpop.trf.xlu0
    %v798 = vpop.trf.xlu0
    %v799 = vpop.trf.xlu0
    %v800 = vpop.trf.xlu0
    %v801 = vpop.trf.xlu0
    %v802 = vpop.trf.xlu0
    %v803 = vpop.trf.xlu0
    %v804 = vpop.trf.xlu0
    %v805 = vpop.trf.xlu0
    %v806 = vpop.trf.xlu0
    %v807 = vpop.trf.xlu0
    %808 = vxpose.xlu0.b32.start [1/16] %v410, 128
    %809 = vxpose.xlu0.b32.cont [2/16] %v417, 128
    %810 = vxpose.xlu0.b32.cont [3/16] 0.0, 128
    %811 = vxpose.xlu0.b32.cont [4/16] 0.0, 128
    %812 = vxpose.xlu0.b32.cont [5/16] 0.0, 128
    %813 = vxpose.xlu0.b32.cont [6/16] 0.0, 128
    %814 = vxpose.xlu0.b32.cont [7/16] 0.0, 128
    %815 = vxpose.xlu0.b32.cont [8/16] 0.0, 128
    %816 = vxpose.xlu0.b32.cont [9/16] 0.0, 128
    %817 = vxpose.xlu0.b32.cont [10/16] 0.0, 128
    %818 = vxpose.xlu0.b32.cont [11/16] 0.0, 128
    %819 = vxpose.xlu0.b32.cont [12/16] 0.0, 128
    %820 = vxpose.xlu0.b32.cont [13/16] 0.0, 128
    %821 = vxpose.xlu0.b32.cont [14/16] 0.0, 128
    %822 = vxpose.xlu0.b32.cont [15/16] 0.0, 128
    %823 = vxpose.xlu0.b32.end [16/16] 0.0, 128
    %v824 = vpop.trf.xlu0
    %v825 = vpop.trf.xlu0
    %v826 = vpop.trf.xlu0
    %v827 = vpop.trf.xlu0
    %v828 = vpop.trf.xlu0
    %v829 = vpop.trf.xlu0
    %v830 = vpop.trf.xlu0
    %v831 = vpop.trf.xlu0
    %v832 = vpop.trf.xlu0
    %v833 = vpop.trf.xlu0
    %v834 = vpop.trf.xlu0
    %v835 = vpop.trf.xlu0
    %v836 = vpop.trf.xlu0
    %v837 = vpop.trf.xlu0
    %v838 = vpop.trf.xlu0
    %v839 = vpop.trf.xlu0
    %840 = vxpose.xlu0.b32.start [1/16] %v424, 128
    %841 = vxpose.xlu0.b32.cont [2/16] %v431, 128
    %842 = vxpose.xlu0.b32.cont [3/16] 0.0, 128
    %843 = vxpose.xlu0.b32.cont [4/16] 0.0, 128
    %844 = vxpose.xlu0.b32.cont [5/16] 0.0, 128
    %845 = vxpose.xlu0.b32.cont [6/16] 0.0, 128
    %846 = vxpose.xlu0.b32.cont [7/16] 0.0, 128
    %847 = vxpose.xlu0.b32.cont [8/16] 0.0, 128
    %848 = vxpose.xlu0.b32.cont [9/16] 0.0, 128
    %849 = vxpose.xlu0.b32.cont [10/16] 0.0, 128
    %850 = vxpose.xlu0.b32.cont [11/16] 0.0, 128
    %851 = vxpose.xlu0.b32.cont [12/16] 0.0, 128
    %852 = vxpose.xlu0.b32.cont [13/16] 0.0, 128
    %853 = vxpose.xlu0.b32.cont [14/16] 0.0, 128
    %854 = vxpose.xlu0.b32.cont [15/16] 0.0, 128
    %855 = vxpose.xlu0.b32.end [16/16] 0.0, 128
    %v856 = vpop.trf.xlu0
    %v857 = vpop.trf.xlu0
    %v858 = vpop.trf.xlu0
    %v859 = vpop.trf.xlu0
    %v860 = vpop.trf.xlu0
    %v861 = vpop.trf.xlu0
    %v862 = vpop.trf.xlu0
    %v863 = vpop.trf.xlu0
    %v864 = vpop.trf.xlu0
    %v865 = vpop.trf.xlu0
    %v866 = vpop.trf.xlu0
    %v867 = vpop.trf.xlu0
    %v868 = vpop.trf.xlu0
    %v869 = vpop.trf.xlu0
    %v870 = vpop.trf.xlu0
    %v871 = vpop.trf.xlu0
    %872 = vxpose.xlu0.b32.start [1/16] %v438, 128
    %873 = vxpose.xlu0.b32.cont [2/16] %v445, 128
    %874 = vxpose.xlu0.b32.cont [3/16] 0.0, 128
    %875 = vxpose.xlu0.b32.cont [4/16] 0.0, 128
    %876 = vxpose.xlu0.b32.cont [5/16] 0.0, 128
    %877 = vxpose.xlu0.b32.cont [6/16] 0.0, 128
    %878 = vxpose.xlu0.b32.cont [7/16] 0.0, 128
    %879 = vxpose.xlu0.b32.cont [8/16] 0.0, 128
    %880 = vxpose.xlu0.b32.cont [9/16] 0.0, 128
    %881 = vxpose.xlu0.b32.cont [10/16] 0.0, 128
    %882 = vxpose.xlu0.b32.cont [11/16] 0.0, 128
    %883 = vxpose.xlu0.b32.cont [12/16] 0.0, 128
    %884 = vxpose.xlu0.b32.cont [13/16] 0.0, 128
    %885 = vxpose.xlu0.b32.cont [14/16] 0.0, 128
    %886 = vxpose.xlu0.b32.cont [15/16] 0.0, 128
    %887 = vxpose.xlu0.b32.end [16/16] 0.0, 128
    %v888 = vpop.trf.xlu0
    %v889 = vpop.trf.xlu0
    %v890 = vpop.trf.xlu0
    %v891 = vpop.trf.xlu0
    %v892 = vpop.trf.xlu0
    %v893 = vpop.trf.xlu0
    %v894 = vpop.trf.xlu0
    %v895 = vpop.trf.xlu0
    %v896 = vpop.trf.xlu0
    %v897 = vpop.trf.xlu0
    %v898 = vpop.trf.xlu0
    %v899 = vpop.trf.xlu0
    %v900 = vpop.trf.xlu0
    %v901 = vpop.trf.xlu0
    %v902 = vpop.trf.xlu0
    %v903 = vpop.trf.xlu0
    %904 = vxpose.xlu0.b32.start [1/16] %v452, 128
    %905 = vxpose.xlu0.b32.cont [2/16] %v459, 128
    %906 = vxpose.xlu0.b32.cont [3/16] 0.0, 128
    %907 = vxpose.xlu0.b32.cont [4/16] 0.0, 128
    %908 = vxpose.xlu0.b32.cont [5/16] 0.0, 128
    %909 = vxpose.xlu0.b32.cont [6/16] 0.0, 128
    %910 = vxpose.xlu0.b32.cont [7/16] 0.0, 128
    %911 = vxpose.xlu0.b32.cont [8/16] 0.0, 128
    %912 = vxpose.xlu0.b32.cont [9/16] 0.0, 128
    %913 = vxpose.xlu0.b32.cont [10/16] 0.0, 128
    %914 = vxpose.xlu0.b32.cont [11/16] 0.0, 128
    %915 = vxpose.xlu0.b32.cont [12/16] 0.0, 128
    %916 = vxpose.xlu0.b32.cont [13/16] 0.0, 128
    %917 = vxpose.xlu0.b32.cont [14/16] 0.0, 128
    %918 = vxpose.xlu0.b32.cont [15/16] 0.0, 128
    %919 = vxpose.xlu0.b32.end [16/16] 0.0, 128
    %v920 = vpop.trf.xlu0
    %v921 = vpop.trf.xlu0
    %v922 = vpop.trf.xlu0
    %v923 = vpop.trf.xlu0
    %v924 = vpop.trf.xlu0
    %v925 = vpop.trf.xlu0
    %v926 = vpop.trf.xlu0
    %v927 = vpop.trf.xlu0
    %v928 = vpop.trf.xlu0
    %v929 = vpop.trf.xlu0
    %v930 = vpop.trf.xlu0
    %v931 = vpop.trf.xlu0
    %v932 = vpop.trf.xlu0
    %v933 = vpop.trf.xlu0
    %v934 = vpop.trf.xlu0
    %v935 = vpop.trf.xlu0
    %936 = vxpose.xlu0.b32.start [1/16] %v466, 128
    %937 = vxpose.xlu0.b32.cont [2/16] %v473, 128
    %938 = vxpose.xlu0.b32.cont [3/16] 0.0, 128
    %939 = vxpose.xlu0.b32.cont [4/16] 0.0, 128
    %940 = vxpose.xlu0.b32.cont [5/16] 0.0, 128
    %941 = vxpose.xlu0.b32.cont [6/16] 0.0, 128
    %942 = vxpose.xlu0.b32.cont [7/16] 0.0, 128
    %943 = vxpose.xlu0.b32.cont [8/16] 0.0, 128
    %944 = vxpose.xlu0.b32.cont [9/16] 0.0, 128
    %945 = vxpose.xlu0.b32.cont [10/16] 0.0, 128
    %946 = vxpose.xlu0.b32.cont [11/16] 0.0, 128
    %947 = vxpose.xlu0.b32.cont [12/16] 0.0, 128
    %948 = vxpose.xlu0.b32.cont [13/16] 0.0, 128
    %949 = vxpose.xlu0.b32.cont [14/16] 0.0, 128
    %950 = vxpose.xlu0.b32.cont [15/16] 0.0, 128
    %951 = vxpose.xlu0.b32.end [16/16] 0.0, 128
    %v952 = vpop.trf.xlu0
    %v953 = vpop.trf.xlu0
    %v954 = vpop.trf.xlu0
    %v955 = vpop.trf.xlu0
    %v956 = vpop.trf.xlu0
    %v957 = vpop.trf.xlu0
    %v958 = vpop.trf.xlu0
    %v959 = vpop.trf.xlu0
    %v960 = vpop.trf.xlu0
    %v961 = vpop.trf.xlu0
    %v962 = vpop.trf.xlu0
    %v963 = vpop.trf.xlu0
    %v964 = vpop.trf.xlu0
    %v965 = vpop.trf.xlu0
    %v966 = vpop.trf.xlu0
    %v967 = vpop.trf.xlu0
    %968 = vxpose.xlu0.b32.start [1/16] %v480, 128
    %969 = vxpose.xlu0.b32.cont [2/16] %v487, 128
    %970 = vxpose.xlu0.b32.cont [3/16] 0.0, 128
    %971 = vxpose.xlu0.b32.cont [4/16] 0.0, 128
    %972 = vxpose.xlu0.b32.cont [5/16] 0.0, 128
    %973 = vxpose.xlu0.b32.cont [6/16] 0.0, 128
    %974 = vxpose.xlu0.b32.cont [7/16] 0.0, 128
    %975 = vxpose.xlu0.b32.cont [8/16] 0.0, 128
    %976 = vxpose.xlu0.b32.cont [9/16] 0.0, 128
    %977 = vxpose.xlu0.b32.cont [10/16] 0.0, 128
    %978 = vxpose.xlu0.b32.cont [11/16] 0.0, 128
    %979 = vxpose.xlu0.b32.cont [12/16] 0.0, 128
    %980 = vxpose.xlu0.b32.cont [13/16] 0.0, 128
    %981 = vxpose.xlu0.b32.cont [14/16] 0.0, 128
    %982 = vxpose.xlu0.b32.cont [15/16] 0.0, 128
    %983 = vxpose.xlu0.b32.end [16/16] 0.0, 128
    %v984 = vpop.trf.xlu0
    %v985 = vpop.trf.xlu0
    %v986 = vpop.trf.xlu0
    %v987 = vpop.trf.xlu0
    %v988 = vpop.trf.xlu0
    %v989 = vpop.trf.xlu0
    %v990 = vpop.trf.xlu0
    %v991 = vpop.trf.xlu0
    %v992 = vpop.trf.xlu0
    %v993 = vpop.trf.xlu0
    %v994 = vpop.trf.xlu0
    %v995 = vpop.trf.xlu0
    %v996 = vpop.trf.xlu0
    %v997 = vpop.trf.xlu0
    %v998 = vpop.trf.xlu0
    %v999 = vpop.trf.xlu0
    %v1000 = vlaneseq
    %v1001 = vshrl.u32 %v1000, 7
    %v1002 = vsub.s32 0, %v1001
    %v1003 = vrot.slane %v504, %v1002
    %v1004 = vlaneseq
    %v1005 = vshrl.u32 %v1004, 7
    %v1006 = vsub.s32 0, %v1005
    %v1007 = vrot.slane %v536, %v1006
    %v1008 = vlaneseq
    %v1009 = vshrl.u32 %v1008, 7
    %v1010 = vsub.s32 0, %v1009
    %v1011 = vrot.slane %v568, %v1010
    %v1012 = vlaneseq
    %v1013 = vshrl.u32 %v1012, 7
    %v1014 = vsub.s32 0, %v1013
    %v1015 = vrot.slane %v600, %v1014
    %v1016 = vlaneseq
    %v1017 = vshrl.u32 %v1016, 7
    %v1018 = vsub.s32 0, %v1017
    %v1019 = vrot.slane %v632, %v1018
    %v1020 = vlaneseq
    %v1021 = vshrl.u32 %v1020, 7
    %v1022 = vsub.s32 0, %v1021
    %v1023 = vrot.slane %v664, %v1022
    %v1024 = vlaneseq
    %v1025 = vshrl.u32 %v1024, 7
    %v1026 = vsub.s32 0, %v1025
    %v1027 = vrot.slane %v696, %v1026
    %v1028 = vlaneseq
    %v1029 = vshrl.u32 %v1028, 7
    %v1030 = vsub.s32 0, %v1029
    %v1031 = vrot.slane %v728, %v1030
    %v1032 = vlaneseq
    %v1033 = vshrl.u32 %v1032, 7
    %v1034 = vsub.s32 0, %v1033
    %v1035 = vrot.slane %v760, %v1034
    %v1036 = vlaneseq
    %v1037 = vshrl.u32 %v1036, 7
    %v1038 = vsub.s32 0, %v1037
    %v1039 = vrot.slane %v792, %v1038
    %v1040 = vlaneseq
    %v1041 = vshrl.u32 %v1040, 7
    %v1042 = vsub.s32 0, %v1041
    %v1043 = vrot.slane %v824, %v1042
    %v1044 = vlaneseq
    %v1045 = vshrl.u32 %v1044, 7
    %v1046 = vsub.s32 0, %v1045
    %v1047 = vrot.slane %v856, %v1046
    %v1048 = vlaneseq
    %v1049 = vshrl.u32 %v1048, 7
    %v1050 = vsub.s32 0, %v1049
    %v1051 = vrot.slane %v888, %v1050
    %v1052 = vlaneseq
    %v1053 = vshrl.u32 %v1052, 7
    %v1054 = vsub.s32 0, %v1053
    %v1055 = vrot.slane %v920, %v1054
    %v1056 = vlaneseq
    %v1057 = vshrl.u32 %v1056, 7
    %v1058 = vsub.s32 0, %v1057
    %v1059 = vrot.slane %v952, %v1058
    %v1060 = vlaneseq
    %v1061 = vshrl.u32 %v1060, 7
    %v1062 = vsub.s32 0, %v1061
    %v1063 = vrot.slane %v984, %v1062
    %v1064 = vmul.f32 %v270, %v1003
    %v1065 = vmul.f32 %v277, %v1003
    %v1066 = vmul.f32 %v284, %v1007
    %v1067 = vmul.f32 %v291, %v1007
    %v1068 = vmul.f32 %v298, %v1011
    %v1069 = vmul.f32 %v305, %v1011
    %v1070 = vmul.f32 %v312, %v1015
    %v1071 = vmul.f32 %v319, %v1015
    %v1072 = vmul.f32 %v326, %v1019
    %v1073 = vmul.f32 %v333, %v1019
    %v1074 = vmul.f32 %v340, %v1023
    %v1075 = vmul.f32 %v347, %v1023
    %v1076 = vmul.f32 %v354, %v1027
    %v1077 = vmul.f32 %v361, %v1027
    %v1078 = vmul.f32 %v368, %v1031
    %v1079 = vmul.f32 %v375, %v1031
    %v1080 = vmul.f32 %v382, %v1035
    %v1081 = vmul.f32 %v389, %v1035
    %v1082 = vmul.f32 %v396, %v1039
    %v1083 = vmul.f32 %v403, %v1039
    %v1084 = vmul.f32 %v410, %v1043
    %v1085 = vmul.f32 %v417, %v1043
    %v1086 = vmul.f32 %v424, %v1047
    %v1087 = vmul.f32 %v431, %v1047
    %v1088 = vmul.f32 %v438, %v1051
    %v1089 = vmul.f32 %v445, %v1051
    %v1090 = vmul.f32 %v452, %v1055
    %v1091 = vmul.f32 %v459, %v1055
    %v1092 = vmul.f32 %v466, %v1059
    %v1093 = vmul.f32 %v473, %v1059
    %v1094 = vmul.f32 %v480, %v1063
    %v1095 = vmul.f32 %v487, %v1063
    %v1096 = vadd.f32 %v1064, 1e-06
    %v1097 = vadd.f32 %v1065, 1e-06
    %v1098 = vadd.f32 %v1066, 1e-06
    %v1099 = vadd.f32 %v1067, 1e-06
    %v1100 = vadd.f32 %v1068, 1e-06
    %v1101 = vadd.f32 %v1069, 1e-06
    %v1102 = vadd.f32 %v1070, 1e-06
    %v1103 = vadd.f32 %v1071, 1e-06
    %v1104 = vadd.f32 %v1072, 1e-06
    %v1105 = vadd.f32 %v1073, 1e-06
    %v1106 = vadd.f32 %v1074, 1e-06
    %v1107 = vadd.f32 %v1075, 1e-06
    %v1108 = vadd.f32 %v1076, 1e-06
    %v1109 = vadd.f32 %v1077, 1e-06
    %v1110 = vadd.f32 %v1078, 1e-06
    %v1111 = vadd.f32 %v1079, 1e-06
    %v1112 = vadd.f32 %v1080, 1e-06
    %v1113 = vadd.f32 %v1081, 1e-06
    %v1114 = vadd.f32 %v1082, 1e-06
    %v1115 = vadd.f32 %v1083, 1e-06
    %v1116 = vadd.f32 %v1084, 1e-06
    %v1117 = vadd.f32 %v1085, 1e-06
    %v1118 = vadd.f32 %v1086, 1e-06
    %v1119 = vadd.f32 %v1087, 1e-06
    %v1120 = vadd.f32 %v1088, 1e-06
    %v1121 = vadd.f32 %v1089, 1e-06
    %v1122 = vadd.f32 %v1090, 1e-06
    %v1123 = vadd.f32 %v1091, 1e-06
    %v1124 = vadd.f32 %v1092, 1e-06
    %v1125 = vadd.f32 %v1093, 1e-06
    %v1126 = vadd.f32 %v1094, 1e-06
    %v1127 = vadd.f32 %v1095, 1e-06
    %v1128 = vrcp.pop %v1096
    %v1129 = vmul.f32 %v61, %v1128
    %v1130 = vrcp.pop %v1097
    %v1131 = vmul.f32 %v62, %v1130
    %v1132 = vrcp.pop %v1098
    %v1133 = vmul.f32 %v63, %v1132
    %v1134 = vrcp.pop %v1099
    %v1135 = vmul.f32 %v64, %v1134
    %v1136 = vrcp.pop %v1100
    %v1137 = vmul.f32 %v65, %v1136
    %v1138 = vrcp.pop %v1101
    %v1139 = vmul.f32 %v66, %v1138
    %v1140 = vrcp.pop %v1102
    %v1141 = vmul.f32 %v67, %v1140
    %v1142 = vrcp.pop %v1103
    %v1143 = vmul.f32 %v68, %v1142
    %v1144 = vrcp.pop %v1104
    %v1145 = vmul.f32 %v69, %v1144
    %v1146 = vrcp.pop %v1105
    %v1147 = vmul.f32 %v70, %v1146
    %v1148 = vrcp.pop %v1106
    %v1149 = vmul.f32 %v71, %v1148
    %v1150 = vrcp.pop %v1107
    %v1151 = vmul.f32 %v72, %v1150
    %v1152 = vrcp.pop %v1108
    %v1153 = vmul.f32 %v73, %v1152
    %v1154 = vrcp.pop %v1109
    %v1155 = vmul.f32 %v74, %v1154
    %v1156 = vrcp.pop %v1110
    %v1157 = vmul.f32 %v75, %v1156
    %v1158 = vrcp.pop %v1111
    %v1159 = vmul.f32 %v76, %v1158
    %v1160 = vrcp.pop %v1112
    %v1161 = vmul.f32 %v77, %v1160
    %v1162 = vrcp.pop %v1113
    %v1163 = vmul.f32 %v78, %v1162
    %v1164 = vrcp.pop %v1114
    %v1165 = vmul.f32 %v79, %v1164
    %v1166 = vrcp.pop %v1115
    %v1167 = vmul.f32 %v80, %v1166
    %v1168 = vrcp.pop %v1116
    %v1169 = vmul.f32 %v81, %v1168
    %v1170 = vrcp.pop %v1117
    %v1171 = vmul.f32 %v82, %v1170
    %v1172 = vrcp.pop %v1118
    %v1173 = vmul.f32 %v83, %v1172
    %v1174 = vrcp.pop %v1119
    %v1175 = vmul.f32 %v84, %v1174
    %v1176 = vrcp.pop %v1120
    %v1177 = vmul.f32 %v85, %v1176
    %v1178 = vrcp.pop %v1121
    %v1179 = vmul.f32 %v86, %v1178
    %v1180 = vrcp.pop %v1122
    %v1181 = vmul.f32 %v87, %v1180
    %v1182 = vrcp.pop %v1123
    %v1183 = vmul.f32 %v88, %v1182
    %v1184 = vrcp.pop %v1124
    %v1185 = vmul.f32 %v89, %v1184
    %v1186 = vrcp.pop %v1125
    %v1187 = vmul.f32 %v90, %v1186
    %v1188 = vrcp.pop %v1126
    %v1189 = vmul.f32 %v91, %v1188
    %v1190 = vrcp.pop %v1127
    %v1191 = vmul.f32 %v92, %v1190
    %v1193 = vsel %vm167, %v1129, 0
    %v1196 = vsel %vm167, %v1131, 0
    %v1199 = vsel %vm167, %v1133, 0
    %v1202 = vsel %vm167, %v1135, 0
    %v1205 = vsel %vm167, %v1137, 0
    %v1208 = vsel %vm167, %v1139, 0
    %v1211 = vsel %vm167, %v1141, 0
    %v1214 = vsel %vm167, %v1143, 0
    %v1217 = vsel %vm167, %v1145, 0
    %v1220 = vsel %vm167, %v1147, 0
    %v1223 = vsel %vm167, %v1149, 0
    %v1226 = vsel %vm167, %v1151, 0
    %v1229 = vsel %vm167, %v1153, 0
    %v1232 = vsel %vm167, %v1155, 0
    %v1235 = vsel %vm167, %v1157, 0
    %v1238 = vsel %vm167, %v1159, 0
    %v1241 = vsel %vm167, %v1161, 0
    %v1244 = vsel %vm167, %v1163, 0
    %v1247 = vsel %vm167, %v1165, 0
    %v1250 = vsel %vm167, %v1167, 0
    %v1253 = vsel %vm167, %v1169, 0
    %v1256 = vsel %vm167, %v1171, 0
    %v1259 = vsel %vm167, %v1173, 0
    %v1262 = vsel %vm167, %v1175, 0
    %v1265 = vsel %vm167, %v1177, 0
    %v1268 = vsel %vm167, %v1179, 0
    %v1271 = vsel %vm167, %v1181, 0
    %v1274 = vsel %vm167, %v1183, 0
    %v1277 = vsel %vm167, %v1185, 0
    %v1280 = vsel %vm167, %v1187, 0
    %v1283 = vsel %vm167, %v1189, 0
    %v1286 = vsel %vm167, %v1191, 0
    %1288 = vmatprep.subr.mxu0 0.0
    %1289 = vmatpush1.msra.mxu0 %v93
    %1290 = vmatprep.subr.mxu0 0.0
    %1291 = vmatpush1.msra.mxu0 %v94
    %1292 = vmatprep.subr.mxu0 0.0
    %1293 = vmatpush1.msra.mxu0 0.0
    %1294 = vmatprep.subr.mxu0 0.0
    %1295 = vmatpush1.msra.mxu0 0.0
    %1296 = vmatprep.subr.mxu0 0.0
    %1297 = vmatpush1.msra.mxu0 0.0
    %1298 = vmatprep.subr.mxu0 0.0
    %1299 = vmatpush1.msra.mxu0 0.0
    %1300 = vmatprep.subr.mxu0 0.0
    %1301 = vmatpush1.msra.mxu0 0.0
    %1302 = vmatprep.subr.mxu0 0.0
    %1303 = vmatpush1.msra.mxu0 0.0
    %1304 = vmatprep.subr.mxu0 0.0
    %1305 = vmatpush1.msra.mxu0 0.0
    %1306 = vmatprep.subr.mxu0 0.0
    %1307 = vmatpush1.msra.mxu0 0.0
    %1308 = vmatprep.subr.mxu0 0.0
    %1309 = vmatpush1.msra.mxu0 0.0
    %1310 = vmatprep.subr.mxu0 0.0
    %1311 = vmatpush1.msra.mxu0 0.0
    %1312 = vmatprep.subr.mxu0 0.0
    %1313 = vmatpush1.msra.mxu0 0.0
    %1314 = vmatprep.subr.mxu0 0.0
    %1315 = vmatpush1.msra.mxu0 0.0
    %1316 = vmatprep.subr.mxu0 0.0
    %1317 = vmatpush1.msra.mxu0 0.0
    %1318 = vmatprep.subr.mxu0 0.0
    %1319 = vmatpush1.msra.mxu0 0.0
    %1320 = vmatprep.subr.mxu0 0.0
    %1321 = vmatpush1.msra.mxu0 0.0
    %1322 = vmatprep.subr.mxu0 0.0
    %1323 = vmatpush1.msra.mxu0 0.0
    %1324 = vmatprep.subr.mxu0 0.0
    %1325 = vmatpush1.msra.mxu0 0.0
    %1326 = vmatprep.subr.mxu0 0.0
    %1327 = vmatpush1.msra.mxu0 0.0
    %1328 = vmatprep.subr.mxu0 0.0
    %1329 = vmatpush1.msra.mxu0 0.0
    %1330 = vmatprep.subr.mxu0 0.0
    %1331 = vmatpush1.msra.mxu0 0.0
    %1332 = vmatprep.subr.mxu0 0.0
    %1333 = vmatpush1.msra.mxu0 0.0
    %1334 = vmatprep.subr.mxu0 0.0
    %1335 = vmatpush1.msra.mxu0 0.0
    %1336 = vmatprep.subr.mxu0 0.0
    %1337 = vmatpush1.msra.mxu0 0.0
    %1338 = vmatprep.subr.mxu0 0.0
    %1339 = vmatpush1.msra.mxu0 0.0
    %1340 = vmatprep.subr.mxu0 0.0
    %1341 = vmatpush1.msra.mxu0 0.0
    %1342 = vmatprep.subr.mxu0 0.0
    %1343 = vmatpush1.msra.mxu0 0.0
    %1344 = vmatprep.subr.mxu0 0.0
    %1345 = vmatpush1.msra.mxu0 0.0
    %1346 = vmatprep.subr.mxu0 0.0
    %1347 = vmatpush1.msra.mxu0 0.0
    %1348 = vmatprep.subr.mxu0 0.0
    %1349 = vmatpush1.msra.mxu0 0.0
    %1350 = vmatprep.subr.mxu0 0.0
    %1351 = vmatpush1.msra.mxu0 0.0
    %1352 = vmatprep.mubr.f32.mxu0 0.0
    %1353 = vmatmul.mubr.f32.gmra.mrb[0].mxu0 %v1193
    %v1354 = vpop.f32.mrb[0].mxu0
    %v1355 = vadd.f32 0.0, %v1354
    %v1356 = vpop.f32.mrb[0].mxu0
    %1357 = vmatprep.mubr.f32.mxu0 0.0
    %1358 = vmatmul.mubr.f32.gmra.mrb[0].mxu0 %v1196
    %v1359 = vpop.f32.mrb[0].mxu0
    %v1360 = vadd.f32 0.0, %v1359
    %v1361 = vpop.f32.mrb[0].mxu0
    %1362 = vmatprep.mubr.f32.mxu0 0.0
    %1363 = vmatmul.mubr.f32.gmra.mrb[0].mxu0 %v1199
    %v1364 = vpop.f32.mrb[0].mxu0
    %v1365 = vadd.f32 0.0, %v1364
    %v1366 = vpop.f32.mrb[0].mxu0
    %1367 = vmatprep.mubr.f32.mxu0 0.0
    %1368 = vmatmul.mubr.f32.gmra.mrb[0].mxu0 %v1202
    %v1369 = vpop.f32.mrb[0].mxu0
    %v1370 = vadd.f32 0.0, %v1369
    %v1371 = vpop.f32.mrb[0].mxu0
    %1372 = vmatprep.mubr.f32.mxu0 0.0
    %1373 = vmatmul.mubr.f32.gmra.mrb[0].mxu0 %v1205
    %v1374 = vpop.f32.mrb[0].mxu0
    %v1375 = vadd.f32 0.0, %v1374
    %v1376 = vpop.f32.mrb[0].mxu0
    %1377 = vmatprep.mubr.f32.mxu0 0.0
    %1378 = vmatmul.mubr.f32.gmra.mrb[0].mxu0 %v1208
    %v1379 = vpop.f32.mrb[0].mxu0
    %v1380 = vadd.f32 0.0, %v1379
    %v1381 = vpop.f32.mrb[0].mxu0
    %1382 = vmatprep.mubr.f32.mxu0 0.0
    %1383 = vmatmul.mubr.f32.gmra.mrb[0].mxu0 %v1211
    %v1384 = vpop.f32.mrb[0].mxu0
    %v1385 = vadd.f32 0.0, %v1384
    %v1386 = vpop.f32.mrb[0].mxu0
    %1387 = vmatprep.mubr.f32.mxu0 0.0
    %1388 = vmatmul.mubr.f32.gmra.mrb[0].mxu0 %v1214
    %v1389 = vpop.f32.mrb[0].mxu0
    %v1390 = vadd.f32 0.0, %v1389
    %v1391 = vpop.f32.mrb[0].mxu0
    %1392 = vmatprep.mubr.f32.mxu0 0.0
    %1393 = vmatmul.mubr.f32.gmra.mrb[0].mxu0 %v1217
    %v1394 = vpop.f32.mrb[0].mxu0
    %v1395 = vadd.f32 0.0, %v1394
    %v1396 = vpop.f32.mrb[0].mxu0
    %1397 = vmatprep.mubr.f32.mxu0 0.0
    %1398 = vmatmul.mubr.f32.gmra.mrb[0].mxu0 %v1220
    %v1399 = vpop.f32.mrb[0].mxu0
    %v1400 = vadd.f32 0.0, %v1399
    %v1401 = vpop.f32.mrb[0].mxu0
    %1402 = vmatprep.mubr.f32.mxu0 0.0
    %1403 = vmatmul.mubr.f32.gmra.mrb[0].mxu0 %v1223
    %v1404 = vpop.f32.mrb[0].mxu0
    %v1405 = vadd.f32 0.0, %v1404
    %v1406 = vpop.f32.mrb[0].mxu0
    %1407 = vmatprep.mubr.f32.mxu0 0.0
    %1408 = vmatmul.mubr.f32.gmra.mrb[0].mxu0 %v1226
    %v1409 = vpop.f32.mrb[0].mxu0
    %v1410 = vadd.f32 0.0, %v1409
    %v1411 = vpop.f32.mrb[0].mxu0
    %1412 = vmatprep.mubr.f32.mxu0 0.0
    %1413 = vmatmul.mubr.f32.gmra.mrb[0].mxu0 %v1229
    %v1414 = vpop.f32.mrb[0].mxu0
    %v1415 = vadd.f32 0.0, %v1414
    %v1416 = vpop.f32.mrb[0].mxu0
    %1417 = vmatprep.mubr.f32.mxu0 0.0
    %1418 = vmatmul.mubr.f32.gmra.mrb[0].mxu0 %v1232
    %v1419 = vpop.f32.mrb[0].mxu0
    %v1420 = vadd.f32 0.0, %v1419
    %v1421 = vpop.f32.mrb[0].mxu0
    %1422 = vmatprep.mubr.f32.mxu0 0.0
    %1423 = vmatmul.mubr.f32.gmra.mrb[0].mxu0 %v1235
    %v1424 = vpop.f32.mrb[0].mxu0
    %v1425 = vadd.f32 0.0, %v1424
    %v1426 = vpop.f32.mrb[0].mxu0
    %1427 = vmatprep.mubr.f32.mxu0 0.0
    %1428 = vmatmul.mubr.f32.gmra.mrb[0].mxu0 %v1238
    %v1429 = vpop.f32.mrb[0].mxu0
    %v1430 = vadd.f32 0.0, %v1429
    %v1431 = vpop.f32.mrb[0].mxu0
    %1432 = vmatprep.mubr.f32.mxu0 0.0
    %1433 = vmatmul.mubr.f32.gmra.mrb[0].mxu0 %v1241
    %v1434 = vpop.f32.mrb[0].mxu0
    %v1435 = vadd.f32 0.0, %v1434
    %v1436 = vpop.f32.mrb[0].mxu0
    %1437 = vmatprep.mubr.f32.mxu0 0.0
    %1438 = vmatmul.mubr.f32.gmra.mrb[0].mxu0 %v1244
    %v1439 = vpop.f32.mrb[0].mxu0
    %v1440 = vadd.f32 0.0, %v1439
    %v1441 = vpop.f32.mrb[0].mxu0
    %1442 = vmatprep.mubr.f32.mxu0 0.0
    %1443 = vmatmul.mubr.f32.gmra.mrb[0].mxu0 %v1247
    %v1444 = vpop.f32.mrb[0].mxu0
    %v1445 = vadd.f32 0.0, %v1444
    %v1446 = vpop.f32.mrb[0].mxu0
    %1447 = vmatprep.mubr.f32.mxu0 0.0
    %1448 = vmatmul.mubr.f32.gmra.mrb[0].mxu0 %v1250
    %v1449 = vpop.f32.mrb[0].mxu0
    %v1450 = vadd.f32 0.0, %v1449
    %v1451 = vpop.f32.mrb[0].mxu0
    %1452 = vmatprep.mubr.f32.mxu0 0.0
    %1453 = vmatmul.mubr.f32.gmra.mrb[0].mxu0 %v1253
    %v1454 = vpop.f32.mrb[0].mxu0
    %v1455 = vadd.f32 0.0, %v1454
    %v1456 = vpop.f32.mrb[0].mxu0
    %1457 = vmatprep.mubr.f32.mxu0 0.0
    %1458 = vmatmul.mubr.f32.gmra.mrb[0].mxu0 %v1256
    %v1459 = vpop.f32.mrb[0].mxu0
    %v1460 = vadd.f32 0.0, %v1459
    %v1461 = vpop.f32.mrb[0].mxu0
    %1462 = vmatprep.mubr.f32.mxu0 0.0
    %1463 = vmatmul.mubr.f32.gmra.mrb[0].mxu0 %v1259
    %v1464 = vpop.f32.mrb[0].mxu0
    %v1465 = vadd.f32 0.0, %v1464
    %v1466 = vpop.f32.mrb[0].mxu0
    %1467 = vmatprep.mubr.f32.mxu0 0.0
    %1468 = vmatmul.mubr.f32.gmra.mrb[0].mxu0 %v1262
    %v1469 = vpop.f32.mrb[0].mxu0
    %v1470 = vadd.f32 0.0, %v1469
    %v1471 = vpop.f32.mrb[0].mxu0
    %1472 = vmatprep.mubr.f32.mxu0 0.0
    %1473 = vmatmul.mubr.f32.gmra.mrb[0].mxu0 %v1265
    %v1474 = vpop.f32.mrb[0].mxu0
    %v1475 = vadd.f32 0.0, %v1474
    %v1476 = vpop.f32.mrb[0].mxu0
    %1477 = vmatprep.mubr.f32.mxu0 0.0
    %1478 = vmatmul.mubr.f32.gmra.mrb[0].mxu0 %v1268
    %v1479 = vpop.f32.mrb[0].mxu0
    %v1480 = vadd.f32 0.0, %v1479
    %v1481 = vpop.f32.mrb[0].mxu0
    %1482 = vmatprep.mubr.f32.mxu0 0.0
    %1483 = vmatmul.mubr.f32.gmra.mrb[0].mxu0 %v1271
    %v1484 = vpop.f32.mrb[0].mxu0
    %v1485 = vadd.f32 0.0, %v1484
    %v1486 = vpop.f32.mrb[0].mxu0
    %1487 = vmatprep.mubr.f32.mxu0 0.0
    %1488 = vmatmul.mubr.f32.gmra.mrb[0].mxu0 %v1274
    %v1489 = vpop.f32.mrb[0].mxu0
    %v1490 = vadd.f32 0.0, %v1489
    %v1491 = vpop.f32.mrb[0].mxu0
    %1492 = vmatprep.mubr.f32.mxu0 0.0
    %1493 = vmatmul.mubr.f32.gmra.mrb[0].mxu0 %v1277
    %v1494 = vpop.f32.mrb[0].mxu0
    %v1495 = vadd.f32 0.0, %v1494
    %v1496 = vpop.f32.mrb[0].mxu0
    %1497 = vmatprep.mubr.f32.mxu0 0.0
    %1498 = vmatmul.mubr.f32.gmra.mrb[0].mxu0 %v1280
    %v1499 = vpop.f32.mrb[0].mxu0
    %v1500 = vadd.f32 0.0, %v1499
    %v1501 = vpop.f32.mrb[0].mxu0
    %1502 = vmatprep.mubr.f32.mxu0 0.0
    %1503 = vmatmul.mubr.f32.gmra.mrb[0].mxu0 %v1283
    %v1504 = vpop.f32.mrb[0].mxu0
    %v1505 = vadd.f32 0.0, %v1504
    %v1506 = vpop.f32.mrb[0].mxu0
    %1507 = vmatprep.mubr.f32.mxu0 0.0
    %1508 = vmatmul.mubr.f32.gmra.mrb[0].mxu0 %v1286
    %v1509 = vpop.f32.mrb[0].mxu0
    %v1510 = vadd.f32 0.0, %v1509
    %v1511 = vpop.f32.mrb[0].mxu0
    %1512 = vdwg.mxu0
    %v1513 = vmax.f32 %v1355, 0.0
    %v1514 = vmax.f32 %v1360, 0.0
    %v1515 = vmax.f32 %v1365, 0.0
    %v1516 = vmax.f32 %v1370, 0.0
    %v1517 = vmax.f32 %v1375, 0.0
    %v1518 = vmax.f32 %v1380, 0.0
    %v1519 = vmax.f32 %v1385, 0.0
    %v1520 = vmax.f32 %v1390, 0.0
    %v1521 = vmax.f32 %v1395, 0.0
    %v1522 = vmax.f32 %v1400, 0.0
    %v1523 = vmax.f32 %v1405, 0.0
    %v1524 = vmax.f32 %v1410, 0.0
    %v1525 = vmax.f32 %v1415, 0.0
    %v1526 = vmax.f32 %v1420, 0.0
    %v1527 = vmax.f32 %v1425, 0.0
    %v1528 = vmax.f32 %v1430, 0.0
    %v1529 = vmax.f32 %v1435, 0.0
    %v1530 = vmax.f32 %v1440, 0.0
    %v1531 = vmax.f32 %v1445, 0.0
    %v1532 = vmax.f32 %v1450, 0.0
    %v1533 = vmax.f32 %v1455, 0.0
    %v1534 = vmax.f32 %v1460, 0.0
    %v1535 = vmax.f32 %v1465, 0.0
    %v1536 = vmax.f32 %v1470, 0.0
    %v1537 = vmax.f32 %v1475, 0.0
    %v1538 = vmax.f32 %v1480, 0.0
    %v1539 = vmax.f32 %v1485, 0.0
    %v1540 = vmax.f32 %v1490, 0.0
    %v1541 = vmax.f32 %v1495, 0.0
    %v1542 = vmax.f32 %v1500, 0.0
    %v1543 = vmax.f32 %v1505, 0.0
    %v1544 = vmax.f32 %v1510, 0.0
    %1545 = vrot.lane.b32.xlu0 %v1129, 16
    %v1546 = vpop.permute.xlu0 %1545
    %1547 = vrot.lane.b32.xlu0 %v1131, 16
    %v1548 = vpop.permute.xlu0 %1547
    %1549 = vrot.lane.b32.xlu0 %v1133, 16
    %v1550 = vpop.permute.xlu0 %1549
    %1551 = vrot.lane.b32.xlu0 %v1135, 16
    %v1552 = vpop.permute.xlu0 %1551
    %1553 = vrot.lane.b32.xlu0 %v1137, 16
    %v1554 = vpop.permute.xlu0 %1553
    %1555 = vrot.lane.b32.xlu0 %v1139, 16
    %v1556 = vpop.permute.xlu0 %1555
    %1557 = vrot.lane.b32.xlu0 %v1141, 16
    %v1558 = vpop.permute.xlu0 %1557
    %1559 = vrot.lane.b32.xlu0 %v1143, 16
    %v1560 = vpop.permute.xlu0 %1559
    %1561 = vrot.lane.b32.xlu0 %v1145, 16
    %v1562 = vpop.permute.xlu0 %1561
    %1563 = vrot.lane.b32.xlu0 %v1147, 16
    %v1564 = vpop.permute.xlu0 %1563
    %1565 = vrot.lane.b32.xlu0 %v1149, 16
    %v1566 = vpop.permute.xlu0 %1565
    %1567 = vrot.lane.b32.xlu0 %v1151, 16
    %v1568 = vpop.permute.xlu0 %1567
    %1569 = vrot.lane.b32.xlu0 %v1153, 16
    %v1570 = vpop.permute.xlu0 %1569
    %1571 = vrot.lane.b32.xlu0 %v1155, 16
    %v1572 = vpop.permute.xlu0 %1571
    %1573 = vrot.lane.b32.xlu0 %v1157, 16
    %v1574 = vpop.permute.xlu0 %1573
    %1575 = vrot.lane.b32.xlu0 %v1159, 16
    %v1576 = vpop.permute.xlu0 %1575
    %1577 = vrot.lane.b32.xlu0 %v1161, 16
    %v1578 = vpop.permute.xlu0 %1577
    %1579 = vrot.lane.b32.xlu0 %v1163, 16
    %v1580 = vpop.permute.xlu0 %1579
    %1581 = vrot.lane.b32.xlu0 %v1165, 16
    %v1582 = vpop.permute.xlu0 %1581
    %1583 = vrot.lane.b32.xlu0 %v1167, 16
    %v1584 = vpop.permute.xlu0 %1583
    %1585 = vrot.lane.b32.xlu0 %v1169, 16
    %v1586 = vpop.permute.xlu0 %1585
    %1587 = vrot.lane.b32.xlu0 %v1171, 16
    %v1588 = vpop.permute.xlu0 %1587
    %1589 = vrot.lane.b32.xlu0 %v1173, 16
    %v1590 = vpop.permute.xlu0 %1589
    %1591 = vrot.lane.b32.xlu0 %v1175, 16
    %v1592 = vpop.permute.xlu0 %1591
    %1593 = vrot.lane.b32.xlu0 %v1177, 16
    %v1594 = vpop.permute.xlu0 %1593
    %1595 = vrot.lane.b32.xlu0 %v1179, 16
    %v1596 = vpop.permute.xlu0 %1595
    %1597 = vrot.lane.b32.xlu0 %v1181, 16
    %v1598 = vpop.permute.xlu0 %1597
    %1599 = vrot.lane.b32.xlu0 %v1183, 16
    %v1600 = vpop.permute.xlu0 %1599
    %1601 = vrot.lane.b32.xlu0 %v1185, 16
    %v1602 = vpop.permute.xlu0 %1601
    %1603 = vrot.lane.b32.xlu0 %v1187, 16
    %v1604 = vpop.permute.xlu0 %1603
    %1605 = vrot.lane.b32.xlu0 %v1189, 16
    %v1606 = vpop.permute.xlu0 %1605
    %1607 = vrot.lane.b32.xlu0 %v1191, 16
    %v1608 = vpop.permute.xlu0 %1607
    %1641 = vrot.lane.b32.xlu0 %v1129, 32
    %v1642 = vpop.permute.xlu0 %1641
    %1643 = vrot.lane.b32.xlu0 %v1131, 32
    %v1644 = vpop.permute.xlu0 %1643
    %1645 = vrot.lane.b32.xlu0 %v1133, 32
    %v1646 = vpop.permute.xlu0 %1645
    %1647 = vrot.lane.b32.xlu0 %v1135, 32
    %v1648 = vpop.permute.xlu0 %1647
    %1649 = vrot.lane.b32.xlu0 %v1137, 32
    %v1650 = vpop.permute.xlu0 %1649
    %1651 = vrot.lane.b32.xlu0 %v1139, 32
    %v1652 = vpop.permute.xlu0 %1651
    %1653 = vrot.lane.b32.xlu0 %v1141, 32
    %v1654 = vpop.permute.xlu0 %1653
    %1655 = vrot.lane.b32.xlu0 %v1143, 32
    %v1656 = vpop.permute.xlu0 %1655
    %1657 = vrot.lane.b32.xlu0 %v1145, 32
    %v1658 = vpop.permute.xlu0 %1657
    %1659 = vrot.lane.b32.xlu0 %v1147, 32
    %v1660 = vpop.permute.xlu0 %1659
    %1661 = vrot.lane.b32.xlu0 %v1149, 32
    %v1662 = vpop.permute.xlu0 %1661
    %1663 = vrot.lane.b32.xlu0 %v1151, 32
    %v1664 = vpop.permute.xlu0 %1663
    %1665 = vrot.lane.b32.xlu0 %v1153, 32
    %v1666 = vpop.permute.xlu0 %1665
    %1667 = vrot.lane.b32.xlu0 %v1155, 32
    %v1668 = vpop.permute.xlu0 %1667
    %1669 = vrot.lane.b32.xlu0 %v1157, 32
    %v1670 = vpop.permute.xlu0 %1669
    %1671 = vrot.lane.b32.xlu0 %v1159, 32
    %v1672 = vpop.permute.xlu0 %1671
    %1673 = vrot.lane.b32.xlu0 %v1161, 32
    %v1674 = vpop.permute.xlu0 %1673
    %1675 = vrot.lane.b32.xlu0 %v1163, 32
    %v1676 = vpop.permute.xlu0 %1675
    %1677 = vrot.lane.b32.xlu0 %v1165, 32
    %v1678 = vpop.permute.xlu0 %1677
    %1679 = vrot.lane.b32.xlu0 %v1167, 32
    %v1680 = vpop.permute.xlu0 %1679
    %1681 = vrot.lane.b32.xlu0 %v1169, 32
    %v1682 = vpop.permute.xlu0 %1681
    %1683 = vrot.lane.b32.xlu0 %v1171, 32
    %v1684 = vpop.permute.xlu0 %1683
    %1685 = vrot.lane.b32.xlu0 %v1173, 32
    %v1686 = vpop.permute.xlu0 %1685
    %1687 = vrot.lane.b32.xlu0 %v1175, 32
    %v1688 = vpop.permute.xlu0 %1687
    %1689 = vrot.lane.b32.xlu0 %v1177, 32
    %v1690 = vpop.permute.xlu0 %1689
    %1691 = vrot.lane.b32.xlu0 %v1179, 32
    %v1692 = vpop.permute.xlu0 %1691
    %1693 = vrot.lane.b32.xlu0 %v1181, 32
    %v1694 = vpop.permute.xlu0 %1693
    %1695 = vrot.lane.b32.xlu0 %v1183, 32
    %v1696 = vpop.permute.xlu0 %1695
    %1697 = vrot.lane.b32.xlu0 %v1185, 32
    %v1698 = vpop.permute.xlu0 %1697
    %1699 = vrot.lane.b32.xlu0 %v1187, 32
    %v1700 = vpop.permute.xlu0 %1699
    %1701 = vrot.lane.b32.xlu0 %v1189, 32
    %v1702 = vpop.permute.xlu0 %1701
    %1703 = vrot.lane.b32.xlu0 %v1191, 32
    %v1704 = vpop.permute.xlu0 %1703
    %1737 = vrot.lane.b32.xlu0 %v1129, 48
    %v1738 = vpop.permute.xlu0 %1737
    %1739 = vrot.lane.b32.xlu0 %v1131, 48
    %v1740 = vpop.permute.xlu0 %1739
    %1741 = vrot.lane.b32.xlu0 %v1133, 48
    %v1742 = vpop.permute.xlu0 %1741
    %1743 = vrot.lane.b32.xlu0 %v1135, 48
    %v1744 = vpop.permute.xlu0 %1743
    %1745 = vrot.lane.b32.xlu0 %v1137, 48
    %v1746 = vpop.permute.xlu0 %1745
    %1747 = vrot.lane.b32.xlu0 %v1139, 48
    %v1748 = vpop.permute.xlu0 %1747
    %1749 = vrot.lane.b32.xlu0 %v1141, 48
    %v1750 = vpop.permute.xlu0 %1749
    %1751 = vrot.lane.b32.xlu0 %v1143, 48
    %v1752 = vpop.permute.xlu0 %1751
    %1753 = vrot.lane.b32.xlu0 %v1145, 48
    %v1754 = vpop.permute.xlu0 %1753
    %1755 = vrot.lane.b32.xlu0 %v1147, 48
    %v1756 = vpop.permute.xlu0 %1755
    %1757 = vrot.lane.b32.xlu0 %v1149, 48
    %v1758 = vpop.permute.xlu0 %1757
    %1759 = vrot.lane.b32.xlu0 %v1151, 48
    %v1760 = vpop.permute.xlu0 %1759
    %1761 = vrot.lane.b32.xlu0 %v1153, 48
    %v1762 = vpop.permute.xlu0 %1761
    %1763 = vrot.lane.b32.xlu0 %v1155, 48
    %v1764 = vpop.permute.xlu0 %1763
    %1765 = vrot.lane.b32.xlu0 %v1157, 48
    %v1766 = vpop.permute.xlu0 %1765
    %1767 = vrot.lane.b32.xlu0 %v1159, 48
    %v1768 = vpop.permute.xlu0 %1767
    %1769 = vrot.lane.b32.xlu0 %v1161, 48
    %v1770 = vpop.permute.xlu0 %1769
    %1771 = vrot.lane.b32.xlu0 %v1163, 48
    %v1772 = vpop.permute.xlu0 %1771
    %1773 = vrot.lane.b32.xlu0 %v1165, 48
    %v1774 = vpop.permute.xlu0 %1773
    %1775 = vrot.lane.b32.xlu0 %v1167, 48
    %v1776 = vpop.permute.xlu0 %1775
    %1777 = vrot.lane.b32.xlu0 %v1169, 48
    %v1778 = vpop.permute.xlu0 %1777
    %1779 = vrot.lane.b32.xlu0 %v1171, 48
    %v1780 = vpop.permute.xlu0 %1779
    %1781 = vrot.lane.b32.xlu0 %v1173, 48
    %v1782 = vpop.permute.xlu0 %1781
    %1783 = vrot.lane.b32.xlu0 %v1175, 48
    %v1784 = vpop.permute.xlu0 %1783
    %1785 = vrot.lane.b32.xlu0 %v1177, 48
    %v1786 = vpop.permute.xlu0 %1785
    %1787 = vrot.lane.b32.xlu0 %v1179, 48
    %v1788 = vpop.permute.xlu0 %1787
    %1789 = vrot.lane.b32.xlu0 %v1181, 48
    %v1790 = vpop.permute.xlu0 %1789
    %1791 = vrot.lane.b32.xlu0 %v1183, 48
    %v1792 = vpop.permute.xlu0 %1791
    %1793 = vrot.lane.b32.xlu0 %v1185, 48
    %v1794 = vpop.permute.xlu0 %1793
    %1795 = vrot.lane.b32.xlu0 %v1187, 48
    %v1796 = vpop.permute.xlu0 %1795
    %1797 = vrot.lane.b32.xlu0 %v1189, 48
    %v1798 = vpop.permute.xlu0 %1797
    %1799 = vrot.lane.b32.xlu0 %v1191, 48
    %v1800 = vpop.permute.xlu0 %1799
    %1833 = vrot.lane.b32.xlu0 %v1129, 64
    %v1834 = vpop.permute.xlu0 %1833
    %1835 = vrot.lane.b32.xlu0 %v1131, 64
    %v1836 = vpop.permute.xlu0 %1835
    %1837 = vrot.lane.b32.xlu0 %v1133, 64
    %v1838 = vpop.permute.xlu0 %1837
    %1839 = vrot.lane.b32.xlu0 %v1135, 64
    %v1840 = vpop.permute.xlu0 %1839
    %1841 = vrot.lane.b32.xlu0 %v1137, 64
    %v1842 = vpop.permute.xlu0 %1841
    %1843 = vrot.lane.b32.xlu0 %v1139, 64
    %v1844 = vpop.permute.xlu0 %1843
    %1845 = vrot.lane.b32.xlu0 %v1141, 64
    %v1846 = vpop.permute.xlu0 %1845
    %1847 = vrot.lane.b32.xlu0 %v1143, 64
    %v1848 = vpop.permute.xlu0 %1847
    %1849 = vrot.lane.b32.xlu0 %v1145, 64
    %v1850 = vpop.permute.xlu0 %1849
    %1851 = vrot.lane.b32.xlu0 %v1147, 64
    %v1852 = vpop.permute.xlu0 %1851
    %1853 = vrot.lane.b32.xlu0 %v1149, 64
    %v1854 = vpop.permute.xlu0 %1853
    %1855 = vrot.lane.b32.xlu0 %v1151, 64
    %v1856 = vpop.permute.xlu0 %1855
    %1857 = vrot.lane.b32.xlu0 %v1153, 64
    %v1858 = vpop.permute.xlu0 %1857
    %1859 = vrot.lane.b32.xlu0 %v1155, 64
    %v1860 = vpop.permute.xlu0 %1859
    %1861 = vrot.lane.b32.xlu0 %v1157, 64
    %v1862 = vpop.permute.xlu0 %1861
    %1863 = vrot.lane.b32.xlu0 %v1159, 64
    %v1864 = vpop.permute.xlu0 %1863
    %1865 = vrot.lane.b32.xlu0 %v1161, 64
    %v1866 = vpop.permute.xlu0 %1865
    %1867 = vrot.lane.b32.xlu0 %v1163, 64
    %v1868 = vpop.permute.xlu0 %1867
    %1869 = vrot.lane.b32.xlu0 %v1165, 64
    %v1870 = vpop.permute.xlu0 %1869
    %1871 = vrot.lane.b32.xlu0 %v1167, 64
    %v1872 = vpop.permute.xlu0 %1871
    %1873 = vrot.lane.b32.xlu0 %v1169, 64
    %v1874 = vpop.permute.xlu0 %1873
    %1875 = vrot.lane.b32.xlu0 %v1171, 64
    %v1876 = vpop.permute.xlu0 %1875
    %1877 = vrot.lane.b32.xlu0 %v1173, 64
    %v1878 = vpop.permute.xlu0 %1877
    %1879 = vrot.lane.b32.xlu0 %v1175, 64
    %v1880 = vpop.permute.xlu0 %1879
    %1881 = vrot.lane.b32.xlu0 %v1177, 64
    %v1882 = vpop.permute.xlu0 %1881
    %1883 = vrot.lane.b32.xlu0 %v1179, 64
    %v1884 = vpop.permute.xlu0 %1883
    %1885 = vrot.lane.b32.xlu0 %v1181, 64
    %v1886 = vpop.permute.xlu0 %1885
    %1887 = vrot.lane.b32.xlu0 %v1183, 64
    %v1888 = vpop.permute.xlu0 %1887
    %1889 = vrot.lane.b32.xlu0 %v1185, 64
    %v1890 = vpop.permute.xlu0 %1889
    %1891 = vrot.lane.b32.xlu0 %v1187, 64
    %v1892 = vpop.permute.xlu0 %1891
    %1893 = vrot.lane.b32.xlu0 %v1189, 64
    %v1894 = vpop.permute.xlu0 %1893
    %1895 = vrot.lane.b32.xlu0 %v1191, 64
    %v1896 = vpop.permute.xlu0 %1895
    %1929 = vrot.lane.b32.xlu0 %v1129, 80
    %v1930 = vpop.permute.xlu0 %1929
    %1931 = vrot.lane.b32.xlu0 %v1131, 80
    %v1932 = vpop.permute.xlu0 %1931
    %1933 = vrot.lane.b32.xlu0 %v1133, 80
    %v1934 = vpop.permute.xlu0 %1933
    %1935 = vrot.lane.b32.xlu0 %v1135, 80
    %v1936 = vpop.permute.xlu0 %1935
    %1937 = vrot.lane.b32.xlu0 %v1137, 80
    %v1938 = vpop.permute.xlu0 %1937
    %1939 = vrot.lane.b32.xlu0 %v1139, 80
    %v1940 = vpop.permute.xlu0 %1939
    %1941 = vrot.lane.b32.xlu0 %v1141, 80
    %v1942 = vpop.permute.xlu0 %1941
    %1943 = vrot.lane.b32.xlu0 %v1143, 80
    %v1944 = vpop.permute.xlu0 %1943
    %1945 = vrot.lane.b32.xlu0 %v1145, 80
    %v1946 = vpop.permute.xlu0 %1945
    %1947 = vrot.lane.b32.xlu0 %v1147, 80
    %v1948 = vpop.permute.xlu0 %1947
    %1949 = vrot.lane.b32.xlu0 %v1149, 80
    %v1950 = vpop.permute.xlu0 %1949
    %1951 = vrot.lane.b32.xlu0 %v1151, 80
    %v1952 = vpop.permute.xlu0 %1951
    %1953 = vrot.lane.b32.xlu0 %v1153, 80
    %v1954 = vpop.permute.xlu0 %1953
    %1955 = vrot.lane.b32.xlu0 %v1155, 80
    %v1956 = vpop.permute.xlu0 %1955
    %1957 = vrot.lane.b32.xlu0 %v1157, 80
    %v1958 = vpop.permute.xlu0 %1957
    %1959 = vrot.lane.b32.xlu0 %v1159, 80
    %v1960 = vpop.permute.xlu0 %1959
    %1961 = vrot.lane.b32.xlu0 %v1161, 80
    %v1962 = vpop.permute.xlu0 %1961
    %1963 = vrot.lane.b32.xlu0 %v1163, 80
    %v1964 = vpop.permute.xlu0 %1963
    %1965 = vrot.lane.b32.xlu0 %v1165, 80
    %v1966 = vpop.permute.xlu0 %1965
    %1967 = vrot.lane.b32.xlu0 %v1167, 80
    %v1968 = vpop.permute.xlu0 %1967
    %1969 = vrot.lane.b32.xlu0 %v1169, 80
    %v1970 = vpop.permute.xlu0 %1969
    %1971 = vrot.lane.b32.xlu0 %v1171, 80
    %v1972 = vpop.permute.xlu0 %1971
    %1973 = vrot.lane.b32.xlu0 %v1173, 80
    %v1974 = vpop.permute.xlu0 %1973
    %1975 = vrot.lane.b32.xlu0 %v1175, 80
    %v1976 = vpop.permute.xlu0 %1975
    %1977 = vrot.lane.b32.xlu0 %v1177, 80
    %v1978 = vpop.permute.xlu0 %1977
    %1979 = vrot.lane.b32.xlu0 %v1179, 80
    %v1980 = vpop.permute.xlu0 %1979
    %1981 = vrot.lane.b32.xlu0 %v1181, 80
    %v1982 = vpop.permute.xlu0 %1981
    %1983 = vrot.lane.b32.xlu0 %v1183, 80
    %v1984 = vpop.permute.xlu0 %1983
    %1985 = vrot.lane.b32.xlu0 %v1185, 80
    %v1986 = vpop.permute.xlu0 %1985
    %1987 = vrot.lane.b32.xlu0 %v1187, 80
    %v1988 = vpop.permute.xlu0 %1987
    %1989 = vrot.lane.b32.xlu0 %v1189, 80
    %v1990 = vpop.permute.xlu0 %1989
    %1991 = vrot.lane.b32.xlu0 %v1191, 80
    %v1992 = vpop.permute.xlu0 %1991
    %2025 = vrot.lane.b32.xlu0 %v1129, 96
    %v2026 = vpop.permute.xlu0 %2025
    %2027 = vrot.lane.b32.xlu0 %v1131, 96
    %v2028 = vpop.permute.xlu0 %2027
    %2029 = vrot.lane.b32.xlu0 %v1133, 96
    %v2030 = vpop.permute.xlu0 %2029
    %2031 = vrot.lane.b32.xlu0 %v1135, 96
    %v2032 = vpop.permute.xlu0 %2031
    %2033 = vrot.lane.b32.xlu0 %v1137, 96
    %v2034 = vpop.permute.xlu0 %2033
    %2035 = vrot.lane.b32.xlu0 %v1139, 96
    %v2036 = vpop.permute.xlu0 %2035
    %2037 = vrot.lane.b32.xlu0 %v1141, 96
    %v2038 = vpop.permute.xlu0 %2037
    %2039 = vrot.lane.b32.xlu0 %v1143, 96
    %v2040 = vpop.permute.xlu0 %2039
    %2041 = vrot.lane.b32.xlu0 %v1145, 96
    %v2042 = vpop.permute.xlu0 %2041
    %2043 = vrot.lane.b32.xlu0 %v1147, 96
    %v2044 = vpop.permute.xlu0 %2043
    %2045 = vrot.lane.b32.xlu0 %v1149, 96
    %v2046 = vpop.permute.xlu0 %2045
    %2047 = vrot.lane.b32.xlu0 %v1151, 96
    %v2048 = vpop.permute.xlu0 %2047
    %2049 = vrot.lane.b32.xlu0 %v1153, 96
    %v2050 = vpop.permute.xlu0 %2049
    %2051 = vrot.lane.b32.xlu0 %v1155, 96
    %v2052 = vpop.permute.xlu0 %2051
    %2053 = vrot.lane.b32.xlu0 %v1157, 96
    %v2054 = vpop.permute.xlu0 %2053
    %2055 = vrot.lane.b32.xlu0 %v1159, 96
    %v2056 = vpop.permute.xlu0 %2055
    %2057 = vrot.lane.b32.xlu0 %v1161, 96
    %v2058 = vpop.permute.xlu0 %2057
    %2059 = vrot.lane.b32.xlu0 %v1163, 96
    %v2060 = vpop.permute.xlu0 %2059
    %2061 = vrot.lane.b32.xlu0 %v1165, 96
    %v2062 = vpop.permute.xlu0 %2061
    %2063 = vrot.lane.b32.xlu0 %v1167, 96
    %v2064 = vpop.permute.xlu0 %2063
    %2065 = vrot.lane.b32.xlu0 %v1169, 96
    %v2066 = vpop.permute.xlu0 %2065
    %2067 = vrot.lane.b32.xlu0 %v1171, 96
    %v2068 = vpop.permute.xlu0 %2067
    %2069 = vrot.lane.b32.xlu0 %v1173, 96
    %v2070 = vpop.permute.xlu0 %2069
    %2071 = vrot.lane.b32.xlu0 %v1175, 96
    %v2072 = vpop.permute.xlu0 %2071
    %2073 = vrot.lane.b32.xlu0 %v1177, 96
    %v2074 = vpop.permute.xlu0 %2073
    %2075 = vrot.lane.b32.xlu0 %v1179, 96
    %v2076 = vpop.permute.xlu0 %2075
    %2077 = vrot.lane.b32.xlu0 %v1181, 96
    %v2078 = vpop.permute.xlu0 %2077
    %2079 = vrot.lane.b32.xlu0 %v1183, 96
    %v2080 = vpop.permute.xlu0 %2079
    %2081 = vrot.lane.b32.xlu0 %v1185, 96
    %v2082 = vpop.permute.xlu0 %2081
    %2083 = vrot.lane.b32.xlu0 %v1187, 96
    %v2084 = vpop.permute.xlu0 %2083
    %2085 = vrot.lane.b32.xlu0 %v1189, 96
    %v2086 = vpop.permute.xlu0 %2085
    %2087 = vrot.lane.b32.xlu0 %v1191, 96
    %v2088 = vpop.permute.xlu0 %2087
    %2121 = vrot.lane.b32.xlu0 %v1129, 112
    %v2122 = vpop.permute.xlu0 %2121
    %2123 = vrot.lane.b32.xlu0 %v1131, 112
    %v2124 = vpop.permute.xlu0 %2123
    %2125 = vrot.lane.b32.xlu0 %v1133, 112
    %v2126 = vpop.permute.xlu0 %2125
    %2127 = vrot.lane.b32.xlu0 %v1135, 112
    %v2128 = vpop.permute.xlu0 %2127
    %2129 = vrot.lane.b32.xlu0 %v1137, 112
    %v2130 = vpop.permute.xlu0 %2129
    %2131 = vrot.lane.b32.xlu0 %v1139, 112
    %v2132 = vpop.permute.xlu0 %2131
    %2133 = vrot.lane.b32.xlu0 %v1141, 112
    %v2134 = vpop.permute.xlu0 %2133
    %2135 = vrot.lane.b32.xlu0 %v1143, 112
    %v2136 = vpop.permute.xlu0 %2135
    %2137 = vrot.lane.b32.xlu0 %v1145, 112
    %v2138 = vpop.permute.xlu0 %2137
    %2139 = vrot.lane.b32.xlu0 %v1147, 112
    %v2140 = vpop.permute.xlu0 %2139
    %2141 = vrot.lane.b32.xlu0 %v1149, 112
    %v2142 = vpop.permute.xlu0 %2141
    %2143 = vrot.lane.b32.xlu0 %v1151, 112
    %v2144 = vpop.permute.xlu0 %2143
    %2145 = vrot.lane.b32.xlu0 %v1153, 112
    %v2146 = vpop.permute.xlu0 %2145
    %2147 = vrot.lane.b32.xlu0 %v1155, 112
    %v2148 = vpop.permute.xlu0 %2147
    %2149 = vrot.lane.b32.xlu0 %v1157, 112
    %v2150 = vpop.permute.xlu0 %2149
    %2151 = vrot.lane.b32.xlu0 %v1159, 112
    %v2152 = vpop.permute.xlu0 %2151
    %2153 = vrot.lane.b32.xlu0 %v1161, 112
    %v2154 = vpop.permute.xlu0 %2153
    %2155 = vrot.lane.b32.xlu0 %v1163, 112
    %v2156 = vpop.permute.xlu0 %2155
    %2157 = vrot.lane.b32.xlu0 %v1165, 112
    %v2158 = vpop.permute.xlu0 %2157
    %2159 = vrot.lane.b32.xlu0 %v1167, 112
    %v2160 = vpop.permute.xlu0 %2159
    %2161 = vrot.lane.b32.xlu0 %v1169, 112
    %v2162 = vpop.permute.xlu0 %2161
    %2163 = vrot.lane.b32.xlu0 %v1171, 112
    %v2164 = vpop.permute.xlu0 %2163
    %2165 = vrot.lane.b32.xlu0 %v1173, 112
    %v2166 = vpop.permute.xlu0 %2165
    %2167 = vrot.lane.b32.xlu0 %v1175, 112
    %v2168 = vpop.permute.xlu0 %2167
    %2169 = vrot.lane.b32.xlu0 %v1177, 112
    %v2170 = vpop.permute.xlu0 %2169
    %2171 = vrot.lane.b32.xlu0 %v1179, 112
    %v2172 = vpop.permute.xlu0 %2171
    %2173 = vrot.lane.b32.xlu0 %v1181, 112
    %v2174 = vpop.permute.xlu0 %2173
    %2175 = vrot.lane.b32.xlu0 %v1183, 112
    %v2176 = vpop.permute.xlu0 %2175
    %2177 = vrot.lane.b32.xlu0 %v1185, 112
    %v2178 = vpop.permute.xlu0 %2177
    %2179 = vrot.lane.b32.xlu0 %v1187, 112
    %v2180 = vpop.permute.xlu0 %2179
    %2181 = vrot.lane.b32.xlu0 %v1189, 112
    %v2182 = vpop.permute.xlu0 %2181
    %2183 = vrot.lane.b32.xlu0 %v1191, 112
    %v2184 = vpop.permute.xlu0 %2183
    %v2217 = vsel %vm167, %v1129, %v1546
    %v2218 = vsel %vm167, %v1131, %v1548
    %v2219 = vsel %vm167, %v1133, %v1550
    %v2220 = vsel %vm167, %v1135, %v1552
    %v2221 = vsel %vm167, %v1137, %v1554
    %v2222 = vsel %vm167, %v1139, %v1556
    %v2223 = vsel %vm167, %v1141, %v1558
    %v2224 = vsel %vm167, %v1143, %v1560
    %v2225 = vsel %vm167, %v1145, %v1562
    %v2226 = vsel %vm167, %v1147, %v1564
    %v2227 = vsel %vm167, %v1149, %v1566
    %v2228 = vsel %vm167, %v1151, %v1568
    %v2229 = vsel %vm167, %v1153, %v1570
    %v2230 = vsel %vm167, %v1155, %v1572
    %v2231 = vsel %vm167, %v1157, %v1574
    %v2232 = vsel %vm167, %v1159, %v1576
    %v2233 = vsel %vm167, %v1161, %v1578
    %v2234 = vsel %vm167, %v1163, %v1580
    %v2235 = vsel %vm167, %v1165, %v1582
    %v2236 = vsel %vm167, %v1167, %v1584
    %v2237 = vsel %vm167, %v1169, %v1586
    %v2238 = vsel %vm167, %v1171, %v1588
    %v2239 = vsel %vm167, %v1173, %v1590
    %v2240 = vsel %vm167, %v1175, %v1592
    %v2241 = vsel %vm167, %v1177, %v1594
    %v2242 = vsel %vm167, %v1179, %v1596
    %v2243 = vsel %vm167, %v1181, %v1598
    %v2244 = vsel %vm167, %v1183, %v1600
    %v2245 = vsel %vm167, %v1185, %v1602
    %v2246 = vsel %vm167, %v1187, %v1604
    %v2247 = vsel %vm167, %v1189, %v1606
    %v2248 = vsel %vm167, %v1191, %v1608
    %vm2249 = vcmask 261120
    %v2250 = vsel %vm2249, %v2217, %v1642
    %v2251 = vsel %vm2249, %v2218, %v1644
    %v2252 = vsel %vm2249, %v2219, %v1646
    %v2253 = vsel %vm2249, %v2220, %v1648
    %v2254 = vsel %vm2249, %v2221, %v1650
    %v2255 = vsel %vm2249, %v2222, %v1652
    %v2256 = vsel %vm2249, %v2223, %v1654
    %v2257 = vsel %vm2249, %v2224, %v1656
    %v2258 = vsel %vm2249, %v2225, %v1658
    %v2259 = vsel %vm2249, %v2226, %v1660
    %v2260 = vsel %vm2249, %v2227, %v1662
    %v2261 = vsel %vm2249, %v2228, %v1664
    %v2262 = vsel %vm2249, %v2229, %v1666
    %v2263 = vsel %vm2249, %v2230, %v1668
    %v2264 = vsel %vm2249, %v2231, %v1670
    %v2265 = vsel %vm2249, %v2232, %v1672
    %v2266 = vsel %vm2249, %v2233, %v1674
    %v2267 = vsel %vm2249, %v2234, %v1676
    %v2268 = vsel %vm2249, %v2235, %v1678
    %v2269 = vsel %vm2249, %v2236, %v1680
    %v2270 = vsel %vm2249, %v2237, %v1682
    %v2271 = vsel %vm2249, %v2238, %v1684
    %v2272 = vsel %vm2249, %v2239, %v1686
    %v2273 = vsel %vm2249, %v2240, %v1688
    %v2274 = vsel %vm2249, %v2241, %v1690
    %v2275 = vsel %vm2249, %v2242, %v1692
    %v2276 = vsel %vm2249, %v2243, %v1694
    %v2277 = vsel %vm2249, %v2244, %v1696
    %v2278 = vsel %vm2249, %v2245, %v1698
    %v2279 = vsel %vm2249, %v2246, %v1700
    %v2280 = vsel %vm2249, %v2247, %v1702
    %v2281 = vsel %vm2249, %v2248, %v1704
    %vm2282 = vcmask 392192
    %v2283 = vsel %vm2282, %v2250, %v1738
    %v2284 = vsel %vm2282, %v2251, %v1740
    %v2285 = vsel %vm2282, %v2252, %v1742
    %v2286 = vsel %vm2282, %v2253, %v1744
    %v2287 = vsel %vm2282, %v2254, %v1746
    %v2288 = vsel %vm2282, %v2255, %v1748
    %v2289 = vsel %vm2282, %v2256, %v1750
    %v2290 = vsel %vm2282, %v2257, %v1752
    %v2291 = vsel %vm2282, %v2258, %v1754
    %v2292 = vsel %vm2282, %v2259, %v1756
    %v2293 = vsel %vm2282, %v2260, %v1758
    %v2294 = vsel %vm2282, %v2261, %v1760
    %v2295 = vsel %vm2282, %v2262, %v1762
    %v2296 = vsel %vm2282, %v2263, %v1764
    %v2297 = vsel %vm2282, %v2264, %v1766
    %v2298 = vsel %vm2282, %v2265, %v1768
    %v2299 = vsel %vm2282, %v2266, %v1770
    %v2300 = vsel %vm2282, %v2267, %v1772
    %v2301 = vsel %vm2282, %v2268, %v1774
    %v2302 = vsel %vm2282, %v2269, %v1776
    %v2303 = vsel %vm2282, %v2270, %v1778
    %v2304 = vsel %vm2282, %v2271, %v1780
    %v2305 = vsel %vm2282, %v2272, %v1782
    %v2306 = vsel %vm2282, %v2273, %v1784
    %v2307 = vsel %vm2282, %v2274, %v1786
    %v2308 = vsel %vm2282, %v2275, %v1788
    %v2309 = vsel %vm2282, %v2276, %v1790
    %v2310 = vsel %vm2282, %v2277, %v1792
    %v2311 = vsel %vm2282, %v2278, %v1794
    %v2312 = vsel %vm2282, %v2279, %v1796
    %v2313 = vsel %vm2282, %v2280, %v1798
    %v2314 = vsel %vm2282, %v2281, %v1800
    %vm2315 = vcmask 523264
    %v2316 = vsel %vm2315, %v2283, %v1834
    %v2317 = vsel %vm2315, %v2284, %v1836
    %v2318 = vsel %vm2315, %v2285, %v1838
    %v2319 = vsel %vm2315, %v2286, %v1840
    %v2320 = vsel %vm2315, %v2287, %v1842
    %v2321 = vsel %vm2315, %v2288, %v1844
    %v2322 = vsel %vm2315, %v2289, %v1846
    %v2323 = vsel %vm2315, %v2290, %v1848
    %v2324 = vsel %vm2315, %v2291, %v1850
    %v2325 = vsel %vm2315, %v2292, %v1852
    %v2326 = vsel %vm2315, %v2293, %v1854
    %v2327 = vsel %vm2315, %v2294, %v1856
    %v2328 = vsel %vm2315, %v2295, %v1858
    %v2329 = vsel %vm2315, %v2296, %v1860
    %v2330 = vsel %vm2315, %v2297, %v1862
    %v2331 = vsel %vm2315, %v2298, %v1864
    %v2332 = vsel %vm2315, %v2299, %v1866
    %v2333 = vsel %vm2315, %v2300, %v1868
    %v2334 = vsel %vm2315, %v2301, %v1870
    %v2335 = vsel %vm2315, %v2302, %v1872
    %v2336 = vsel %vm2315, %v2303, %v1874
    %v2337 = vsel %vm2315, %v2304, %v1876
    %v2338 = vsel %vm2315, %v2305, %v1878
    %v2339 = vsel %vm2315, %v2306, %v1880
    %v2340 = vsel %vm2315, %v2307, %v1882
    %v2341 = vsel %vm2315, %v2308, %v1884
    %v2342 = vsel %vm2315, %v2309, %v1886
    %v2343 = vsel %vm2315, %v2310, %v1888
    %v2344 = vsel %vm2315, %v2311, %v1890
    %v2345 = vsel %vm2315, %v2312, %v1892
    %v2346 = vsel %vm2315, %v2313, %v1894
    %v2347 = vsel %vm2315, %v2314, %v1896
    %vm2348 = vcmask 654336
    %v2349 = vsel %vm2348, %v2316, %v1930
    %v2350 = vsel %vm2348, %v2317, %v1932
    %v2351 = vsel %vm2348, %v2318, %v1934
    %v2352 = vsel %vm2348, %v2319, %v1936
    %v2353 = vsel %vm2348, %v2320, %v1938
    %v2354 = vsel %vm2348, %v2321, %v1940
    %v2355 = vsel %vm2348, %v2322, %v1942
    %v2356 = vsel %vm2348, %v2323, %v1944
    %v2357 = vsel %vm2348, %v2324, %v1946
    %v2358 = vsel %vm2348, %v2325, %v1948
    %v2359 = vsel %vm2348, %v2326, %v1950
    %v2360 = vsel %vm2348, %v2327, %v1952
    %v2361 = vsel %vm2348, %v2328, %v1954
    %v2362 = vsel %vm2348, %v2329, %v1956
    %v2363 = vsel %vm2348, %v2330, %v1958
    %v2364 = vsel %vm2348, %v2331, %v1960
    %v2365 = vsel %vm2348, %v2332, %v1962
    %v2366 = vsel %vm2348, %v2333, %v1964
    %v2367 = vsel %vm2348, %v2334, %v1966
    %v2368 = vsel %vm2348, %v2335, %v1968
    %v2369 = vsel %vm2348, %v2336, %v1970
    %v2370 = vsel %vm2348, %v2337, %v1972
    %v2371 = vsel %vm2348, %v2338, %v1974
    %v2372 = vsel %vm2348, %v2339, %v1976
    %v2373 = vsel %vm2348, %v2340, %v1978
    %v2374 = vsel %vm2348, %v2341, %v1980
    %v2375 = vsel %vm2348, %v2342, %v1982
    %v2376 = vsel %vm2348, %v2343, %v1984
    %v2377 = vsel %vm2348, %v2344, %v1986
    %v2378 = vsel %vm2348, %v2345, %v1988
    %v2379 = vsel %vm2348, %v2346, %v1990
    %v2380 = vsel %vm2348, %v2347, %v1992
    %vm2381 = vcmask 785408
    %v2382 = vsel %vm2381, %v2349, %v2026
    %v2383 = vsel %vm2381, %v2350, %v2028
    %v2384 = vsel %vm2381, %v2351, %v2030
    %v2385 = vsel %vm2381, %v2352, %v2032
    %v2386 = vsel %vm2381, %v2353, %v2034
    %v2387 = vsel %vm2381, %v2354, %v2036
    %v2388 = vsel %vm2381, %v2355, %v2038
    %v2389 = vsel %vm2381, %v2356, %v2040
    %v2390 = vsel %vm2381, %v2357, %v2042
    %v2391 = vsel %vm2381, %v2358, %v2044
    %v2392 = vsel %vm2381, %v2359, %v2046
    %v2393 = vsel %vm2381, %v2360, %v2048
    %v2394 = vsel %vm2381, %v2361, %v2050
    %v2395 = vsel %vm2381, %v2362, %v2052
    %v2396 = vsel %vm2381, %v2363, %v2054
    %v2397 = vsel %vm2381, %v2364, %v2056
    %v2398 = vsel %vm2381, %v2365, %v2058
    %v2399 = vsel %vm2381, %v2366, %v2060
    %v2400 = vsel %vm2381, %v2367, %v2062
    %v2401 = vsel %vm2381, %v2368, %v2064
    %v2402 = vsel %vm2381, %v2369, %v2066
    %v2403 = vsel %vm2381, %v2370, %v2068
    %v2404 = vsel %vm2381, %v2371, %v2070
    %v2405 = vsel %vm2381, %v2372, %v2072
    %v2406 = vsel %vm2381, %v2373, %v2074
    %v2407 = vsel %vm2381, %v2374, %v2076
    %v2408 = vsel %vm2381, %v2375, %v2078
    %v2409 = vsel %vm2381, %v2376, %v2080
    %v2410 = vsel %vm2381, %v2377, %v2082
    %v2411 = vsel %vm2381, %v2378, %v2084
    %v2412 = vsel %vm2381, %v2379, %v2086
    %v2413 = vsel %vm2381, %v2380, %v2088
    %vm2414 = vcmask 916480
    %v2415 = vsel %vm2414, %v2382, %v2122
    %v2416 = vsel %vm2414, %v2383, %v2124
    %v2417 = vsel %vm2414, %v2384, %v2126
    %v2418 = vsel %vm2414, %v2385, %v2128
    %v2419 = vsel %vm2414, %v2386, %v2130
    %v2420 = vsel %vm2414, %v2387, %v2132
    %v2421 = vsel %vm2414, %v2388, %v2134
    %v2422 = vsel %vm2414, %v2389, %v2136
    %v2423 = vsel %vm2414, %v2390, %v2138
    %v2424 = vsel %vm2414, %v2391, %v2140
    %v2425 = vsel %vm2414, %v2392, %v2142
    %v2426 = vsel %vm2414, %v2393, %v2144
    %v2427 = vsel %vm2414, %v2394, %v2146
    %v2428 = vsel %vm2414, %v2395, %v2148
    %v2429 = vsel %vm2414, %v2396, %v2150
    %v2430 = vsel %vm2414, %v2397, %v2152
    %v2431 = vsel %vm2414, %v2398, %v2154
    %v2432 = vsel %vm2414, %v2399, %v2156
    %v2433 = vsel %vm2414, %v2400, %v2158
    %v2434 = vsel %vm2414, %v2401, %v2160
    %v2435 = vsel %vm2414, %v2402, %v2162
    %v2436 = vsel %vm2414, %v2403, %v2164
    %v2437 = vsel %vm2414, %v2404, %v2166
    %v2438 = vsel %vm2414, %v2405, %v2168
    %v2439 = vsel %vm2414, %v2406, %v2170
    %v2440 = vsel %vm2414, %v2407, %v2172
    %v2441 = vsel %vm2414, %v2408, %v2174
    %v2442 = vsel %vm2414, %v2409, %v2176
    %v2443 = vsel %vm2414, %v2410, %v2178
    %v2444 = vsel %vm2414, %v2411, %v2180
    %v2445 = vsel %vm2414, %v2412, %v2182
    %v2446 = vsel %vm2414, %v2413, %v2184
    %v2447 = vmul.f32 %v2415, %v103
    %v2448 = vmul.f32 %v2415, %v104
    %v2449 = vmul.f32 %v2416, %v105
    %v2450 = vmul.f32 %v2416, %v106
    %v2451 = vmul.f32 %v2417, %v107
    %v2452 = vmul.f32 %v2417, %v108
    %v2453 = vmul.f32 %v2418, %v109
    %v2454 = vmul.f32 %v2418, %v110
    %v2455 = vmul.f32 %v2419, %v111
    %v2456 = vmul.f32 %v2419, %v112
    %v2457 = vmul.f32 %v2420, %v113
    %v2458 = vmul.f32 %v2420, %v114
    %v2459 = vmul.f32 %v2421, %v115
    %v2460 = vmul.f32 %v2421, %v116
    %v2461 = vmul.f32 %v2422, %v117
    %v2462 = vmul.f32 %v2422, %v118
    %v2463 = vmul.f32 %v2423, %v119
    %v2464 = vmul.f32 %v2423, %v120
    %v2465 = vmul.f32 %v2424, %v121
    %v2466 = vmul.f32 %v2424, %v122
    %v2467 = vmul.f32 %v2425, %v123
    %v2468 = vmul.f32 %v2425, %v124
    %v2469 = vmul.f32 %v2426, %v125
    %v2470 = vmul.f32 %v2426, %v126
    %v2471 = vmul.f32 %v2427, %v127
    %v2472 = vmul.f32 %v2427, %v128
    %v2473 = vmul.f32 %v2428, %v129
    %v2474 = vmul.f32 %v2428, %v130
    %v2475 = vmul.f32 %v2429, %v131
    %v2476 = vmul.f32 %v2429, %v132
    %v2477 = vmul.f32 %v2430, %v133
    %v2478 = vmul.f32 %v2430, %v134
    %v2479 = vmul.f32 %v2431, %v135
    %v2480 = vmul.f32 %v2431, %v136
    %v2481 = vmul.f32 %v2432, %v137
    %v2482 = vmul.f32 %v2432, %v138
    %v2483 = vmul.f32 %v2433, %v139
    %v2484 = vmul.f32 %v2433, %v140
    %v2485 = vmul.f32 %v2434, %v141
    %v2486 = vmul.f32 %v2434, %v142
    %v2487 = vmul.f32 %v2435, %v143
    %v2488 = vmul.f32 %v2435, %v144
    %v2489 = vmul.f32 %v2436, %v145
    %v2490 = vmul.f32 %v2436, %v146
    %v2491 = vmul.f32 %v2437, %v147
    %v2492 = vmul.f32 %v2437, %v148
    %v2493 = vmul.f32 %v2438, %v149
    %v2494 = vmul.f32 %v2438, %v150
    %v2495 = vmul.f32 %v2439, %v151
    %v2496 = vmul.f32 %v2439, %v152
    %v2497 = vmul.f32 %v2440, %v153
    %v2498 = vmul.f32 %v2440, %v154
    %v2499 = vmul.f32 %v2441, %v155
    %v2500 = vmul.f32 %v2441, %v156
    %v2501 = vmul.f32 %v2442, %v157
    %v2502 = vmul.f32 %v2442, %v158
    %v2503 = vmul.f32 %v2443, %v159
    %v2504 = vmul.f32 %v2443, %v160
    %v2505 = vmul.f32 %v2444, %v161
    %v2506 = vmul.f32 %v2444, %v162
    %v2507 = vmul.f32 %v2445, %v163
    %v2508 = vmul.f32 %v2445, %v164
    %v2509 = vmul.f32 %v2446, %v165
    %v2510 = vmul.f32 %v2446, %v166
    %2511 = vmatprep.subr.mxu0 0.0
    %2512 = vmatpush1.msra.mxu0 %v1513
    %2513 = vmatprep.subr.mxu0 0.0
    %2514 = vmatpush1.msra.mxu0 %v1514
    %2515 = vmatprep.subr.mxu0 0.0
    %2516 = vmatpush1.msra.mxu0 %v1515
    %2517 = vmatprep.subr.mxu0 0.0
    %2518 = vmatpush1.msra.mxu0 %v1516
    %2519 = vmatprep.subr.mxu0 0.0
    %2520 = vmatpush1.msra.mxu0 %v1517
    %2521 = vmatprep.subr.mxu0 0.0
    %2522 = vmatpush1.msra.mxu0 %v1518
    %2523 = vmatprep.subr.mxu0 0.0
    %2524 = vmatpush1.msra.mxu0 %v1519
    %2525 = vmatprep.subr.mxu0 0.0
    %2526 = vmatpush1.msra.mxu0 %v1520
    %2527 = vmatprep.subr.mxu0 0.0
    %2528 = vmatpush1.msra.mxu0 %v1521
    %2529 = vmatprep.subr.mxu0 0.0
    %2530 = vmatpush1.msra.mxu0 %v1522
    %2531 = vmatprep.subr.mxu0 0.0
    %2532 = vmatpush1.msra.mxu0 %v1523
    %2533 = vmatprep.subr.mxu0 0.0
    %2534 = vmatpush1.msra.mxu0 %v1524
    %2535 = vmatprep.subr.mxu0 0.0
    %2536 = vmatpush1.msra.mxu0 %v1525
    %2537 = vmatprep.subr.mxu0 0.0
    %2538 = vmatpush1.msra.mxu0 %v1526
    %2539 = vmatprep.subr.mxu0 0.0
    %2540 = vmatpush1.msra.mxu0 %v1527
    %2541 = vmatprep.subr.mxu0 0.0
    %2542 = vmatpush1.msra.mxu0 %v1528
    %2543 = vmatprep.subr.mxu0 0.0
    %2544 = vmatpush1.msra.mxu0 %v1529
    %2545 = vmatprep.subr.mxu0 0.0
    %2546 = vmatpush1.msra.mxu0 %v1530
    %2547 = vmatprep.subr.mxu0 0.0
    %2548 = vmatpush1.msra.mxu0 %v1531
    %2549 = vmatprep.subr.mxu0 0.0
    %2550 = vmatpush1.msra.mxu0 %v1532
    %2551 = vmatprep.subr.mxu0 0.0
    %2552 = vmatpush1.msra.mxu0 %v1533
    %2553 = vmatprep.subr.mxu0 0.0
    %2554 = vmatpush1.msra.mxu0 %v1534
    %2555 = vmatprep.subr.mxu0 0.0
    %2556 = vmatpush1.msra.mxu0 %v1535
    %2557 = vmatprep.subr.mxu0 0.0
    %2558 = vmatpush1.msra.mxu0 %v1536
    %2559 = vmatprep.subr.mxu0 0.0
    %2560 = vmatpush1.msra.mxu0 %v1537
    %2561 = vmatprep.subr.mxu0 0.0
    %2562 = vmatpush1.msra.mxu0 %v1538
    %2563 = vmatprep.subr.mxu0 0.0
    %2564 = vmatpush1.msra.mxu0 %v1539
    %2565 = vmatprep.subr.mxu0 0.0
    %2566 = vmatpush1.msra.mxu0 %v1540
    %2567 = vmatprep.subr.mxu0 0.0
    %2568 = vmatpush1.msra.mxu0 %v1541
    %2569 = vmatprep.subr.mxu0 0.0
    %2570 = vmatpush1.msra.mxu0 %v1542
    %2571 = vmatprep.subr.mxu0 0.0
    %2572 = vmatpush1.msra.mxu0 %v1543
    %2573 = vmatprep.subr.mxu0 0.0
    %2574 = vmatpush1.msra.mxu0 %v1544
    %2575 = vmatprep.mubr.f32.mxu0 %v2448
    %2576 = vmatmul.mubr.f32.gmra.mrb[0].mxu0 %v2447
    %v2577 = vpop.f32.mrb[0].mxu0
    %v2578 = vadd.f32 0.0, %v2577
    %v2579 = vpop.f32.mrb[0].mxu0
    %2580 = vmatprep.mubr.f32.mxu0 %v2450
    %2581 = vmatmul.mubr.f32.gmra.mrb[0].mxu0 %v2449
    %v2582 = vpop.f32.mrb[0].mxu0
    %v2583 = vadd.f32 0.0, %v2582
    %v2584 = vpop.f32.mrb[0].mxu0
    %2585 = vmatprep.mubr.f32.mxu0 %v2452
    %2586 = vmatmul.mubr.f32.gmra.mrb[0].mxu0 %v2451
    %v2587 = vpop.f32.mrb[0].mxu0
    %v2588 = vadd.f32 0.0, %v2587
    %v2589 = vpop.f32.mrb[0].mxu0
    %2590 = vmatprep.mubr.f32.mxu0 %v2454
    %2591 = vmatmul.mubr.f32.gmra.mrb[0].mxu0 %v2453
    %v2592 = vpop.f32.mrb[0].mxu0
    %v2593 = vadd.f32 0.0, %v2592
    %v2594 = vpop.f32.mrb[0].mxu0
    %2595 = vmatprep.mubr.f32.mxu0 %v2456
    %2596 = vmatmul.mubr.f32.gmra.mrb[0].mxu0 %v2455
    %v2597 = vpop.f32.mrb[0].mxu0
    %v2598 = vadd.f32 0.0, %v2597
    %v2599 = vpop.f32.mrb[0].mxu0
    %2600 = vmatprep.mubr.f32.mxu0 %v2458
    %2601 = vmatmul.mubr.f32.gmra.mrb[0].mxu0 %v2457
    %v2602 = vpop.f32.mrb[0].mxu0
    %v2603 = vadd.f32 0.0, %v2602
    %v2604 = vpop.f32.mrb[0].mxu0
    %2605 = vmatprep.mubr.f32.mxu0 %v2460
    %2606 = vmatmul.mubr.f32.gmra.mrb[0].mxu0 %v2459
    %v2607 = vpop.f32.mrb[0].mxu0
    %v2608 = vadd.f32 0.0, %v2607
    %v2609 = vpop.f32.mrb[0].mxu0
    %2610 = vmatprep.mubr.f32.mxu0 %v2462
    %2611 = vmatmul.mubr.f32.gmra.mrb[0].mxu0 %v2461
    %v2612 = vpop.f32.mrb[0].mxu0
    %v2613 = vadd.f32 0.0, %v2612
    %v2614 = vpop.f32.mrb[0].mxu0
    %2615 = vmatprep.mubr.f32.mxu0 %v2464
    %2616 = vmatmul.mubr.f32.gmra.mrb[0].mxu0 %v2463
    %v2617 = vpop.f32.mrb[0].mxu0
    %v2618 = vadd.f32 0.0, %v2617
    %v2619 = vpop.f32.mrb[0].mxu0
    %2620 = vmatprep.mubr.f32.mxu0 %v2466
    %2621 = vmatmul.mubr.f32.gmra.mrb[0].mxu0 %v2465
    %v2622 = vpop.f32.mrb[0].mxu0
    %v2623 = vadd.f32 0.0, %v2622
    %v2624 = vpop.f32.mrb[0].mxu0
    %2625 = vmatprep.mubr.f32.mxu0 %v2468
    %2626 = vmatmul.mubr.f32.gmra.mrb[0].mxu0 %v2467
    %v2627 = vpop.f32.mrb[0].mxu0
    %v2628 = vadd.f32 0.0, %v2627
    %v2629 = vpop.f32.mrb[0].mxu0
    %2630 = vmatprep.mubr.f32.mxu0 %v2470
    %2631 = vmatmul.mubr.f32.gmra.mrb[0].mxu0 %v2469
    %v2632 = vpop.f32.mrb[0].mxu0
    %v2633 = vadd.f32 0.0, %v2632
    %v2634 = vpop.f32.mrb[0].mxu0
    %2635 = vmatprep.mubr.f32.mxu0 %v2472
    %2636 = vmatmul.mubr.f32.gmra.mrb[0].mxu0 %v2471
    %v2637 = vpop.f32.mrb[0].mxu0
    %v2638 = vadd.f32 0.0, %v2637
    %v2639 = vpop.f32.mrb[0].mxu0
    %2640 = vmatprep.mubr.f32.mxu0 %v2474
    %2641 = vmatmul.mubr.f32.gmra.mrb[0].mxu0 %v2473
    %v2642 = vpop.f32.mrb[0].mxu0
    %v2643 = vadd.f32 0.0, %v2642
    %v2644 = vpop.f32.mrb[0].mxu0
    %2645 = vmatprep.mubr.f32.mxu0 %v2476
    %2646 = vmatmul.mubr.f32.gmra.mrb[0].mxu0 %v2475
    %v2647 = vpop.f32.mrb[0].mxu0
    %v2648 = vadd.f32 0.0, %v2647
    %v2649 = vpop.f32.mrb[0].mxu0
    %2650 = vmatprep.mubr.f32.mxu0 %v2478
    %2651 = vmatmul.mubr.f32.gmra.mrb[0].mxu0 %v2477
    %v2652 = vpop.f32.mrb[0].mxu0
    %v2653 = vadd.f32 0.0, %v2652
    %v2654 = vpop.f32.mrb[0].mxu0
    %2655 = vmatprep.mubr.f32.mxu0 %v2480
    %2656 = vmatmul.mubr.f32.gmra.mrb[0].mxu0 %v2479
    %v2657 = vpop.f32.mrb[0].mxu0
    %v2658 = vadd.f32 0.0, %v2657
    %v2659 = vpop.f32.mrb[0].mxu0
    %2660 = vmatprep.mubr.f32.mxu0 %v2482
    %2661 = vmatmul.mubr.f32.gmra.mrb[0].mxu0 %v2481
    %v2662 = vpop.f32.mrb[0].mxu0
    %v2663 = vadd.f32 0.0, %v2662
    %v2664 = vpop.f32.mrb[0].mxu0
    %2665 = vmatprep.mubr.f32.mxu0 %v2484
    %2666 = vmatmul.mubr.f32.gmra.mrb[0].mxu0 %v2483
    %v2667 = vpop.f32.mrb[0].mxu0
    %v2668 = vadd.f32 0.0, %v2667
    %v2669 = vpop.f32.mrb[0].mxu0
    %2670 = vmatprep.mubr.f32.mxu0 %v2486
    %2671 = vmatmul.mubr.f32.gmra.mrb[0].mxu0 %v2485
    %v2672 = vpop.f32.mrb[0].mxu0
    %v2673 = vadd.f32 0.0, %v2672
    %v2674 = vpop.f32.mrb[0].mxu0
    %2675 = vmatprep.mubr.f32.mxu0 %v2488
    %2676 = vmatmul.mubr.f32.gmra.mrb[0].mxu0 %v2487
    %v2677 = vpop.f32.mrb[0].mxu0
    %v2678 = vadd.f32 0.0, %v2677
    %v2679 = vpop.f32.mrb[0].mxu0
    %2680 = vmatprep.mubr.f32.mxu0 %v2490
    %2681 = vmatmul.mubr.f32.gmra.mrb[0].mxu0 %v2489
    %v2682 = vpop.f32.mrb[0].mxu0
    %v2683 = vadd.f32 0.0, %v2682
    %v2684 = vpop.f32.mrb[0].mxu0
    %2685 = vmatprep.mubr.f32.mxu0 %v2492
    %2686 = vmatmul.mubr.f32.gmra.mrb[0].mxu0 %v2491
    %v2687 = vpop.f32.mrb[0].mxu0
    %v2688 = vadd.f32 0.0, %v2687
    %v2689 = vpop.f32.mrb[0].mxu0
    %2690 = vmatprep.mubr.f32.mxu0 %v2494
    %2691 = vmatmul.mubr.f32.gmra.mrb[0].mxu0 %v2493
    %v2692 = vpop.f32.mrb[0].mxu0
    %v2693 = vadd.f32 0.0, %v2692
    %v2694 = vpop.f32.mrb[0].mxu0
    %2695 = vmatprep.mubr.f32.mxu0 %v2496
    %2696 = vmatmul.mubr.f32.gmra.mrb[0].mxu0 %v2495
    %v2697 = vpop.f32.mrb[0].mxu0
    %v2698 = vadd.f32 0.0, %v2697
    %v2699 = vpop.f32.mrb[0].mxu0
    %2700 = vmatprep.mubr.f32.mxu0 %v2498
    %2701 = vmatmul.mubr.f32.gmra.mrb[0].mxu0 %v2497
    %v2702 = vpop.f32.mrb[0].mxu0
    %v2703 = vadd.f32 0.0, %v2702
    %v2704 = vpop.f32.mrb[0].mxu0
    %2705 = vmatprep.mubr.f32.mxu0 %v2500
    %2706 = vmatmul.mubr.f32.gmra.mrb[0].mxu0 %v2499
    %v2707 = vpop.f32.mrb[0].mxu0
    %v2708 = vadd.f32 0.0, %v2707
    %v2709 = vpop.f32.mrb[0].mxu0
    %2710 = vmatprep.mubr.f32.mxu0 %v2502
    %2711 = vmatmul.mubr.f32.gmra.mrb[0].mxu0 %v2501
    %v2712 = vpop.f32.mrb[0].mxu0
    %v2713 = vadd.f32 0.0, %v2712
    %v2714 = vpop.f32.mrb[0].mxu0
    %2715 = vmatprep.mubr.f32.mxu0 %v2504
    %2716 = vmatmul.mubr.f32.gmra.mrb[0].mxu0 %v2503
    %v2717 = vpop.f32.mrb[0].mxu0
    %v2718 = vadd.f32 0.0, %v2717
    %v2719 = vpop.f32.mrb[0].mxu0
    %2720 = vmatprep.mubr.f32.mxu0 %v2506
    %2721 = vmatmul.mubr.f32.gmra.mrb[0].mxu0 %v2505
    %v2722 = vpop.f32.mrb[0].mxu0
    %v2723 = vadd.f32 0.0, %v2722
    %v2724 = vpop.f32.mrb[0].mxu0
    %2725 = vmatprep.mubr.f32.mxu0 %v2508
    %2726 = vmatmul.mubr.f32.gmra.mrb[0].mxu0 %v2507
    %v2727 = vpop.f32.mrb[0].mxu0
    %v2728 = vadd.f32 0.0, %v2727
    %v2729 = vpop.f32.mrb[0].mxu0
    %2730 = vmatprep.mubr.f32.mxu0 %v2510
    %2731 = vmatmul.mubr.f32.gmra.mrb[0].mxu0 %v2509
    %v2732 = vpop.f32.mrb[0].mxu0
    %v2733 = vadd.f32 0.0, %v2732
    %v2734 = vpop.f32.mrb[0].mxu0
    %2735 = vdwg.mxu0
    %v2737 = vsel %vm2249, %v2578, 0
    %v2740 = vsel %vm2249, %v2583, 0
    %v2743 = vsel %vm2249, %v2588, 0
    %v2746 = vsel %vm2249, %v2593, 0
    %v2749 = vsel %vm2249, %v2598, 0
    %v2752 = vsel %vm2249, %v2603, 0
    %v2755 = vsel %vm2249, %v2608, 0
    %v2758 = vsel %vm2249, %v2613, 0
    %v2761 = vsel %vm2249, %v2618, 0
    %v2764 = vsel %vm2249, %v2623, 0
    %v2767 = vsel %vm2249, %v2628, 0
    %v2770 = vsel %vm2249, %v2633, 0
    %v2773 = vsel %vm2249, %v2638, 0
    %v2776 = vsel %vm2249, %v2643, 0
    %v2779 = vsel %vm2249, %v2648, 0
    %v2782 = vsel %vm2249, %v2653, 0
    %v2785 = vsel %vm2249, %v2658, 0
    %v2788 = vsel %vm2249, %v2663, 0
    %v2791 = vsel %vm2249, %v2668, 0
    %v2794 = vsel %vm2249, %v2673, 0
    %v2797 = vsel %vm2249, %v2678, 0
    %v2800 = vsel %vm2249, %v2683, 0
    %v2803 = vsel %vm2249, %v2688, 0
    %v2806 = vsel %vm2249, %v2693, 0
    %v2809 = vsel %vm2249, %v2698, 0
    %v2812 = vsel %vm2249, %v2703, 0
    %v2815 = vsel %vm2249, %v2708, 0
    %v2818 = vsel %vm2249, %v2713, 0
    %v2821 = vsel %vm2249, %v2718, 0
    %v2824 = vsel %vm2249, %v2723, 0
    %v2827 = vsel %vm2249, %v2728, 0
    %v2830 = vsel %vm2249, %v2733, 0
    %2832 = vmatprep.subr.mxu0 0.0
    %2833 = vmatpush1.msra.mxu0 %v95
    %2834 = vmatprep.subr.mxu0 0.0
    %2835 = vmatpush1.msra.mxu0 %v96
    %2836 = vmatprep.subr.mxu0 0.0
    %2837 = vmatpush1.msra.mxu0 %v97
    %2838 = vmatprep.subr.mxu0 0.0
    %2839 = vmatpush1.msra.mxu0 %v98
    %2840 = vmatprep.subr.mxu0 0.0
    %2841 = vmatpush1.msra.mxu0 0.0
    %2842 = vmatprep.subr.mxu0 0.0
    %2843 = vmatpush1.msra.mxu0 0.0
    %2844 = vmatprep.subr.mxu0 0.0
    %2845 = vmatpush1.msra.mxu0 0.0
    %2846 = vmatprep.subr.mxu0 0.0
    %2847 = vmatpush1.msra.mxu0 0.0
    %2848 = vmatprep.subr.mxu0 0.0
    %2849 = vmatpush1.msra.mxu0 0.0
    %2850 = vmatprep.subr.mxu0 0.0
    %2851 = vmatpush1.msra.mxu0 0.0
    %2852 = vmatprep.subr.mxu0 0.0
    %2853 = vmatpush1.msra.mxu0 0.0
    %2854 = vmatprep.subr.mxu0 0.0
    %2855 = vmatpush1.msra.mxu0 0.0
    %2856 = vmatprep.subr.mxu0 0.0
    %2857 = vmatpush1.msra.mxu0 0.0
    %2858 = vmatprep.subr.mxu0 0.0
    %2859 = vmatpush1.msra.mxu0 0.0
    %2860 = vmatprep.subr.mxu0 0.0
    %2861 = vmatpush1.msra.mxu0 0.0
    %2862 = vmatprep.subr.mxu0 0.0
    %2863 = vmatpush1.msra.mxu0 0.0
    %2864 = vmatprep.subr.mxu0 0.0
    %2865 = vmatpush1.msra.mxu0 0.0
    %2866 = vmatprep.subr.mxu0 0.0
    %2867 = vmatpush1.msra.mxu0 0.0
    %2868 = vmatprep.subr.mxu0 0.0
    %2869 = vmatpush1.msra.mxu0 0.0
    %2870 = vmatprep.subr.mxu0 0.0
    %2871 = vmatpush1.msra.mxu0 0.0
    %2872 = vmatprep.subr.mxu0 0.0
    %2873 = vmatpush1.msra.mxu0 0.0
    %2874 = vmatprep.subr.mxu0 0.0
    %2875 = vmatpush1.msra.mxu0 0.0
    %2876 = vmatprep.subr.mxu0 0.0
    %2877 = vmatpush1.msra.mxu0 0.0
    %2878 = vmatprep.subr.mxu0 0.0
    %2879 = vmatpush1.msra.mxu0 0.0
    %2880 = vmatprep.subr.mxu0 0.0
    %2881 = vmatpush1.msra.mxu0 0.0
    %2882 = vmatprep.subr.mxu0 0.0
    %2883 = vmatpush1.msra.mxu0 0.0
    %2884 = vmatprep.subr.mxu0 0.0
    %2885 = vmatpush1.msra.mxu0 0.0
    %2886 = vmatprep.subr.mxu0 0.0
    %2887 = vmatpush1.msra.mxu0 0.0
    %2888 = vmatprep.subr.mxu0 0.0
    %2889 = vmatpush1.msra.mxu0 0.0
    %2890 = vmatprep.subr.mxu0 0.0
    %2891 = vmatpush1.msra.mxu0 0.0
    %2892 = vmatprep.subr.mxu0 0.0
    %2893 = vmatpush1.msra.mxu0 0.0
    %2894 = vmatprep.subr.mxu0 0.0
    %2895 = vmatpush1.msra.mxu0 0.0
    %2896 = vmatprep.mubr.f32.mxu0 0.0
    %2897 = vmatmul.mubr.f32.gmra.mrb[0].mxu0 %v2737
    %v2898 = vpop.f32.mrb[0].mxu0
    %v2899 = vadd.f32 0.0, %v2898
    %v2900 = vpop.f32.mrb[0].mxu0
    %2901 = vmatprep.mubr.f32.mxu0 0.0
    %2902 = vmatmul.mubr.f32.gmra.mrb[0].mxu0 %v2740
    %v2903 = vpop.f32.mrb[0].mxu0
    %v2904 = vadd.f32 0.0, %v2903
    %v2905 = vpop.f32.mrb[0].mxu0
    %2906 = vmatprep.mubr.f32.mxu0 0.0
    %2907 = vmatmul.mubr.f32.gmra.mrb[0].mxu0 %v2743
    %v2908 = vpop.f32.mrb[0].mxu0
    %v2909 = vadd.f32 0.0, %v2908
    %v2910 = vpop.f32.mrb[0].mxu0
    %2911 = vmatprep.mubr.f32.mxu0 0.0
    %2912 = vmatmul.mubr.f32.gmra.mrb[0].mxu0 %v2746
    %v2913 = vpop.f32.mrb[0].mxu0
    %v2914 = vadd.f32 0.0, %v2913
    %v2915 = vpop.f32.mrb[0].mxu0
    %2916 = vmatprep.mubr.f32.mxu0 0.0
    %2917 = vmatmul.mubr.f32.gmra.mrb[0].mxu0 %v2749
    %v2918 = vpop.f32.mrb[0].mxu0
    %v2919 = vadd.f32 0.0, %v2918
    %v2920 = vpop.f32.mrb[0].mxu0
    %2921 = vmatprep.mubr.f32.mxu0 0.0
    %2922 = vmatmul.mubr.f32.gmra.mrb[0].mxu0 %v2752
    %v2923 = vpop.f32.mrb[0].mxu0
    %v2924 = vadd.f32 0.0, %v2923
    %v2925 = vpop.f32.mrb[0].mxu0
    %2926 = vmatprep.mubr.f32.mxu0 0.0
    %2927 = vmatmul.mubr.f32.gmra.mrb[0].mxu0 %v2755
    %v2928 = vpop.f32.mrb[0].mxu0
    %v2929 = vadd.f32 0.0, %v2928
    %v2930 = vpop.f32.mrb[0].mxu0
    %2931 = vmatprep.mubr.f32.mxu0 0.0
    %2932 = vmatmul.mubr.f32.gmra.mrb[0].mxu0 %v2758
    %v2933 = vpop.f32.mrb[0].mxu0
    %v2934 = vadd.f32 0.0, %v2933
    %v2935 = vpop.f32.mrb[0].mxu0
    %2936 = vmatprep.mubr.f32.mxu0 0.0
    %2937 = vmatmul.mubr.f32.gmra.mrb[0].mxu0 %v2761
    %v2938 = vpop.f32.mrb[0].mxu0
    %v2939 = vadd.f32 0.0, %v2938
    %v2940 = vpop.f32.mrb[0].mxu0
    %2941 = vmatprep.mubr.f32.mxu0 0.0
    %2942 = vmatmul.mubr.f32.gmra.mrb[0].mxu0 %v2764
    %v2943 = vpop.f32.mrb[0].mxu0
    %v2944 = vadd.f32 0.0, %v2943
    %v2945 = vpop.f32.mrb[0].mxu0
    %2946 = vmatprep.mubr.f32.mxu0 0.0
    %2947 = vmatmul.mubr.f32.gmra.mrb[0].mxu0 %v2767
    %v2948 = vpop.f32.mrb[0].mxu0
    %v2949 = vadd.f32 0.0, %v2948
    %v2950 = vpop.f32.mrb[0].mxu0
    %2951 = vmatprep.mubr.f32.mxu0 0.0
    %2952 = vmatmul.mubr.f32.gmra.mrb[0].mxu0 %v2770
    %v2953 = vpop.f32.mrb[0].mxu0
    %v2954 = vadd.f32 0.0, %v2953
    %v2955 = vpop.f32.mrb[0].mxu0
    %2956 = vmatprep.mubr.f32.mxu0 0.0
    %2957 = vmatmul.mubr.f32.gmra.mrb[0].mxu0 %v2773
    %v2958 = vpop.f32.mrb[0].mxu0
    %v2959 = vadd.f32 0.0, %v2958
    %v2960 = vpop.f32.mrb[0].mxu0
    %2961 = vmatprep.mubr.f32.mxu0 0.0
    %2962 = vmatmul.mubr.f32.gmra.mrb[0].mxu0 %v2776
    %v2963 = vpop.f32.mrb[0].mxu0
    %v2964 = vadd.f32 0.0, %v2963
    %v2965 = vpop.f32.mrb[0].mxu0
    %2966 = vmatprep.mubr.f32.mxu0 0.0
    %2967 = vmatmul.mubr.f32.gmra.mrb[0].mxu0 %v2779
    %v2968 = vpop.f32.mrb[0].mxu0
    %v2969 = vadd.f32 0.0, %v2968
    %v2970 = vpop.f32.mrb[0].mxu0
    %2971 = vmatprep.mubr.f32.mxu0 0.0
    %2972 = vmatmul.mubr.f32.gmra.mrb[0].mxu0 %v2782
    %v2973 = vpop.f32.mrb[0].mxu0
    %v2974 = vadd.f32 0.0, %v2973
    %v2975 = vpop.f32.mrb[0].mxu0
    %2976 = vmatprep.mubr.f32.mxu0 0.0
    %2977 = vmatmul.mubr.f32.gmra.mrb[0].mxu0 %v2785
    %v2978 = vpop.f32.mrb[0].mxu0
    %v2979 = vadd.f32 0.0, %v2978
    %v2980 = vpop.f32.mrb[0].mxu0
    %2981 = vmatprep.mubr.f32.mxu0 0.0
    %2982 = vmatmul.mubr.f32.gmra.mrb[0].mxu0 %v2788
    %v2983 = vpop.f32.mrb[0].mxu0
    %v2984 = vadd.f32 0.0, %v2983
    %v2985 = vpop.f32.mrb[0].mxu0
    %2986 = vmatprep.mubr.f32.mxu0 0.0
    %2987 = vmatmul.mubr.f32.gmra.mrb[0].mxu0 %v2791
    %v2988 = vpop.f32.mrb[0].mxu0
    %v2989 = vadd.f32 0.0, %v2988
    %v2990 = vpop.f32.mrb[0].mxu0
    %2991 = vmatprep.mubr.f32.mxu0 0.0
    %2992 = vmatmul.mubr.f32.gmra.mrb[0].mxu0 %v2794
    %v2993 = vpop.f32.mrb[0].mxu0
    %v2994 = vadd.f32 0.0, %v2993
    %v2995 = vpop.f32.mrb[0].mxu0
    %2996 = vmatprep.mubr.f32.mxu0 0.0
    %2997 = vmatmul.mubr.f32.gmra.mrb[0].mxu0 %v2797
    %v2998 = vpop.f32.mrb[0].mxu0
    %v2999 = vadd.f32 0.0, %v2998
    %v3000 = vpop.f32.mrb[0].mxu0
    %3001 = vmatprep.mubr.f32.mxu0 0.0
    %3002 = vmatmul.mubr.f32.gmra.mrb[0].mxu0 %v2800
    %v3003 = vpop.f32.mrb[0].mxu0
    %v3004 = vadd.f32 0.0, %v3003
    %v3005 = vpop.f32.mrb[0].mxu0
    %3006 = vmatprep.mubr.f32.mxu0 0.0
    %3007 = vmatmul.mubr.f32.gmra.mrb[0].mxu0 %v2803
    %v3008 = vpop.f32.mrb[0].mxu0
    %v3009 = vadd.f32 0.0, %v3008
    %v3010 = vpop.f32.mrb[0].mxu0
    %3011 = vmatprep.mubr.f32.mxu0 0.0
    %3012 = vmatmul.mubr.f32.gmra.mrb[0].mxu0 %v2806
    %v3013 = vpop.f32.mrb[0].mxu0
    %v3014 = vadd.f32 0.0, %v3013
    %v3015 = vpop.f32.mrb[0].mxu0
    %3016 = vmatprep.mubr.f32.mxu0 0.0
    %3017 = vmatmul.mubr.f32.gmra.mrb[0].mxu0 %v2809
    %v3018 = vpop.f32.mrb[0].mxu0
    %v3019 = vadd.f32 0.0, %v3018
    %v3020 = vpop.f32.mrb[0].mxu0
    %3021 = vmatprep.mubr.f32.mxu0 0.0
    %3022 = vmatmul.mubr.f32.gmra.mrb[0].mxu0 %v2812
    %v3023 = vpop.f32.mrb[0].mxu0
    %v3024 = vadd.f32 0.0, %v3023
    %v3025 = vpop.f32.mrb[0].mxu0
    %3026 = vmatprep.mubr.f32.mxu0 0.0
    %3027 = vmatmul.mubr.f32.gmra.mrb[0].mxu0 %v2815
    %v3028 = vpop.f32.mrb[0].mxu0
    %v3029 = vadd.f32 0.0, %v3028
    %v3030 = vpop.f32.mrb[0].mxu0
    %3031 = vmatprep.mubr.f32.mxu0 0.0
    %3032 = vmatmul.mubr.f32.gmra.mrb[0].mxu0 %v2818
    %v3033 = vpop.f32.mrb[0].mxu0
    %v3034 = vadd.f32 0.0, %v3033
    %v3035 = vpop.f32.mrb[0].mxu0
    %3036 = vmatprep.mubr.f32.mxu0 0.0
    %3037 = vmatmul.mubr.f32.gmra.mrb[0].mxu0 %v2821
    %v3038 = vpop.f32.mrb[0].mxu0
    %v3039 = vadd.f32 0.0, %v3038
    %v3040 = vpop.f32.mrb[0].mxu0
    %3041 = vmatprep.mubr.f32.mxu0 0.0
    %3042 = vmatmul.mubr.f32.gmra.mrb[0].mxu0 %v2824
    %v3043 = vpop.f32.mrb[0].mxu0
    %v3044 = vadd.f32 0.0, %v3043
    %v3045 = vpop.f32.mrb[0].mxu0
    %3046 = vmatprep.mubr.f32.mxu0 0.0
    %3047 = vmatmul.mubr.f32.gmra.mrb[0].mxu0 %v2827
    %v3048 = vpop.f32.mrb[0].mxu0
    %v3049 = vadd.f32 0.0, %v3048
    %v3050 = vpop.f32.mrb[0].mxu0
    %3051 = vmatprep.mubr.f32.mxu0 0.0
    %3052 = vmatmul.mubr.f32.gmra.mrb[0].mxu0 %v2830
    %v3053 = vpop.f32.mrb[0].mxu0
    %v3054 = vadd.f32 0.0, %v3053
    %v3055 = vpop.f32.mrb[0].mxu0
    %3056 = vdwg.mxu0
    %v3057 = vmax.f32 %v2899, 0.0
    %v3058 = vmax.f32 %v2904, 0.0
    %v3059 = vmax.f32 %v2909, 0.0
    %v3060 = vmax.f32 %v2914, 0.0
    %v3061 = vmax.f32 %v2919, 0.0
    %v3062 = vmax.f32 %v2924, 0.0
    %v3063 = vmax.f32 %v2929, 0.0
    %v3064 = vmax.f32 %v2934, 0.0
    %v3065 = vmax.f32 %v2939, 0.0
    %v3066 = vmax.f32 %v2944, 0.0
    %v3067 = vmax.f32 %v2949, 0.0
    %v3068 = vmax.f32 %v2954, 0.0
    %v3069 = vmax.f32 %v2959, 0.0
    %v3070 = vmax.f32 %v2964, 0.0
    %v3071 = vmax.f32 %v2969, 0.0
    %v3072 = vmax.f32 %v2974, 0.0
    %v3073 = vmax.f32 %v2979, 0.0
    %v3074 = vmax.f32 %v2984, 0.0
    %v3075 = vmax.f32 %v2989, 0.0
    %v3076 = vmax.f32 %v2994, 0.0
    %v3077 = vmax.f32 %v2999, 0.0
    %v3078 = vmax.f32 %v3004, 0.0
    %v3079 = vmax.f32 %v3009, 0.0
    %v3080 = vmax.f32 %v3014, 0.0
    %v3081 = vmax.f32 %v3019, 0.0
    %v3082 = vmax.f32 %v3024, 0.0
    %v3083 = vmax.f32 %v3029, 0.0
    %v3084 = vmax.f32 %v3034, 0.0
    %v3085 = vmax.f32 %v3039, 0.0
    %v3086 = vmax.f32 %v3044, 0.0
    %v3087 = vmax.f32 %v3049, 0.0
    %v3088 = vmax.f32 %v3054, 0.0
    %3089 = vmatprep.subr.mxu0 0.0
    %3090 = vmatpush1.msra.mxu0 %v3057
    %3091 = vmatprep.subr.mxu0 0.0
    %3092 = vmatpush1.msra.mxu0 %v3058
    %3093 = vmatprep.subr.mxu0 0.0
    %3094 = vmatpush1.msra.mxu0 %v3059
    %3095 = vmatprep.subr.mxu0 0.0
    %3096 = vmatpush1.msra.mxu0 %v3060
    %3097 = vmatprep.subr.mxu0 0.0
    %3098 = vmatpush1.msra.mxu0 %v3061
    %3099 = vmatprep.subr.mxu0 0.0
    %3100 = vmatpush1.msra.mxu0 %v3062
    %3101 = vmatprep.subr.mxu0 0.0
    %3102 = vmatpush1.msra.mxu0 %v3063
    %3103 = vmatprep.subr.mxu0 0.0
    %3104 = vmatpush1.msra.mxu0 %v3064
    %3105 = vmatprep.subr.mxu0 0.0
    %3106 = vmatpush1.msra.mxu0 %v3065
    %3107 = vmatprep.subr.mxu0 0.0
    %3108 = vmatpush1.msra.mxu0 %v3066
    %3109 = vmatprep.subr.mxu0 0.0
    %3110 = vmatpush1.msra.mxu0 %v3067
    %3111 = vmatprep.subr.mxu0 0.0
    %3112 = vmatpush1.msra.mxu0 %v3068
    %3113 = vmatprep.subr.mxu0 0.0
    %3114 = vmatpush1.msra.mxu0 %v3069
    %3115 = vmatprep.subr.mxu0 0.0
    %3116 = vmatpush1.msra.mxu0 %v3070
    %3117 = vmatprep.subr.mxu0 0.0
    %3118 = vmatpush1.msra.mxu0 %v3071
    %3119 = vmatprep.subr.mxu0 0.0
    %3120 = vmatpush1.msra.mxu0 %v3072
    %3121 = vmatprep.subr.mxu0 0.0
    %3122 = vmatpush1.msra.mxu0 %v3073
    %3123 = vmatprep.subr.mxu0 0.0
    %3124 = vmatpush1.msra.mxu0 %v3074
    %3125 = vmatprep.subr.mxu0 0.0
    %3126 = vmatpush1.msra.mxu0 %v3075
    %3127 = vmatprep.subr.mxu0 0.0
    %3128 = vmatpush1.msra.mxu0 %v3076
    %3129 = vmatprep.subr.mxu0 0.0
    %3130 = vmatpush1.msra.mxu0 %v3077
    %3131 = vmatprep.subr.mxu0 0.0
    %3132 = vmatpush1.msra.mxu0 %v3078
    %3133 = vmatprep.subr.mxu0 0.0
    %3134 = vmatpush1.msra.mxu0 %v3079
    %3135 = vmatprep.subr.mxu0 0.0
    %3136 = vmatpush1.msra.mxu0 %v3080
    %3137 = vmatprep.subr.mxu0 0.0
    %3138 = vmatpush1.msra.mxu0 %v3081
    %3139 = vmatprep.subr.mxu0 0.0
    %3140 = vmatpush1.msra.mxu0 %v3082
    %3141 = vmatprep.subr.mxu0 0.0
    %3142 = vmatpush1.msra.mxu0 %v3083
    %3143 = vmatprep.subr.mxu0 0.0
    %3144 = vmatpush1.msra.mxu0 %v3084
    %3145 = vmatprep.subr.mxu0 0.0
    %3146 = vmatpush1.msra.mxu0 %v3085
    %3147 = vmatprep.subr.mxu0 0.0
    %3148 = vmatpush1.msra.mxu0 %v3086
    %3149 = vmatprep.subr.mxu0 0.0
    %3150 = vmatpush1.msra.mxu0 %v3087
    %3151 = vmatprep.subr.mxu0 0.0
    %3152 = vmatpush1.msra.mxu0 %v3088
    %3153 = vmatprep.mubr.f32.mxu0 %v2448
    %3154 = vmatmul.mubr.f32.gmra.mrb[0].mxu0 %v2447
    %v3155 = vpop.f32.mrb[0].mxu0
    %v3156 = vadd.f32 0.0, %v3155
    %v3157 = vpop.f32.mrb[0].mxu0
    %3158 = vmatprep.mubr.f32.mxu0 %v2450
    %3159 = vmatmul.mubr.f32.gmra.mrb[0].mxu0 %v2449
    %v3160 = vpop.f32.mrb[0].mxu0
    %v3161 = vadd.f32 0.0, %v3160
    %v3162 = vpop.f32.mrb[0].mxu0
    %3163 = vmatprep.mubr.f32.mxu0 %v2452
    %3164 = vmatmul.mubr.f32.gmra.mrb[0].mxu0 %v2451
    %v3165 = vpop.f32.mrb[0].mxu0
    %v3166 = vadd.f32 0.0, %v3165
    %v3167 = vpop.f32.mrb[0].mxu0
    %3168 = vmatprep.mubr.f32.mxu0 %v2454
    %3169 = vmatmul.mubr.f32.gmra.mrb[0].mxu0 %v2453
    %v3170 = vpop.f32.mrb[0].mxu0
    %v3171 = vadd.f32 0.0, %v3170
    %v3172 = vpop.f32.mrb[0].mxu0
    %3173 = vmatprep.mubr.f32.mxu0 %v2456
    %3174 = vmatmul.mubr.f32.gmra.mrb[0].mxu0 %v2455
    %v3175 = vpop.f32.mrb[0].mxu0
    %v3176 = vadd.f32 0.0, %v3175
    %v3177 = vpop.f32.mrb[0].mxu0
    %3178 = vmatprep.mubr.f32.mxu0 %v2458
    %3179 = vmatmul.mubr.f32.gmra.mrb[0].mxu0 %v2457
    %v3180 = vpop.f32.mrb[0].mxu0
    %v3181 = vadd.f32 0.0, %v3180
    %v3182 = vpop.f32.mrb[0].mxu0
    %3183 = vmatprep.mubr.f32.mxu0 %v2460
    %3184 = vmatmul.mubr.f32.gmra.mrb[0].mxu0 %v2459
    %v3185 = vpop.f32.mrb[0].mxu0
    %v3186 = vadd.f32 0.0, %v3185
    %v3187 = vpop.f32.mrb[0].mxu0
    %3188 = vmatprep.mubr.f32.mxu0 %v2462
    %3189 = vmatmul.mubr.f32.gmra.mrb[0].mxu0 %v2461
    %v3190 = vpop.f32.mrb[0].mxu0
    %v3191 = vadd.f32 0.0, %v3190
    %v3192 = vpop.f32.mrb[0].mxu0
    %3193 = vmatprep.mubr.f32.mxu0 %v2464
    %3194 = vmatmul.mubr.f32.gmra.mrb[0].mxu0 %v2463
    %v3195 = vpop.f32.mrb[0].mxu0
    %v3196 = vadd.f32 0.0, %v3195
    %v3197 = vpop.f32.mrb[0].mxu0
    %3198 = vmatprep.mubr.f32.mxu0 %v2466
    %3199 = vmatmul.mubr.f32.gmra.mrb[0].mxu0 %v2465
    %v3200 = vpop.f32.mrb[0].mxu0
    %v3201 = vadd.f32 0.0, %v3200
    %v3202 = vpop.f32.mrb[0].mxu0
    %3203 = vmatprep.mubr.f32.mxu0 %v2468
    %3204 = vmatmul.mubr.f32.gmra.mrb[0].mxu0 %v2467
    %v3205 = vpop.f32.mrb[0].mxu0
    %v3206 = vadd.f32 0.0, %v3205
    %v3207 = vpop.f32.mrb[0].mxu0
    %3208 = vmatprep.mubr.f32.mxu0 %v2470
    %3209 = vmatmul.mubr.f32.gmra.mrb[0].mxu0 %v2469
    %v3210 = vpop.f32.mrb[0].mxu0
    %v3211 = vadd.f32 0.0, %v3210
    %v3212 = vpop.f32.mrb[0].mxu0
    %3213 = vmatprep.mubr.f32.mxu0 %v2472
    %3214 = vmatmul.mubr.f32.gmra.mrb[0].mxu0 %v2471
    %v3215 = vpop.f32.mrb[0].mxu0
    %v3216 = vadd.f32 0.0, %v3215
    %v3217 = vpop.f32.mrb[0].mxu0
    %3218 = vmatprep.mubr.f32.mxu0 %v2474
    %3219 = vmatmul.mubr.f32.gmra.mrb[0].mxu0 %v2473
    %v3220 = vpop.f32.mrb[0].mxu0
    %v3221 = vadd.f32 0.0, %v3220
    %v3222 = vpop.f32.mrb[0].mxu0
    %3223 = vmatprep.mubr.f32.mxu0 %v2476
    %3224 = vmatmul.mubr.f32.gmra.mrb[0].mxu0 %v2475
    %v3225 = vpop.f32.mrb[0].mxu0
    %v3226 = vadd.f32 0.0, %v3225
    %v3227 = vpop.f32.mrb[0].mxu0
    %3228 = vmatprep.mubr.f32.mxu0 %v2478
    %3229 = vmatmul.mubr.f32.gmra.mrb[0].mxu0 %v2477
    %v3230 = vpop.f32.mrb[0].mxu0
    %v3231 = vadd.f32 0.0, %v3230
    %v3232 = vpop.f32.mrb[0].mxu0
    %3233 = vmatprep.mubr.f32.mxu0 %v2480
    %3234 = vmatmul.mubr.f32.gmra.mrb[0].mxu0 %v2479
    %v3235 = vpop.f32.mrb[0].mxu0
    %v3236 = vadd.f32 0.0, %v3235
    %v3237 = vpop.f32.mrb[0].mxu0
    %3238 = vmatprep.mubr.f32.mxu0 %v2482
    %3239 = vmatmul.mubr.f32.gmra.mrb[0].mxu0 %v2481
    %v3240 = vpop.f32.mrb[0].mxu0
    %v3241 = vadd.f32 0.0, %v3240
    %v3242 = vpop.f32.mrb[0].mxu0
    %3243 = vmatprep.mubr.f32.mxu0 %v2484
    %3244 = vmatmul.mubr.f32.gmra.mrb[0].mxu0 %v2483
    %v3245 = vpop.f32.mrb[0].mxu0
    %v3246 = vadd.f32 0.0, %v3245
    %v3247 = vpop.f32.mrb[0].mxu0
    %3248 = vmatprep.mubr.f32.mxu0 %v2486
    %3249 = vmatmul.mubr.f32.gmra.mrb[0].mxu0 %v2485
    %v3250 = vpop.f32.mrb[0].mxu0
    %v3251 = vadd.f32 0.0, %v3250
    %v3252 = vpop.f32.mrb[0].mxu0
    %3253 = vmatprep.mubr.f32.mxu0 %v2488
    %3254 = vmatmul.mubr.f32.gmra.mrb[0].mxu0 %v2487
    %v3255 = vpop.f32.mrb[0].mxu0
    %v3256 = vadd.f32 0.0, %v3255
    %v3257 = vpop.f32.mrb[0].mxu0
    %3258 = vmatprep.mubr.f32.mxu0 %v2490
    %3259 = vmatmul.mubr.f32.gmra.mrb[0].mxu0 %v2489
    %v3260 = vpop.f32.mrb[0].mxu0
    %v3261 = vadd.f32 0.0, %v3260
    %v3262 = vpop.f32.mrb[0].mxu0
    %3263 = vmatprep.mubr.f32.mxu0 %v2492
    %3264 = vmatmul.mubr.f32.gmra.mrb[0].mxu0 %v2491
    %v3265 = vpop.f32.mrb[0].mxu0
    %v3266 = vadd.f32 0.0, %v3265
    %v3267 = vpop.f32.mrb[0].mxu0
    %3268 = vmatprep.mubr.f32.mxu0 %v2494
    %3269 = vmatmul.mubr.f32.gmra.mrb[0].mxu0 %v2493
    %v3270 = vpop.f32.mrb[0].mxu0
    %v3271 = vadd.f32 0.0, %v3270
    %v3272 = vpop.f32.mrb[0].mxu0
    %3273 = vmatprep.mubr.f32.mxu0 %v2496
    %3274 = vmatmul.mubr.f32.gmra.mrb[0].mxu0 %v2495
    %v3275 = vpop.f32.mrb[0].mxu0
    %v3276 = vadd.f32 0.0, %v3275
    %v3277 = vpop.f32.mrb[0].mxu0
    %3278 = vmatprep.mubr.f32.mxu0 %v2498
    %3279 = vmatmul.mubr.f32.gmra.mrb[0].mxu0 %v2497
    %v3280 = vpop.f32.mrb[0].mxu0
    %v3281 = vadd.f32 0.0, %v3280
    %v3282 = vpop.f32.mrb[0].mxu0
    %3283 = vmatprep.mubr.f32.mxu0 %v2500
    %3284 = vmatmul.mubr.f32.gmra.mrb[0].mxu0 %v2499
    %v3285 = vpop.f32.mrb[0].mxu0
    %v3286 = vadd.f32 0.0, %v3285
    %v3287 = vpop.f32.mrb[0].mxu0
    %3288 = vmatprep.mubr.f32.mxu0 %v2502
    %3289 = vmatmul.mubr.f32.gmra.mrb[0].mxu0 %v2501
    %v3290 = vpop.f32.mrb[0].mxu0
    %v3291 = vadd.f32 0.0, %v3290
    %v3292 = vpop.f32.mrb[0].mxu0
    %3293 = vmatprep.mubr.f32.mxu0 %v2504
    %3294 = vmatmul.mubr.f32.gmra.mrb[0].mxu0 %v2503
    %v3295 = vpop.f32.mrb[0].mxu0
    %v3296 = vadd.f32 0.0, %v3295
    %v3297 = vpop.f32.mrb[0].mxu0
    %3298 = vmatprep.mubr.f32.mxu0 %v2506
    %3299 = vmatmul.mubr.f32.gmra.mrb[0].mxu0 %v2505
    %v3300 = vpop.f32.mrb[0].mxu0
    %v3301 = vadd.f32 0.0, %v3300
    %v3302 = vpop.f32.mrb[0].mxu0
    %3303 = vmatprep.mubr.f32.mxu0 %v2508
    %3304 = vmatmul.mubr.f32.gmra.mrb[0].mxu0 %v2507
    %v3305 = vpop.f32.mrb[0].mxu0
    %v3306 = vadd.f32 0.0, %v3305
    %v3307 = vpop.f32.mrb[0].mxu0
    %3308 = vmatprep.mubr.f32.mxu0 %v2510
    %3309 = vmatmul.mubr.f32.gmra.mrb[0].mxu0 %v2509
    %v3310 = vpop.f32.mrb[0].mxu0
    %v3311 = vadd.f32 0.0, %v3310
    %v3312 = vpop.f32.mrb[0].mxu0
    %3313 = vdwg.mxu0
    %v3315 = vsel %vm2249, %v3156, 0
    %v3318 = vsel %vm2249, %v3161, 0
    %v3321 = vsel %vm2249, %v3166, 0
    %v3324 = vsel %vm2249, %v3171, 0
    %v3327 = vsel %vm2249, %v3176, 0
    %v3330 = vsel %vm2249, %v3181, 0
    %v3333 = vsel %vm2249, %v3186, 0
    %v3336 = vsel %vm2249, %v3191, 0
    %v3339 = vsel %vm2249, %v3196, 0
    %v3342 = vsel %vm2249, %v3201, 0
    %v3345 = vsel %vm2249, %v3206, 0
    %v3348 = vsel %vm2249, %v3211, 0
    %v3351 = vsel %vm2249, %v3216, 0
    %v3354 = vsel %vm2249, %v3221, 0
    %v3357 = vsel %vm2249, %v3226, 0
    %v3360 = vsel %vm2249, %v3231, 0
    %v3363 = vsel %vm2249, %v3236, 0
    %v3366 = vsel %vm2249, %v3241, 0
    %v3369 = vsel %vm2249, %v3246, 0
    %v3372 = vsel %vm2249, %v3251, 0
    %v3375 = vsel %vm2249, %v3256, 0
    %v3378 = vsel %vm2249, %v3261, 0
    %v3381 = vsel %vm2249, %v3266, 0
    %v3384 = vsel %vm2249, %v3271, 0
    %v3387 = vsel %vm2249, %v3276, 0
    %v3390 = vsel %vm2249, %v3281, 0
    %v3393 = vsel %vm2249, %v3286, 0
    %v3396 = vsel %vm2249, %v3291, 0
    %v3399 = vsel %vm2249, %v3296, 0
    %v3402 = vsel %vm2249, %v3301, 0
    %v3405 = vsel %vm2249, %v3306, 0
    %v3408 = vsel %vm2249, %v3311, 0
    %3410 = vmatprep.subr.mxu0 0.0
    %3411 = vmatpush1.msra.mxu0 %v95
    %3412 = vmatprep.subr.mxu0 0.0
    %3413 = vmatpush1.msra.mxu0 %v96
    %3414 = vmatprep.subr.mxu0 0.0
    %3415 = vmatpush1.msra.mxu0 %v97
    %3416 = vmatprep.subr.mxu0 0.0
    %3417 = vmatpush1.msra.mxu0 %v98
    %3418 = vmatprep.subr.mxu0 0.0
    %3419 = vmatpush1.msra.mxu0 0.0
    %3420 = vmatprep.subr.mxu0 0.0
    %3421 = vmatpush1.msra.mxu0 0.0
    %3422 = vmatprep.subr.mxu0 0.0
    %3423 = vmatpush1.msra.mxu0 0.0
    %3424 = vmatprep.subr.mxu0 0.0
    %3425 = vmatpush1.msra.mxu0 0.0
    %3426 = vmatprep.subr.mxu0 0.0
    %3427 = vmatpush1.msra.mxu0 0.0
    %3428 = vmatprep.subr.mxu0 0.0
    %3429 = vmatpush1.msra.mxu0 0.0
    %3430 = vmatprep.subr.mxu0 0.0
    %3431 = vmatpush1.msra.mxu0 0.0
    %3432 = vmatprep.subr.mxu0 0.0
    %3433 = vmatpush1.msra.mxu0 0.0
    %3434 = vmatprep.subr.mxu0 0.0
    %3435 = vmatpush1.msra.mxu0 0.0
    %3436 = vmatprep.subr.mxu0 0.0
    %3437 = vmatpush1.msra.mxu0 0.0
    %3438 = vmatprep.subr.mxu0 0.0
    %3439 = vmatpush1.msra.mxu0 0.0
    %3440 = vmatprep.subr.mxu0 0.0
    %3441 = vmatpush1.msra.mxu0 0.0
    %3442 = vmatprep.subr.mxu0 0.0
    %3443 = vmatpush1.msra.mxu0 0.0
    %3444 = vmatprep.subr.mxu0 0.0
    %3445 = vmatpush1.msra.mxu0 0.0
    %3446 = vmatprep.subr.mxu0 0.0
    %3447 = vmatpush1.msra.mxu0 0.0
    %3448 = vmatprep.subr.mxu0 0.0
    %3449 = vmatpush1.msra.mxu0 0.0
    %3450 = vmatprep.subr.mxu0 0.0
    %3451 = vmatpush1.msra.mxu0 0.0
    %3452 = vmatprep.subr.mxu0 0.0
    %3453 = vmatpush1.msra.mxu0 0.0
    %3454 = vmatprep.subr.mxu0 0.0
    %3455 = vmatpush1.msra.mxu0 0.0
    %3456 = vmatprep.subr.mxu0 0.0
    %3457 = vmatpush1.msra.mxu0 0.0
    %3458 = vmatprep.subr.mxu0 0.0
    %3459 = vmatpush1.msra.mxu0 0.0
    %3460 = vmatprep.subr.mxu0 0.0
    %3461 = vmatpush1.msra.mxu0 0.0
    %3462 = vmatprep.subr.mxu0 0.0
    %3463 = vmatpush1.msra.mxu0 0.0
    %3464 = vmatprep.subr.mxu0 0.0
    %3465 = vmatpush1.msra.mxu0 0.0
    %3466 = vmatprep.subr.mxu0 0.0
    %3467 = vmatpush1.msra.mxu0 0.0
    %3468 = vmatprep.subr.mxu0 0.0
    %3469 = vmatpush1.msra.mxu0 0.0
    %3470 = vmatprep.subr.mxu0 0.0
    %3471 = vmatpush1.msra.mxu0 0.0
    %3472 = vmatprep.subr.mxu0 0.0
    %3473 = vmatpush1.msra.mxu0 0.0
    %3474 = vmatprep.mubr.f32.mxu0 0.0
    %3475 = vmatmul.mubr.f32.gmra.mrb[0].mxu0 %v3315
    %v3476 = vpop.f32.mrb[0].mxu0
    %v3477 = vadd.f32 0.0, %v3476
    %v3478 = vpop.f32.mrb[0].mxu0
    %3479 = vmatprep.mubr.f32.mxu0 0.0
    %3480 = vmatmul.mubr.f32.gmra.mrb[0].mxu0 %v3318
    %v3481 = vpop.f32.mrb[0].mxu0
    %v3482 = vadd.f32 0.0, %v3481
    %v3483 = vpop.f32.mrb[0].mxu0
    %3484 = vmatprep.mubr.f32.mxu0 0.0
    %3485 = vmatmul.mubr.f32.gmra.mrb[0].mxu0 %v3321
    %v3486 = vpop.f32.mrb[0].mxu0
    %v3487 = vadd.f32 0.0, %v3486
    %v3488 = vpop.f32.mrb[0].mxu0
    %3489 = vmatprep.mubr.f32.mxu0 0.0
    %3490 = vmatmul.mubr.f32.gmra.mrb[0].mxu0 %v3324
    %v3491 = vpop.f32.mrb[0].mxu0
    %v3492 = vadd.f32 0.0, %v3491
    %v3493 = vpop.f32.mrb[0].mxu0
    %3494 = vmatprep.mubr.f32.mxu0 0.0
    %3495 = vmatmul.mubr.f32.gmra.mrb[0].mxu0 %v3327
    %v3496 = vpop.f32.mrb[0].mxu0
    %v3497 = vadd.f32 0.0, %v3496
    %v3498 = vpop.f32.mrb[0].mxu0
    %3499 = vmatprep.mubr.f32.mxu0 0.0
    %3500 = vmatmul.mubr.f32.gmra.mrb[0].mxu0 %v3330
    %v3501 = vpop.f32.mrb[0].mxu0
    %v3502 = vadd.f32 0.0, %v3501
    %v3503 = vpop.f32.mrb[0].mxu0
    %3504 = vmatprep.mubr.f32.mxu0 0.0
    %3505 = vmatmul.mubr.f32.gmra.mrb[0].mxu0 %v3333
    %v3506 = vpop.f32.mrb[0].mxu0
    %v3507 = vadd.f32 0.0, %v3506
    %v3508 = vpop.f32.mrb[0].mxu0
    %3509 = vmatprep.mubr.f32.mxu0 0.0
    %3510 = vmatmul.mubr.f32.gmra.mrb[0].mxu0 %v3336
    %v3511 = vpop.f32.mrb[0].mxu0
    %v3512 = vadd.f32 0.0, %v3511
    %v3513 = vpop.f32.mrb[0].mxu0
    %3514 = vmatprep.mubr.f32.mxu0 0.0
    %3515 = vmatmul.mubr.f32.gmra.mrb[0].mxu0 %v3339
    %v3516 = vpop.f32.mrb[0].mxu0
    %v3517 = vadd.f32 0.0, %v3516
    %v3518 = vpop.f32.mrb[0].mxu0
    %3519 = vmatprep.mubr.f32.mxu0 0.0
    %3520 = vmatmul.mubr.f32.gmra.mrb[0].mxu0 %v3342
    %v3521 = vpop.f32.mrb[0].mxu0
    %v3522 = vadd.f32 0.0, %v3521
    %v3523 = vpop.f32.mrb[0].mxu0
    %3524 = vmatprep.mubr.f32.mxu0 0.0
    %3525 = vmatmul.mubr.f32.gmra.mrb[0].mxu0 %v3345
    %v3526 = vpop.f32.mrb[0].mxu0
    %v3527 = vadd.f32 0.0, %v3526
    %v3528 = vpop.f32.mrb[0].mxu0
    %3529 = vmatprep.mubr.f32.mxu0 0.0
    %3530 = vmatmul.mubr.f32.gmra.mrb[0].mxu0 %v3348
    %v3531 = vpop.f32.mrb[0].mxu0
    %v3532 = vadd.f32 0.0, %v3531
    %v3533 = vpop.f32.mrb[0].mxu0
    %3534 = vmatprep.mubr.f32.mxu0 0.0
    %3535 = vmatmul.mubr.f32.gmra.mrb[0].mxu0 %v3351
    %v3536 = vpop.f32.mrb[0].mxu0
    %v3537 = vadd.f32 0.0, %v3536
    %v3538 = vpop.f32.mrb[0].mxu0
    %3539 = vmatprep.mubr.f32.mxu0 0.0
    %3540 = vmatmul.mubr.f32.gmra.mrb[0].mxu0 %v3354
    %v3541 = vpop.f32.mrb[0].mxu0
    %v3542 = vadd.f32 0.0, %v3541
    %v3543 = vpop.f32.mrb[0].mxu0
    %3544 = vmatprep.mubr.f32.mxu0 0.0
    %3545 = vmatmul.mubr.f32.gmra.mrb[0].mxu0 %v3357
    %v3546 = vpop.f32.mrb[0].mxu0
    %v3547 = vadd.f32 0.0, %v3546
    %v3548 = vpop.f32.mrb[0].mxu0
    %3549 = vmatprep.mubr.f32.mxu0 0.0
    %3550 = vmatmul.mubr.f32.gmra.mrb[0].mxu0 %v3360
    %v3551 = vpop.f32.mrb[0].mxu0
    %v3552 = vadd.f32 0.0, %v3551
    %v3553 = vpop.f32.mrb[0].mxu0
    %3554 = vmatprep.mubr.f32.mxu0 0.0
    %3555 = vmatmul.mubr.f32.gmra.mrb[0].mxu0 %v3363
    %v3556 = vpop.f32.mrb[0].mxu0
    %v3557 = vadd.f32 0.0, %v3556
    %v3558 = vpop.f32.mrb[0].mxu0
    %3559 = vmatprep.mubr.f32.mxu0 0.0
    %3560 = vmatmul.mubr.f32.gmra.mrb[0].mxu0 %v3366
    %v3561 = vpop.f32.mrb[0].mxu0
    %v3562 = vadd.f32 0.0, %v3561
    %v3563 = vpop.f32.mrb[0].mxu0
    %3564 = vmatprep.mubr.f32.mxu0 0.0
    %3565 = vmatmul.mubr.f32.gmra.mrb[0].mxu0 %v3369
    %v3566 = vpop.f32.mrb[0].mxu0
    %v3567 = vadd.f32 0.0, %v3566
    %v3568 = vpop.f32.mrb[0].mxu0
    %3569 = vmatprep.mubr.f32.mxu0 0.0
    %3570 = vmatmul.mubr.f32.gmra.mrb[0].mxu0 %v3372
    %v3571 = vpop.f32.mrb[0].mxu0
    %v3572 = vadd.f32 0.0, %v3571
    %v3573 = vpop.f32.mrb[0].mxu0
    %3574 = vmatprep.mubr.f32.mxu0 0.0
    %3575 = vmatmul.mubr.f32.gmra.mrb[0].mxu0 %v3375
    %v3576 = vpop.f32.mrb[0].mxu0
    %v3577 = vadd.f32 0.0, %v3576
    %v3578 = vpop.f32.mrb[0].mxu0
    %3579 = vmatprep.mubr.f32.mxu0 0.0
    %3580 = vmatmul.mubr.f32.gmra.mrb[0].mxu0 %v3378
    %v3581 = vpop.f32.mrb[0].mxu0
    %v3582 = vadd.f32 0.0, %v3581
    %v3583 = vpop.f32.mrb[0].mxu0
    %3584 = vmatprep.mubr.f32.mxu0 0.0
    %3585 = vmatmul.mubr.f32.gmra.mrb[0].mxu0 %v3381
    %v3586 = vpop.f32.mrb[0].mxu0
    %v3587 = vadd.f32 0.0, %v3586
    %v3588 = vpop.f32.mrb[0].mxu0
    %3589 = vmatprep.mubr.f32.mxu0 0.0
    %3590 = vmatmul.mubr.f32.gmra.mrb[0].mxu0 %v3384
    %v3591 = vpop.f32.mrb[0].mxu0
    %v3592 = vadd.f32 0.0, %v3591
    %v3593 = vpop.f32.mrb[0].mxu0
    %3594 = vmatprep.mubr.f32.mxu0 0.0
    %3595 = vmatmul.mubr.f32.gmra.mrb[0].mxu0 %v3387
    %v3596 = vpop.f32.mrb[0].mxu0
    %v3597 = vadd.f32 0.0, %v3596
    %v3598 = vpop.f32.mrb[0].mxu0
    %3599 = vmatprep.mubr.f32.mxu0 0.0
    %3600 = vmatmul.mubr.f32.gmra.mrb[0].mxu0 %v3390
    %v3601 = vpop.f32.mrb[0].mxu0
    %v3602 = vadd.f32 0.0, %v3601
    %v3603 = vpop.f32.mrb[0].mxu0
    %3604 = vmatprep.mubr.f32.mxu0 0.0
    %3605 = vmatmul.mubr.f32.gmra.mrb[0].mxu0 %v3393
    %v3606 = vpop.f32.mrb[0].mxu0
    %v3607 = vadd.f32 0.0, %v3606
    %v3608 = vpop.f32.mrb[0].mxu0
    %3609 = vmatprep.mubr.f32.mxu0 0.0
    %3610 = vmatmul.mubr.f32.gmra.mrb[0].mxu0 %v3396
    %v3611 = vpop.f32.mrb[0].mxu0
    %v3612 = vadd.f32 0.0, %v3611
    %v3613 = vpop.f32.mrb[0].mxu0
    %3614 = vmatprep.mubr.f32.mxu0 0.0
    %3615 = vmatmul.mubr.f32.gmra.mrb[0].mxu0 %v3399
    %v3616 = vpop.f32.mrb[0].mxu0
    %v3617 = vadd.f32 0.0, %v3616
    %v3618 = vpop.f32.mrb[0].mxu0
    %3619 = vmatprep.mubr.f32.mxu0 0.0
    %3620 = vmatmul.mubr.f32.gmra.mrb[0].mxu0 %v3402
    %v3621 = vpop.f32.mrb[0].mxu0
    %v3622 = vadd.f32 0.0, %v3621
    %v3623 = vpop.f32.mrb[0].mxu0
    %3624 = vmatprep.mubr.f32.mxu0 0.0
    %3625 = vmatmul.mubr.f32.gmra.mrb[0].mxu0 %v3405
    %v3626 = vpop.f32.mrb[0].mxu0
    %v3627 = vadd.f32 0.0, %v3626
    %v3628 = vpop.f32.mrb[0].mxu0
    %3629 = vmatprep.mubr.f32.mxu0 0.0
    %3630 = vmatmul.mubr.f32.gmra.mrb[0].mxu0 %v3408
    %v3631 = vpop.f32.mrb[0].mxu0
    %v3632 = vadd.f32 0.0, %v3631
    %v3633 = vpop.f32.mrb[0].mxu0
    %3634 = vdwg.mxu0
    %v3635 = vmax.f32 %v3477, 0.0
    %v3636 = vmax.f32 %v3482, 0.0
    %v3637 = vmax.f32 %v3487, 0.0
    %v3638 = vmax.f32 %v3492, 0.0
    %v3639 = vmax.f32 %v3497, 0.0
    %v3640 = vmax.f32 %v3502, 0.0
    %v3641 = vmax.f32 %v3507, 0.0
    %v3642 = vmax.f32 %v3512, 0.0
    %v3643 = vmax.f32 %v3517, 0.0
    %v3644 = vmax.f32 %v3522, 0.0
    %v3645 = vmax.f32 %v3527, 0.0
    %v3646 = vmax.f32 %v3532, 0.0
    %v3647 = vmax.f32 %v3537, 0.0
    %v3648 = vmax.f32 %v3542, 0.0
    %v3649 = vmax.f32 %v3547, 0.0
    %v3650 = vmax.f32 %v3552, 0.0
    %v3651 = vmax.f32 %v3557, 0.0
    %v3652 = vmax.f32 %v3562, 0.0
    %v3653 = vmax.f32 %v3567, 0.0
    %v3654 = vmax.f32 %v3572, 0.0
    %v3655 = vmax.f32 %v3577, 0.0
    %v3656 = vmax.f32 %v3582, 0.0
    %v3657 = vmax.f32 %v3587, 0.0
    %v3658 = vmax.f32 %v3592, 0.0
    %v3659 = vmax.f32 %v3597, 0.0
    %v3660 = vmax.f32 %v3602, 0.0
    %v3661 = vmax.f32 %v3607, 0.0
    %v3662 = vmax.f32 %v3612, 0.0
    %v3663 = vmax.f32 %v3617, 0.0
    %v3664 = vmax.f32 %v3622, 0.0
    %v3665 = vmax.f32 %v3627, 0.0
    %v3666 = vmax.f32 %v3632, 0.0
    %v3667 = vsel %vm2249, %v3635, 0.0
    %v3668 = vsel %vm2249, %v3636, 0.0
    %v3669 = vadd.f32 %v3667, %v3668
    %v3670 = vrot.slane %v3669, 4
    %v3671 = vadd.f32 %v3669, %v3670
    %v3672 = vrot.slane %v3671, 2
    %v3673 = vadd.f32 %v3671, %v3672
    %v3674 = vrot.slane %v3673, 1
    %v3675 = vadd.f32 %v3673, %v3674
    %v3676 = vsel %vm2249, %v3637, 0.0
    %v3677 = vsel %vm2249, %v3638, 0.0
    %v3678 = vadd.f32 %v3676, %v3677
    %v3679 = vrot.slane %v3678, 4
    %v3680 = vadd.f32 %v3678, %v3679
    %v3681 = vrot.slane %v3680, 2
    %v3682 = vadd.f32 %v3680, %v3681
    %v3683 = vrot.slane %v3682, 1
    %v3684 = vadd.f32 %v3682, %v3683
    %v3685 = vsel %vm2249, %v3639, 0.0
    %v3686 = vsel %vm2249, %v3640, 0.0
    %v3687 = vadd.f32 %v3685, %v3686
    %v3688 = vrot.slane %v3687, 4
    %v3689 = vadd.f32 %v3687, %v3688
    %v3690 = vrot.slane %v3689, 2
    %v3691 = vadd.f32 %v3689, %v3690
    %v3692 = vrot.slane %v3691, 1
    %v3693 = vadd.f32 %v3691, %v3692
    %v3694 = vsel %vm2249, %v3641, 0.0
    %v3695 = vsel %vm2249, %v3642, 0.0
    %v3696 = vadd.f32 %v3694, %v3695
    %v3697 = vrot.slane %v3696, 4
    %v3698 = vadd.f32 %v3696, %v3697
    %v3699 = vrot.slane %v3698, 2
    %v3700 = vadd.f32 %v3698, %v3699
    %v3701 = vrot.slane %v3700, 1
    %v3702 = vadd.f32 %v3700, %v3701
    %v3703 = vsel %vm2249, %v3643, 0.0
    %v3704 = vsel %vm2249, %v3644, 0.0
    %v3705 = vadd.f32 %v3703, %v3704
    %v3706 = vrot.slane %v3705, 4
    %v3707 = vadd.f32 %v3705, %v3706
    %v3708 = vrot.slane %v3707, 2
    %v3709 = vadd.f32 %v3707, %v3708
    %v3710 = vrot.slane %v3709, 1
    %v3711 = vadd.f32 %v3709, %v3710
    %v3712 = vsel %vm2249, %v3645, 0.0
    %v3713 = vsel %vm2249, %v3646, 0.0
    %v3714 = vadd.f32 %v3712, %v3713
    %v3715 = vrot.slane %v3714, 4
    %v3716 = vadd.f32 %v3714, %v3715
    %v3717 = vrot.slane %v3716, 2
    %v3718 = vadd.f32 %v3716, %v3717
    %v3719 = vrot.slane %v3718, 1
    %v3720 = vadd.f32 %v3718, %v3719
    %v3721 = vsel %vm2249, %v3647, 0.0
    %v3722 = vsel %vm2249, %v3648, 0.0
    %v3723 = vadd.f32 %v3721, %v3722
    %v3724 = vrot.slane %v3723, 4
    %v3725 = vadd.f32 %v3723, %v3724
    %v3726 = vrot.slane %v3725, 2
    %v3727 = vadd.f32 %v3725, %v3726
    %v3728 = vrot.slane %v3727, 1
    %v3729 = vadd.f32 %v3727, %v3728
    %v3730 = vsel %vm2249, %v3649, 0.0
    %v3731 = vsel %vm2249, %v3650, 0.0
    %v3732 = vadd.f32 %v3730, %v3731
    %v3733 = vrot.slane %v3732, 4
    %v3734 = vadd.f32 %v3732, %v3733
    %v3735 = vrot.slane %v3734, 2
    %v3736 = vadd.f32 %v3734, %v3735
    %v3737 = vrot.slane %v3736, 1
    %v3738 = vadd.f32 %v3736, %v3737
    %v3739 = vsel %vm2249, %v3651, 0.0
    %v3740 = vsel %vm2249, %v3652, 0.0
    %v3741 = vadd.f32 %v3739, %v3740
    %v3742 = vrot.slane %v3741, 4
    %v3743 = vadd.f32 %v3741, %v3742
    %v3744 = vrot.slane %v3743, 2
    %v3745 = vadd.f32 %v3743, %v3744
    %v3746 = vrot.slane %v3745, 1
    %v3747 = vadd.f32 %v3745, %v3746
    %v3748 = vsel %vm2249, %v3653, 0.0
    %v3749 = vsel %vm2249, %v3654, 0.0
    %v3750 = vadd.f32 %v3748, %v3749
    %v3751 = vrot.slane %v3750, 4
    %v3752 = vadd.f32 %v3750, %v3751
    %v3753 = vrot.slane %v3752, 2
    %v3754 = vadd.f32 %v3752, %v3753
    %v3755 = vrot.slane %v3754, 1
    %v3756 = vadd.f32 %v3754, %v3755
    %v3757 = vsel %vm2249, %v3655, 0.0
    %v3758 = vsel %vm2249, %v3656, 0.0
    %v3759 = vadd.f32 %v3757, %v3758
    %v3760 = vrot.slane %v3759, 4
    %v3761 = vadd.f32 %v3759, %v3760
    %v3762 = vrot.slane %v3761, 2
    %v3763 = vadd.f32 %v3761, %v3762
    %v3764 = vrot.slane %v3763, 1
    %v3765 = vadd.f32 %v3763, %v3764
    %v3766 = vsel %vm2249, %v3657, 0.0
    %v3767 = vsel %vm2249, %v3658, 0.0
    %v3768 = vadd.f32 %v3766, %v3767
    %v3769 = vrot.slane %v3768, 4
    %v3770 = vadd.f32 %v3768, %v3769
    %v3771 = vrot.slane %v3770, 2
    %v3772 = vadd.f32 %v3770, %v3771
    %v3773 = vrot.slane %v3772, 1
    %v3774 = vadd.f32 %v3772, %v3773
    %v3775 = vsel %vm2249, %v3659, 0.0
    %v3776 = vsel %vm2249, %v3660, 0.0
    %v3777 = vadd.f32 %v3775, %v3776
    %v3778 = vrot.slane %v3777, 4
    %v3779 = vadd.f32 %v3777, %v3778
    %v3780 = vrot.slane %v3779, 2
    %v3781 = vadd.f32 %v3779, %v3780
    %v3782 = vrot.slane %v3781, 1
    %v3783 = vadd.f32 %v3781, %v3782
    %v3784 = vsel %vm2249, %v3661, 0.0
    %v3785 = vsel %vm2249, %v3662, 0.0
    %v3786 = vadd.f32 %v3784, %v3785
    %v3787 = vrot.slane %v3786, 4
    %v3788 = vadd.f32 %v3786, %v3787
    %v3789 = vrot.slane %v3788, 2
    %v3790 = vadd.f32 %v3788, %v3789
    %v3791 = vrot.slane %v3790, 1
    %v3792 = vadd.f32 %v3790, %v3791
    %v3793 = vsel %vm2249, %v3663, 0.0
    %v3794 = vsel %vm2249, %v3664, 0.0
    %v3795 = vadd.f32 %v3793, %v3794
    %v3796 = vrot.slane %v3795, 4
    %v3797 = vadd.f32 %v3795, %v3796
    %v3798 = vrot.slane %v3797, 2
    %v3799 = vadd.f32 %v3797, %v3798
    %v3800 = vrot.slane %v3799, 1
    %v3801 = vadd.f32 %v3799, %v3800
    %v3802 = vsel %vm2249, %v3665, 0.0
    %v3803 = vsel %vm2249, %v3666, 0.0
    %v3804 = vadd.f32 %v3802, %v3803
    %v3805 = vrot.slane %v3804, 4
    %v3806 = vadd.f32 %v3804, %v3805
    %v3807 = vrot.slane %v3806, 2
    %v3808 = vadd.f32 %v3806, %v3807
    %v3809 = vrot.slane %v3808, 1
    %v3810 = vadd.f32 %v3808, %v3809
    %vm3827 = vcmask 1041409
    %v3828 = vsel %vm3827, %v3684, %v3675
    %vm3829 = vcmask 1042434
    %v3830 = vsel %vm3829, %v3693, %v3828
    %vm3831 = vcmask 1043459
    %v3832 = vsel %vm3831, %v3702, %v3830
    %vm3833 = vcmask 1044484
    %v3834 = vsel %vm3833, %v3711, %v3832
    %vm3835 = vcmask 1045509
    %v3836 = vsel %vm3835, %v3720, %v3834
    %vm3837 = vcmask 1046534
    %v3838 = vsel %vm3837, %v3729, %v3836
    %vm3839 = vcmask 1047559
    %v3840 = vsel %vm3839, %v3738, %v3838
    %v3841 = vsel %vm3827, %v3756, %v3747
    %v3842 = vsel %vm3829, %v3765, %v3841
    %v3843 = vsel %vm3831, %v3774, %v3842
    %v3844 = vsel %vm3833, %v3783, %v3843
    %v3845 = vsel %vm3835, %v3792, %v3844
    %v3846 = vsel %vm3837, %v3801, %v3845
    %v3847 = vsel %vm3839, %v3810, %v3846
    %v3848 = vsel %vm2249, %v3840, 0
    %v3850 = vsel %vm2249, %v3847, 0
    %3852 = vmatprep.subr.mxu0 0.0
    %3853 = vmatpush1.msra.mxu0 %v99
    %3854 = vmatprep.subr.mxu0 0.0
    %3855 = vmatpush1.msra.mxu0 %v100
    %3856 = vmatprep.subr.mxu0 0.0
    %3857 = vmatpush1.msra.mxu0 %v101
    %3858 = vmatprep.subr.mxu0 0.0
    %3859 = vmatpush1.msra.mxu0 %v102
    %3860 = vmatprep.subr.mxu0 0.0
    %3861 = vmatpush1.msra.mxu0 0.0
    %3862 = vmatprep.subr.mxu0 0.0
    %3863 = vmatpush1.msra.mxu0 0.0
    %3864 = vmatprep.subr.mxu0 0.0
    %3865 = vmatpush1.msra.mxu0 0.0
    %3866 = vmatprep.subr.mxu0 0.0
    %3867 = vmatpush1.msra.mxu0 0.0
    %3868 = vmatprep.subr.mxu0 0.0
    %3869 = vmatpush1.msra.mxu0 0.0
    %3870 = vmatprep.subr.mxu0 0.0
    %3871 = vmatpush1.msra.mxu0 0.0
    %3872 = vmatprep.subr.mxu0 0.0
    %3873 = vmatpush1.msra.mxu0 0.0
    %3874 = vmatprep.subr.mxu0 0.0
    %3875 = vmatpush1.msra.mxu0 0.0
    %3876 = vmatprep.subr.mxu0 0.0
    %3877 = vmatpush1.msra.mxu0 0.0
    %3878 = vmatprep.subr.mxu0 0.0
    %3879 = vmatpush1.msra.mxu0 0.0
    %3880 = vmatprep.subr.mxu0 0.0
    %3881 = vmatpush1.msra.mxu0 0.0
    %3882 = vmatprep.subr.mxu0 0.0
    %3883 = vmatpush1.msra.mxu0 0.0
    %3884 = vmatprep.subr.mxu0 0.0
    %3885 = vmatpush1.msra.mxu0 0.0
    %3886 = vmatprep.subr.mxu0 0.0
    %3887 = vmatpush1.msra.mxu0 0.0
    %3888 = vmatprep.subr.mxu0 0.0
    %3889 = vmatpush1.msra.mxu0 0.0
    %3890 = vmatprep.subr.mxu0 0.0
    %3891 = vmatpush1.msra.mxu0 0.0
    %3892 = vmatprep.subr.mxu0 0.0
    %3893 = vmatpush1.msra.mxu0 0.0
    %3894 = vmatprep.subr.mxu0 0.0
    %3895 = vmatpush1.msra.mxu0 0.0
    %3896 = vmatprep.subr.mxu0 0.0
    %3897 = vmatpush1.msra.mxu0 0.0
    %3898 = vmatprep.subr.mxu0 0.0
    %3899 = vmatpush1.msra.mxu0 0.0
    %3900 = vmatprep.subr.mxu0 0.0
    %3901 = vmatpush1.msra.mxu0 0.0
    %3902 = vmatprep.subr.mxu0 0.0
    %3903 = vmatpush1.msra.mxu0 0.0
    %3904 = vmatprep.subr.mxu0 0.0
    %3905 = vmatpush1.msra.mxu0 0.0
    %3906 = vmatprep.subr.mxu0 0.0
    %3907 = vmatpush1.msra.mxu0 0.0
    %3908 = vmatprep.subr.mxu0 0.0
    %3909 = vmatpush1.msra.mxu0 0.0
    %3910 = vmatprep.subr.mxu0 0.0
    %3911 = vmatpush1.msra.mxu0 0.0
    %3912 = vmatprep.subr.mxu0 0.0
    %3913 = vmatpush1.msra.mxu0 0.0
    %3914 = vmatprep.subr.mxu0 0.0
    %3915 = vmatpush1.msra.mxu0 0.0
    %3916 = vmatprep.mubr.f32.mxu0 0.0
    %3917 = vmatmul.mubr.f32.gmra.mrb[0].mxu0 %v3848
    %v3918 = vpop.f32.mrb[0].mxu0
    %v3919 = vadd.f32 0.0, %v3918
    %v3920 = vpop.f32.mrb[0].mxu0
    %3921 = vmatprep.mubr.f32.mxu0 0.0
    %3922 = vmatmul.mubr.f32.gmra.mrb[0].mxu0 %v3850
    %v3923 = vpop.f32.mrb[0].mxu0
    %v3924 = vadd.f32 0.0, %v3923
    %v3925 = vpop.f32.mrb[0].mxu0
    %3926 = vdwg.mxu0
    %vm3927 = vcmask 64512
    %3928 = vst.msk [vmem:[%s5] sm:$0xff] %vm3927, %v3919
    %3929 = vst.msk [vmem:[%s5 + $0x8] sm:$0xff] %vm3927, %v3924
    // Predicated region
    $region34: #{tpu_custom_call.1} parent=1 // pred_check
      _
    $region35: #{tpu_custom_call.1} parent=1 // pred_check_branch
      %3931 = sbr.rel (0) target = $region37
    $region36: #{tpu_custom_call.1} parent=1 // pred_region
      _
    $region37: #{tpu_custom_call.1} parent=1 // pred_fallthru
      _
    // Predicated region
    $region38: #{tpu_custom_call.1} parent=1 // pred_check
      _
    $region39: #{tpu_custom_call.1} parent=1 // pred_check_branch
      %3933 = sbr.rel (0) target = $region41
    $region40: #{tpu_custom_call.1} parent=1 // pred_region
      _
    $region41: #{tpu_custom_call.1} parent=1 // pred_fallthru
      _
    %3934 = vsyncpa [#allocation3], 1
    %3935 = vsyncpa [#allocation5], 1

</llo_original>
